<compile_context>
chip_gen: v6e
topology: v6e:2x2x1
jax: 0.10.0
libtpu: 0.0.40
codegen_flags: <defaults>
</compile_context>

<pallas_src>
import functools

import jax
import jax.numpy as jnp
import numpy as np
from jax.experimental import pallas as pl
from jax.experimental.pallas import tpu as pltpu

INPUT_DIM = 2
HIDDEN_DIM = 32
LAYERS = 4
BATCH = 256        # demo batch (any multiple of 8 works)
MAX_TM = 256       # cap on the batch tile


def _compute_dtype_for_backend():
    """bf16 matmul inputs on v6e/v7x (bf16-native MXU/VPU/EUP); f32 elsewhere (v5e etc.)."""
    try:
        kind = jax.devices()[0].device_kind.lower()
    except Exception:
        return jnp.float32
    if any(tag in kind for tag in ("v6", "v7", "7x")):
        return jnp.bfloat16
    return jnp.float32


def _choose_tile(n):
    """Largest multiple-of-8 tile <= MAX_TM that divides n, leaving >=2 grid steps
    when possible so the 'parallel' axis can be sharded across both v7x TensorCores."""
    if n <= 8:
        return n
    cap = max(8, min(MAX_TM, n // 2))
    tm = max(8, (cap // 8) * 8)
    while tm > 8 and n % tm != 0:
        tm -= 8
    return tm


def dgm_kernel(x_ref, w_in_ref, b_in_ref, w_h_ref, b_h_ref,
               w_out_ref, b_out_ref, o_ref, *, layers, compute_dtype):
    cdt = compute_dtype
    f32 = jnp.float32

    x = x_ref[...].astype(cdt)                                        # (TM, D_in)
    w_in = w_in_ref[...].astype(cdt)                                  # (D_in, H)
    S = jnp.tanh(
        jnp.dot(x, w_in, preferred_element_type=f32) + b_in_ref[...]
    ).astype(cdt)                                                     # (TM, H)

    for l in range(layers):                                           # static unrolled
        W = w_h_ref[l].astype(cdt)                                    # (H, H) shared within block
        b = b_h_ref[l]                                                # (1, H) f32
        hS = jnp.dot(S, W, preferred_element_type=f32) + b            # hidden(S)
        hSb = hS + b                                                  # hidden(S) + bias, reused 3x
        Z = jnp.tanh(hS)
        G = jnp.tanh(hSb + jnp.dot(Z.astype(cdt), W, preferred_element_type=f32))
        R = jnp.tanh(hSb + jnp.dot(G.astype(cdt), W, preferred_element_type=f32))
        H = jnp.tanh(hSb + jnp.dot(R.astype(cdt), W, preferred_element_type=f32))
        S = ((1.0 - G) * H + Z).astype(cdt)

    o_ref[...] = (
        jnp.dot(S, w_out_ref[...].astype(cdt), preferred_element_type=f32)
        + b_out_ref[...]
    )                                                                 # (TM, 1)


def dgm_forward(x, params, compute_dtype=None):
    if compute_dtype is None:
        compute_dtype = _compute_dtype_for_backend()
    n, d_in = x.shape
    h = params["w_in"].shape[1]
    layers = params["w_h"].shape[0]
    assert n % 8 == 0, "batch must be a multiple of 8"
    tm = _choose_tile(n)

    kernel = functools.partial(dgm_kernel, layers=layers, compute_dtype=compute_dtype)
    return pl.pallas_call(
        kernel,
        out_shape=jax.ShapeDtypeStruct((n, 1), jnp.float32),
        grid_spec=pltpu.PrefetchScalarGridSpec(
            num_scalar_prefetch=0,
            grid=(n // tm,),
            in_specs=[
                pl.BlockSpec((tm, d_in), lambda i: (i, 0)),           # x tile
                pl.BlockSpec((d_in, h), lambda i: (0, 0)),            # W_in^T (resident)
                pl.BlockSpec((1, h), lambda i: (0, 0)),               # b_in
                pl.BlockSpec((layers, h, h), lambda i: (0, 0, 0)),    # stacked W_h^T (resident)
                pl.BlockSpec((layers, 1, h), lambda i: (0, 0, 0)),    # stacked b_h
                pl.BlockSpec((h, 1), lambda i: (0, 0)),               # W_out^T
                pl.BlockSpec((1, 1), lambda i: (0, 0)),               # b_out
            ],
            out_specs=pl.BlockSpec((tm, 1), lambda i: (i, 0)),
        ),
        compiler_params=pltpu.CompilerParams(
            dimension_semantics=("parallel",)
        ),
    )(x, params["w_in"], params["b_in"], params["w_h"], params["b_h"],
      params["w_out"], params["b_out"])


def dgm_forward_ref(x, params, compute_dtype=jnp.float32):
    """Pure-JAX reference with identical math (and identical dtype policy) for validation."""
    cdt = compute_dtype
    f32 = jnp.float32
    S = jnp.tanh(
        jnp.dot(x.astype(cdt), params["w_in"].astype(cdt), preferred_element_type=f32)
        + params["b_in"]
    ).astype(cdt)
    for l in range(params["w_h"].shape[0]):
        W = params["w_h"][l].astype(cdt)
        b = params["b_h"][l]
        hS = jnp.dot(S, W, preferred_element_type=f32) + b
        hSb = hS + b
        Z = jnp.tanh(hS)
        G = jnp.tanh(hSb + jnp.dot(Z.astype(cdt), W, preferred_element_type=f32))
        R = jnp.tanh(hSb + jnp.dot(G.astype(cdt), W, preferred_element_type=f32))
        H = jnp.tanh(hSb + jnp.dot(R.astype(cdt), W, preferred_element_type=f32))
        S = ((1.0 - G) * H + Z).astype(cdt)
    return (jnp.dot(S, params["w_out"].astype(cdt), preferred_element_type=f32)
            + params["b_out"])


def init_params(key, input_dim=INPUT_DIM, hidden_dim=HIDDEN_DIM, layers=LAYERS):
    """Deterministic init mimicking PyTorch Linear default (uniform +-1/sqrt(fan_in)).

    Weights are stored transposed: (in_features, out_features)."""
    keys = jax.random.split(key, 6)
    s_in = 1.0 / np.sqrt(input_dim)
    s_h = 1.0 / np.sqrt(hidden_dim)
    return {
        "w_in": jax.random.uniform(keys[0], (input_dim, hidden_dim),
                                   jnp.float32, -s_in, s_in),
        "b_in": jax.random.uniform(keys[1], (1, hidden_dim),
                                   jnp.float32, -s_in, s_in),
        "w_h": jax.random.uniform(keys[2], (layers, hidden_dim, hidden_dim),
                                  jnp.float32, -s_h, s_h),
        "b_h": jax.random.uniform(keys[3], (layers, 1, hidden_dim),
                                  jnp.float32, -s_h, s_h),
        "w_out": jax.random.uniform(keys[4], (hidden_dim, 1),
                                    jnp.float32, -s_h, s_h),
        "b_out": jax.random.uniform(keys[5], (1, 1),
                                    jnp.float32, -s_h, s_h),
    }


# TODO(synk): DGMNet.loss (autograd.grad PDE residual + boundary/IC MSE terms) is
# training-time autodiff over the forward and is not translated to a kernel.

if __name__ == "__main__":
    key = jax.random.PRNGKey(0)
    k_param, k_x = jax.random.split(key)
    params = init_params(k_param)
    # x = concat([x_spatial, t]) -> (BATCH, 2)
    x = jax.random.normal(k_x, (BATCH, INPUT_DIM), dtype=jnp.float32)

    cdt = _compute_dtype_for_backend()

    out = jax.block_until_ready(dgm_forward(x, params, compute_dtype=cdt))
    assert out.shape == (BATCH, 1)

    ref = jax.block_until_ready(dgm_forward_ref(x, params, compute_dtype=cdt))
    if np.dtype(cdt) == np.dtype(np.float32):
        rtol, atol = 1e-4, 1e-5
    else:  # bf16 matmul inputs on v6e/v7x -> relaxed tolerance
        rtol, atol = 5e-3, 5e-3
    np.testing.assert_allclose(np.asarray(out), np.asarray(ref), rtol=rtol, atol=atol)
    print("KERNEL_OK")
</pallas_src>

<mosaic_0001>
module attributes {stable_mosaic.version = 11 : i64} {
  func.func @dgm_kernel(%arg0: i32, %arg1: memref<128x2xf32, #tpu.memory_space<vmem>>, %arg2: memref<2x32xf32, #tpu.memory_space<vmem>>, %arg3: memref<1x32xf32, #tpu.memory_space<vmem>>, %arg4: memref<4x32x32xf32, #tpu.memory_space<vmem>>, %arg5: memref<4x1x32xf32, #tpu.memory_space<vmem>>, %arg6: memref<32x1xf32, #tpu.memory_space<vmem>>, %arg7: memref<1x1xf32, #tpu.memory_space<vmem>>, %arg8: memref<128x1xf32, #tpu.memory_space<vmem>>) attributes {dimension_semantics = [#tpu.dimension_semantics<parallel>], iteration_bounds = array<i64: 2>, scalar_prefetch = 0 : i64, scratch_operands = 0 : i64, tpu.core_type = #tpu.core_type<tc>, window_params = [{transform_indices = @transform_0, window_bounds = array<i64: 128, 2>}, {pipeline_mode = #tpu.pipeline_mode<synchronous>, transform_indices = @transform_1, window_bounds = array<i64: 2, 32>}, {pipeline_mode = #tpu.pipeline_mode<synchronous>, transform_indices = @transform_2, window_bounds = array<i64: 1, 32>}, {pipeline_mode = #tpu.pipeline_mode<synchronous>, transform_indices = @transform_3, window_bounds = array<i64: 4, 32, 32>}, {pipeline_mode = #tpu.pipeline_mode<synchronous>, transform_indices = @transform_4, window_bounds = array<i64: 4, 1, 32>}, {pipeline_mode = #tpu.pipeline_mode<synchronous>, transform_indices = @transform_5, window_bounds = array<i64: 32, 1>}, {pipeline_mode = #tpu.pipeline_mode<synchronous>, transform_indices = @transform_6, window_bounds = array<i64: 1, 1>}, {transform_indices = @transform_7, window_bounds = array<i64: 128, 1>}]} {
    %c0 = arith.constant 0 : index
    %c0_0 = arith.constant 0 : index
    %0 = vector.load %arg1[%c0, %c0_0] : memref<128x2xf32, #tpu.memory_space<vmem>>, vector<128x2xf32>
    %c0_1 = arith.constant 0 : index
    %c0_2 = arith.constant 0 : index
    %1 = vector.load %arg2[%c0_1, %c0_2] : memref<2x32xf32, #tpu.memory_space<vmem>>, vector<2x32xf32>
    %cst = arith.constant dense<0.000000e+00> : vector<128x32xf32>
    %2 = tpu.matmul %0, %1, %cst {dimension_numbers = #tpu.dot_dimension_numbers<[1], [0], [0], [1], [0, 0, 1, 1], [], []>} : vector<128x2xf32>, vector<2x32xf32>, vector<128x32xf32> -> vector<128x32xf32>
    %c0_3 = arith.constant 0 : index
    %c0_4 = arith.constant 0 : index
    %3 = vector.load %arg3[%c0_3, %c0_4] : memref<1x32xf32, #tpu.memory_space<vmem>>, vector<1x32xf32>
    %4 = vector.broadcast %3 : vector<1x32xf32> to vector<128x32xf32>
    %5 = arith.addf %2, %4 : vector<128x32xf32>
    %6 = math.tanh %5 : vector<128x32xf32>
    %c0_5 = arith.constant 0 : index
    %c0_6 = arith.constant 0 : index
    %c0_7 = arith.constant 0 : index
    %7 = vector.load %arg4[%c0_5, %c0_6, %c0_7] : memref<4x32x32xf32, #tpu.memory_space<vmem>>, vector<1x32x32xf32>
    %8 = vector.shape_cast %7 : vector<1x32x32xf32> to vector<32x32xf32>
    %c0_8 = arith.constant 0 : index
    %c0_9 = arith.constant 0 : index
    %c0_10 = arith.constant 0 : index
    %9 = vector.load %arg5[%c0_8, %c0_9, %c0_10] : memref<4x1x32xf32, #tpu.memory_space<vmem>>, vector<1x1x32xf32>
    %10 = vector.shape_cast %9 : vector<1x1x32xf32> to vector<1x32xf32>
    %cst_11 = arith.constant dense<0.000000e+00> : vector<128x32xf32>
    %11 = tpu.matmul %6, %8, %cst_11 {dimension_numbers = #tpu.dot_dimension_numbers<[1], [0], [0], [1], [0, 0, 1, 1], [], []>} : vector<128x32xf32>, vector<32x32xf32>, vector<128x32xf32> -> vector<128x32xf32>
    %12 = vector.broadcast %10 : vector<1x32xf32> to vector<128x32xf32>
    %13 = arith.addf %11, %12 : vector<128x32xf32>
    %14 = vector.broadcast %10 : vector<1x32xf32> to vector<128x32xf32>
    %15 = arith.addf %13, %14 : vector<128x32xf32>
    %16 = math.tanh %13 : vector<128x32xf32>
    %cst_12 = arith.constant dense<0.000000e+00> : vector<128x32xf32>
    %17 = tpu.matmul %16, %8, %cst_12 {dimension_numbers = #tpu.dot_dimension_numbers<[1], [0], [0], [1], [0, 0, 1, 1], [], []>} : vector<128x32xf32>, vector<32x32xf32>, vector<128x32xf32> -> vector<128x32xf32>
    %18 = arith.addf %15, %17 : vector<128x32xf32>
    %19 = math.tanh %18 : vector<128x32xf32>
    %cst_13 = arith.constant dense<0.000000e+00> : vector<128x32xf32>
    %20 = tpu.matmul %19, %8, %cst_13 {dimension_numbers = #tpu.dot_dimension_numbers<[1], [0], [0], [1], [0, 0, 1, 1], [], []>} : vector<128x32xf32>, vector<32x32xf32>, vector<128x32xf32> -> vector<128x32xf32>
    %21 = arith.addf %15, %20 : vector<128x32xf32>
    %22 = math.tanh %21 : vector<128x32xf32>
    %cst_14 = arith.constant dense<0.000000e+00> : vector<128x32xf32>
    %23 = tpu.matmul %22, %8, %cst_14 {dimension_numbers = #tpu.dot_dimension_numbers<[1], [0], [0], [1], [0, 0, 1, 1], [], []>} : vector<128x32xf32>, vector<32x32xf32>, vector<128x32xf32> -> vector<128x32xf32>
    %24 = arith.addf %15, %23 : vector<128x32xf32>
    %25 = math.tanh %24 : vector<128x32xf32>
    %cst_15 = arith.constant 1.000000e+00 : f32
    %26 = vector.broadcast %cst_15 : f32 to vector<128x32xf32>
    %27 = arith.subf %26, %19 : vector<128x32xf32>
    %28 = arith.mulf %27, %25 : vector<128x32xf32>
    %29 = arith.addf %28, %16 : vector<128x32xf32>
    %c1 = arith.constant 1 : index
    %c0_16 = arith.constant 0 : index
    %c0_17 = arith.constant 0 : index
    %30 = vector.load %arg4[%c1, %c0_16, %c0_17] : memref<4x32x32xf32, #tpu.memory_space<vmem>>, vector<1x32x32xf32>
    %31 = vector.shape_cast %30 : vector<1x32x32xf32> to vector<32x32xf32>
    %c1_18 = arith.constant 1 : index
    %c0_19 = arith.constant 0 : index
    %c0_20 = arith.constant 0 : index
    %32 = vector.load %arg5[%c1_18, %c0_19, %c0_20] : memref<4x1x32xf32, #tpu.memory_space<vmem>>, vector<1x1x32xf32>
    %33 = vector.shape_cast %32 : vector<1x1x32xf32> to vector<1x32xf32>
    %cst_21 = arith.constant dense<0.000000e+00> : vector<128x32xf32>
    %34 = tpu.matmul %29, %31, %cst_21 {dimension_numbers = #tpu.dot_dimension_numbers<[1], [0], [0], [1], [0, 0, 1, 1], [], []>} : vector<128x32xf32>, vector<32x32xf32>, vector<128x32xf32> -> vector<128x32xf32>
    %35 = vector.broadcast %33 : vector<1x32xf32> to vector<128x32xf32>
    %36 = arith.addf %34, %35 : vector<128x32xf32>
    %37 = vector.broadcast %33 : vector<1x32xf32> to vector<128x32xf32>
    %38 = arith.addf %36, %37 : vector<128x32xf32>
    %39 = math.tanh %36 : vector<128x32xf32>
    %cst_22 = arith.constant dense<0.000000e+00> : vector<128x32xf32>
    %40 = tpu.matmul %39, %31, %cst_22 {dimension_numbers = #tpu.dot_dimension_numbers<[1], [0], [0], [1], [0, 0, 1, 1], [], []>} : vector<128x32xf32>, vector<32x32xf32>, vector<128x32xf32> -> vector<128x32xf32>
    %41 = arith.addf %38, %40 : vector<128x32xf32>
    %42 = math.tanh %41 : vector<128x32xf32>
    %cst_23 = arith.constant dense<0.000000e+00> : vector<128x32xf32>
    %43 = tpu.matmul %42, %31, %cst_23 {dimension_numbers = #tpu.dot_dimension_numbers<[1], [0], [0], [1], [0, 0, 1, 1], [], []>} : vector<128x32xf32>, vector<32x32xf32>, vector<128x32xf32> -> vector<128x32xf32>
    %44 = arith.addf %38, %43 : vector<128x32xf32>
    %45 = math.tanh %44 : vector<128x32xf32>
    %cst_24 = arith.constant dense<0.000000e+00> : vector<128x32xf32>
    %46 = tpu.matmul %45, %31, %cst_24 {dimension_numbers = #tpu.dot_dimension_numbers<[1], [0], [0], [1], [0, 0, 1, 1], [], []>} : vector<128x32xf32>, vector<32x32xf32>, vector<128x32xf32> -> vector<128x32xf32>
    %47 = arith.addf %38, %46 : vector<128x32xf32>
    %48 = math.tanh %47 : vector<128x32xf32>
    %cst_25 = arith.constant 1.000000e+00 : f32
    %49 = vector.broadcast %cst_25 : f32 to vector<128x32xf32>
    %50 = arith.subf %49, %42 : vector<128x32xf32>
    %51 = arith.mulf %50, %48 : vector<128x32xf32>
    %52 = arith.addf %51, %39 : vector<128x32xf32>
    %c2 = arith.constant 2 : index
    %c0_26 = arith.constant 0 : index
    %c0_27 = arith.constant 0 : index
    %53 = vector.load %arg4[%c2, %c0_26, %c0_27] : memref<4x32x32xf32, #tpu.memory_space<vmem>>, vector<1x32x32xf32>
    %54 = vector.shape_cast %53 : vector<1x32x32xf32> to vector<32x32xf32>
    %c2_28 = arith.constant 2 : index
    %c0_29 = arith.constant 0 : index
    %c0_30 = arith.constant 0 : index
    %55 = vector.load %arg5[%c2_28, %c0_29, %c0_30] : memref<4x1x32xf32, #tpu.memory_space<vmem>>, vector<1x1x32xf32>
    %56 = vector.shape_cast %55 : vector<1x1x32xf32> to vector<1x32xf32>
    %cst_31 = arith.constant dense<0.000000e+00> : vector<128x32xf32>
    %57 = tpu.matmul %52, %54, %cst_31 {dimension_numbers = #tpu.dot_dimension_numbers<[1], [0], [0], [1], [0, 0, 1, 1], [], []>} : vector<128x32xf32>, vector<32x32xf32>, vector<128x32xf32> -> vector<128x32xf32>
    %58 = vector.broadcast %56 : vector<1x32xf32> to vector<128x32xf32>
    %59 = arith.addf %57, %58 : vector<128x32xf32>
    %60 = vector.broadcast %56 : vector<1x32xf32> to vector<128x32xf32>
    %61 = arith.addf %59, %60 : vector<128x32xf32>
    %62 = math.tanh %59 : vector<128x32xf32>
    %cst_32 = arith.constant dense<0.000000e+00> : vector<128x32xf32>
    %63 = tpu.matmul %62, %54, %cst_32 {dimension_numbers = #tpu.dot_dimension_numbers<[1], [0], [0], [1], [0, 0, 1, 1], [], []>} : vector<128x32xf32>, vector<32x32xf32>, vector<128x32xf32> -> vector<128x32xf32>
    %64 = arith.addf %61, %63 : vector<128x32xf32>
    %65 = math.tanh %64 : vector<128x32xf32>
    %cst_33 = arith.constant dense<0.000000e+00> : vector<128x32xf32>
    %66 = tpu.matmul %65, %54, %cst_33 {dimension_numbers = #tpu.dot_dimension_numbers<[1], [0], [0], [1], [0, 0, 1, 1], [], []>} : vector<128x32xf32>, vector<32x32xf32>, vector<128x32xf32> -> vector<128x32xf32>
    %67 = arith.addf %61, %66 : vector<128x32xf32>
    %68 = math.tanh %67 : vector<128x32xf32>
    %cst_34 = arith.constant dense<0.000000e+00> : vector<128x32xf32>
    %69 = tpu.matmul %68, %54, %cst_34 {dimension_numbers = #tpu.dot_dimension_numbers<[1], [0], [0], [1], [0, 0, 1, 1], [], []>} : vector<128x32xf32>, vector<32x32xf32>, vector<128x32xf32> -> vector<128x32xf32>
    %70 = arith.addf %61, %69 : vector<128x32xf32>
    %71 = math.tanh %70 : vector<128x32xf32>
    %cst_35 = arith.constant 1.000000e+00 : f32
    %72 = vector.broadcast %cst_35 : f32 to vector<128x32xf32>
    %73 = arith.subf %72, %65 : vector<128x32xf32>
    %74 = arith.mulf %73, %71 : vector<128x32xf32>
    %75 = arith.addf %74, %62 : vector<128x32xf32>
    %c3 = arith.constant 3 : index
    %c0_36 = arith.constant 0 : index
    %c0_37 = arith.constant 0 : index
    %76 = vector.load %arg4[%c3, %c0_36, %c0_37] : memref<4x32x32xf32, #tpu.memory_space<vmem>>, vector<1x32x32xf32>
    %77 = vector.shape_cast %76 : vector<1x32x32xf32> to vector<32x32xf32>
    %c3_38 = arith.constant 3 : index
    %c0_39 = arith.constant 0 : index
    %c0_40 = arith.constant 0 : index
    %78 = vector.load %arg5[%c3_38, %c0_39, %c0_40] : memref<4x1x32xf32, #tpu.memory_space<vmem>>, vector<1x1x32xf32>
    %79 = vector.shape_cast %78 : vector<1x1x32xf32> to vector<1x32xf32>
    %cst_41 = arith.constant dense<0.000000e+00> : vector<128x32xf32>
    %80 = tpu.matmul %75, %77, %cst_41 {dimension_numbers = #tpu.dot_dimension_numbers<[1], [0], [0], [1], [0, 0, 1, 1], [], []>} : vector<128x32xf32>, vector<32x32xf32>, vector<128x32xf32> -> vector<128x32xf32>
    %81 = vector.broadcast %79 : vector<1x32xf32> to vector<128x32xf32>
    %82 = arith.addf %80, %81 : vector<128x32xf32>
    %83 = vector.broadcast %79 : vector<1x32xf32> to vector<128x32xf32>
    %84 = arith.addf %82, %83 : vector<128x32xf32>
    %85 = math.tanh %82 : vector<128x32xf32>
    %cst_42 = arith.constant dense<0.000000e+00> : vector<128x32xf32>
    %86 = tpu.matmul %85, %77, %cst_42 {dimension_numbers = #tpu.dot_dimension_numbers<[1], [0], [0], [1], [0, 0, 1, 1], [], []>} : vector<128x32xf32>, vector<32x32xf32>, vector<128x32xf32> -> vector<128x32xf32>
    %87 = arith.addf %84, %86 : vector<128x32xf32>
    %88 = math.tanh %87 : vector<128x32xf32>
    %cst_43 = arith.constant dense<0.000000e+00> : vector<128x32xf32>
    %89 = tpu.matmul %88, %77, %cst_43 {dimension_numbers = #tpu.dot_dimension_numbers<[1], [0], [0], [1], [0, 0, 1, 1], [], []>} : vector<128x32xf32>, vector<32x32xf32>, vector<128x32xf32> -> vector<128x32xf32>
    %90 = arith.addf %84, %89 : vector<128x32xf32>
    %91 = math.tanh %90 : vector<128x32xf32>
    %cst_44 = arith.constant dense<0.000000e+00> : vector<128x32xf32>
    %92 = tpu.matmul %91, %77, %cst_44 {dimension_numbers = #tpu.dot_dimension_numbers<[1], [0], [0], [1], [0, 0, 1, 1], [], []>} : vector<128x32xf32>, vector<32x32xf32>, vector<128x32xf32> -> vector<128x32xf32>
    %93 = arith.addf %84, %92 : vector<128x32xf32>
    %94 = math.tanh %93 : vector<128x32xf32>
    %cst_45 = arith.constant 1.000000e+00 : f32
    %95 = vector.broadcast %cst_45 : f32 to vector<128x32xf32>
    %96 = arith.subf %95, %88 : vector<128x32xf32>
    %97 = arith.mulf %96, %94 : vector<128x32xf32>
    %98 = arith.addf %97, %85 : vector<128x32xf32>
    %c0_46 = arith.constant 0 : index
    %c0_47 = arith.constant 0 : index
    %99 = vector.load %arg6[%c0_46, %c0_47] : memref<32x1xf32, #tpu.memory_space<vmem>>, vector<32x1xf32>
    %cst_48 = arith.constant dense<0.000000e+00> : vector<128x1xf32>
    %100 = tpu.matmul %98, %99, %cst_48 {dimension_numbers = #tpu.dot_dimension_numbers<[1], [0], [0], [1], [0, 0, 1, 1], [], []>} : vector<128x32xf32>, vector<32x1xf32>, vector<128x1xf32> -> vector<128x1xf32>
    %c0_49 = arith.constant 0 : index
    %c0_50 = arith.constant 0 : index
    %101 = vector.load %arg7[%c0_49, %c0_50] : memref<1x1xf32, #tpu.memory_space<vmem>>, vector<1x1xf32>
    %102 = vector.broadcast %101 : vector<1x1xf32> to vector<128x1xf32>
    %103 = arith.addf %100, %102 : vector<128x1xf32>
    %c0_51 = arith.constant 0 : index
    %c0_52 = arith.constant 0 : index
    %104 = vector.load %arg8[%c0_51, %c0_52] : memref<128x1xf32, #tpu.memory_space<vmem>>, vector<128x1xf32>
    tpu.vector_store %arg8[%c0_51, %c0_52], %103 {strides = array<i32>} : memref<128x1xf32, #tpu.memory_space<vmem>>, vector<128x1xf32>,
    return
  }
  func.func @transform_0(%arg0: i32) -> (i32, i32) {
    %c0_i32 = arith.constant 0 : i32
    %c0_i32_0 = arith.constant 0 : i32
    return %arg0, %c0_i32 : i32, i32
  }
  func.func @transform_1(%arg0: i32) -> (i32, i32) {
    %c0_i32 = arith.constant 0 : i32
    %c0_i32_0 = arith.constant 0 : i32
    %c0_i32_1 = arith.constant 0 : i32
    return %c0_i32, %c0_i32_0 : i32, i32
  }
  func.func @transform_2(%arg0: i32) -> (i32, i32) {
    %c0_i32 = arith.constant 0 : i32
    %c0_i32_0 = arith.constant 0 : i32
    %c0_i32_1 = arith.constant 0 : i32
    return %c0_i32, %c0_i32_0 : i32, i32
  }
  func.func @transform_3(%arg0: i32) -> (i32, i32, i32) {
    %c0_i32 = arith.constant 0 : i32
    %c0_i32_0 = arith.constant 0 : i32
    %c0_i32_1 = arith.constant 0 : i32
    %c0_i32_2 = arith.constant 0 : i32
    return %c0_i32, %c0_i32_0, %c0_i32_1 : i32, i32, i32
  }
  func.func @transform_4(%arg0: i32) -> (i32, i32, i32) {
    %c0_i32 = arith.constant 0 : i32
    %c0_i32_0 = arith.constant 0 : i32
    %c0_i32_1 = arith.constant 0 : i32
    %c0_i32_2 = arith.constant 0 : i32
    return %c0_i32, %c0_i32_0, %c0_i32_1 : i32, i32, i32
  }
  func.func @transform_5(%arg0: i32) -> (i32, i32) {
    %c0_i32 = arith.constant 0 : i32
    %c0_i32_0 = arith.constant 0 : i32
    %c0_i32_1 = arith.constant 0 : i32
    return %c0_i32, %c0_i32_0 : i32, i32
  }
  func.func @transform_6(%arg0: i32) -> (i32, i32) {
    %c0_i32 = arith.constant 0 : i32
    %c0_i32_0 = arith.constant 0 : i32
    %c0_i32_1 = arith.constant 0 : i32
    return %c0_i32, %c0_i32_0 : i32, i32
  }
  func.func @transform_7(%arg0: i32) -> (i32, i32) {
    %c0_i32 = arith.constant 0 : i32
    %c0_i32_0 = arith.constant 0 : i32
    return %arg0, %c0_i32 : i32, i32
  }
}

</mosaic_0001>

<llo_original>
// kernel: tpu_custom_call.1
$region0: #{tpu_custom_call.1}
  #allocation0 [shape = 'u32[]', space=smem, size = 0x4, offset = 0x4, fixed_abs, tag = 'smem constant byte address 0x4 - core index']
  #allocation1 [shape = 'u32[144,128]{1,0:T(1,128)}', space=vmem, size = 0x12000, scoped, tag = 'internal scratch']
  #allocation2 [shape = 'f32[1,1]{1,0:T(1,128)S(1)}', space=vmem, size = 0x200, scoped, tag = 'scoped memory for tpu_custom_call.1']
  %s0 = inlined_call_operand.vmem [shape: f32[256,2], index: 0, kind: input, shape index: {}]
  %s1 = inlined_call_operand.vmem [shape: f32[2,32], index: 1, kind: input, shape index: {}]
  %s2 = inlined_call_operand.vmem [shape: f32[1,32], index: 2, kind: input, shape index: {}]
  %s3 = inlined_call_operand.vmem [shape: f32[4,32,32], index: 3, kind: input, shape index: {}]
  %s4 = inlined_call_operand.vmem [shape: f32[4,1,32], index: 4, kind: input, shape index: {}]
  %s5 = inlined_call_operand.vmem [shape: f32[32,1], index: 5, kind: input, shape index: {}]
  %s6 = inlined_call_operand.<no memory space> [shape: f32[1,1], index: 6, kind: input, shape index: {}]
  %s7 = inlined_call_operand.vmem [shape: f32[256,1], index: 7, kind: output, shape index: {}]
  %s8 = sld [smem:[#allocation0]]
  $region61: #{tpu_custom_call.1} parent=0
    _
  %s10 = ssub.s32 1, %s8
  %s11 = scalar_select 0, %s10, %s8
  %v12 = vstv %s6
  %13 = vst [vmem:[#allocation2] sm:$0x1] %v12
  loop: start=0, step=1, limit=4
  $region2: #{tpu_custom_call.1} parent=0 // loop_pre_header
    _
  $region3: #{tpu_custom_call.1} parent=0 // loop_header
    %s15 = sphi 0, %s19
    %p16 = scmp.ge.s32.totalorder %s15, 4
    %s25 = sphi 0, %s27
    %s28 = sphi 0, %s25
    %s29 = sphi 0, %s28
    %s45 = sphi 0, %s29
    %s49 = sphi 0, %s49
    %s51 = sphi 0, %s49
    %s52 = sphi 0, %s51
    %s66 = sphi 0, %s52
    %s70 = sphi 0, %s70
    %s72 = sphi 0, %s70
    %s73 = sphi 0, %s72
    %s87 = sphi 0, %s73
    %s91 = sphi 0, %s91
    %s93 = sphi 0, %s91
    %s94 = sphi 0, %s93
    %s108 = sphi 0, %s94
    %s112 = sphi 0, %s112
    %s114 = sphi 0, %s112
    %s115 = sphi 0, %s114
    %s129 = sphi 0, %s115
    %s133 = sphi 0, %s133
    %s135 = sphi 0, %s133
    %s136 = sphi 0, %s135
    %s150 = sphi 0, %s136
    %s154 = sphi 0, %s154
    %s156 = sphi 0, %s154
    %s157 = sphi 0, %s156
    %s171 = sphi 0, %s157
    %s177 = sphi 0, %s179
    %s180 = sphi 0, %s177
    %s181 = sphi 0, %s180
    %s197 = sphi 0, %s181
  $region4: #{tpu_custom_call.1} parent=0 // loop_header_branch
    %18 = sbr.rel (%p16) target = $region8
  $region5: #{tpu_custom_call.1} parent=0 // loop_body
    %s20 = ssub.s32 %s15, 1
    %s21 = ssub.s32 %s15, 2
    %s22 = sadd.s32 %s15, 1
    %s23 = ssub.s32 %s15, %s22
    %p24 = scmp.eq.s32.totalorder %s23, 0
    %s26 = sadd.s32 %s25, 1
    %s27 = scalar_select %p24, %s25, %s26
    %p30 = pneg %p24
    %p31 = scmp.eq.s32.totalorder %s15, 1
    %p32 = por %p30, %p31
    %p33 = scmp.ne.s32.totalorder %s25, %s28
    %p34 = scmp.eq.s32.totalorder %s15, 0
    %p35 = por %p33, %p34
    %p36 = scmp.ne.s32.totalorder %s25, %s28
    %p37 = scmp.eq.s32.totalorder %s20, 1
    %p38 = por %p36, %p37
    %p39 = scmp.ne.s32.totalorder %s28, %s29
    %p40 = scmp.eq.s32.totalorder %s20, 0
    %p41 = por %p39, %p40
    %p42 = scmp.ne.s32.totalorder %s28, %s29
    %p43 = scmp.eq.s32.totalorder %s21, 1
    %p44 = por %p42, %p43
    %p46 = scmp.ne.s32.totalorder %s29, %s45
    %p47 = scmp.eq.s32.totalorder %s21, 0
    %p48 = por %p46, %p47
    %s50 = sadd.s32 %s49, 1
    %p53 = scmp.eq.s32.totalorder %s15, 1
    %p54 = scmp.ne.s32.totalorder %s49, %s51
    %p55 = scmp.eq.s32.totalorder %s15, 0
    %p56 = por %p54, %p55
    %p57 = scmp.ne.s32.totalorder %s49, %s51
    %p58 = scmp.eq.s32.totalorder %s20, 1
    %p59 = por %p57, %p58
    %p60 = scmp.ne.s32.totalorder %s51, %s52
    %p61 = scmp.eq.s32.totalorder %s20, 0
    %p62 = por %p60, %p61
    %p63 = scmp.ne.s32.totalorder %s51, %s52
    %p64 = scmp.eq.s32.totalorder %s21, 1
    %p65 = por %p63, %p64
    %p67 = scmp.ne.s32.totalorder %s52, %s66
    %p68 = scmp.eq.s32.totalorder %s21, 0
    %p69 = por %p67, %p68
    %s71 = sadd.s32 %s70, 1
    %p74 = scmp.eq.s32.totalorder %s15, 1
    %p75 = scmp.ne.s32.totalorder %s70, %s72
    %p76 = scmp.eq.s32.totalorder %s15, 0
    %p77 = por %p75, %p76
    %p78 = scmp.ne.s32.totalorder %s70, %s72
    %p79 = scmp.eq.s32.totalorder %s20, 1
    %p80 = por %p78, %p79
    %p81 = scmp.ne.s32.totalorder %s72, %s73
    %p82 = scmp.eq.s32.totalorder %s20, 0
    %p83 = por %p81, %p82
    %p84 = scmp.ne.s32.totalorder %s72, %s73
    %p85 = scmp.eq.s32.totalorder %s21, 1
    %p86 = por %p84, %p85
    %p88 = scmp.ne.s32.totalorder %s73, %s87
    %p89 = scmp.eq.s32.totalorder %s21, 0
    %p90 = por %p88, %p89
    %s92 = sadd.s32 %s91, 1
    %p95 = scmp.eq.s32.totalorder %s15, 1
    %p96 = scmp.ne.s32.totalorder %s91, %s93
    %p97 = scmp.eq.s32.totalorder %s15, 0
    %p98 = por %p96, %p97
    %p99 = scmp.ne.s32.totalorder %s91, %s93
    %p100 = scmp.eq.s32.totalorder %s20, 1
    %p101 = por %p99, %p100
    %p102 = scmp.ne.s32.totalorder %s93, %s94
    %p103 = scmp.eq.s32.totalorder %s20, 0
    %p104 = por %p102, %p103
    %p105 = scmp.ne.s32.totalorder %s93, %s94
    %p106 = scmp.eq.s32.totalorder %s21, 1
    %p107 = por %p105, %p106
    %p109 = scmp.ne.s32.totalorder %s94, %s108
    %p110 = scmp.eq.s32.totalorder %s21, 0
    %p111 = por %p109, %p110
    %s113 = sadd.s32 %s112, 1
    %p116 = scmp.eq.s32.totalorder %s15, 1
    %p117 = scmp.ne.s32.totalorder %s112, %s114
    %p118 = scmp.eq.s32.totalorder %s15, 0
    %p119 = por %p117, %p118
    %p120 = scmp.ne.s32.totalorder %s112, %s114
    %p121 = scmp.eq.s32.totalorder %s20, 1
    %p122 = por %p120, %p121
    %p123 = scmp.ne.s32.totalorder %s114, %s115
    %p124 = scmp.eq.s32.totalorder %s20, 0
    %p125 = por %p123, %p124
    %p126 = scmp.ne.s32.totalorder %s114, %s115
    %p127 = scmp.eq.s32.totalorder %s21, 1
    %p128 = por %p126, %p127
    %p130 = scmp.ne.s32.totalorder %s115, %s129
    %p131 = scmp.eq.s32.totalorder %s21, 0
    %p132 = por %p130, %p131
    %s134 = sadd.s32 %s133, 1
    %p137 = scmp.eq.s32.totalorder %s15, 1
    %p138 = scmp.ne.s32.totalorder %s133, %s135
    %p139 = scmp.eq.s32.totalorder %s15, 0
    %p140 = por %p138, %p139
    %p141 = scmp.ne.s32.totalorder %s133, %s135
    %p142 = scmp.eq.s32.totalorder %s20, 1
    %p143 = por %p141, %p142
    %p144 = scmp.ne.s32.totalorder %s135, %s136
    %p145 = scmp.eq.s32.totalorder %s20, 0
    %p146 = por %p144, %p145
    %p147 = scmp.ne.s32.totalorder %s135, %s136
    %p148 = scmp.eq.s32.totalorder %s21, 1
    %p149 = por %p147, %p148
    %p151 = scmp.ne.s32.totalorder %s136, %s150
    %p152 = scmp.eq.s32.totalorder %s21, 0
    %p153 = por %p151, %p152
    %s155 = sadd.s32 %s154, 1
    %p158 = scmp.eq.s32.totalorder %s15, 1
    %p159 = scmp.ne.s32.totalorder %s154, %s156
    %p160 = scmp.eq.s32.totalorder %s15, 0
    %p161 = por %p159, %p160
    %p162 = scmp.ne.s32.totalorder %s154, %s156
    %p163 = scmp.eq.s32.totalorder %s20, 1
    %p164 = por %p162, %p163
    %p165 = scmp.ne.s32.totalorder %s156, %s157
    %p166 = scmp.eq.s32.totalorder %s20, 0
    %p167 = por %p165, %p166
    %p168 = scmp.ne.s32.totalorder %s156, %s157
    %p169 = scmp.eq.s32.totalorder %s21, 1
    %p170 = por %p168, %p169
    %p172 = scmp.ne.s32.totalorder %s157, %s171
    %p173 = scmp.eq.s32.totalorder %s21, 0
    %p174 = por %p172, %p173
    %s175 = ssub.s32 %s15, %s22
    %p176 = scmp.eq.s32.totalorder %s175, 0
    %s178 = sadd.s32 %s177, 1
    %s179 = scalar_select %p176, %s177, %s178
    %p182 = pneg %p176
    %p183 = scmp.eq.s32.totalorder %s15, 1
    %p184 = por %p182, %p183
    %p185 = scmp.ne.s32.totalorder %s177, %s180
    %p186 = scmp.eq.s32.totalorder %s15, 0
    %p187 = por %p185, %p186
    %p188 = scmp.ne.s32.totalorder %s177, %s180
    %p189 = scmp.eq.s32.totalorder %s20, 1
    %p190 = por %p188, %p189
    %p191 = scmp.ne.s32.totalorder %s180, %s181
    %p192 = scmp.eq.s32.totalorder %s20, 0
    %p193 = por %p191, %p192
    %p194 = scmp.ne.s32.totalorder %s180, %s181
    %p195 = scmp.eq.s32.totalorder %s21, 1
    %p196 = por %p194, %p195
    %p198 = scmp.ne.s32.totalorder %s181, %s197
    %p199 = scmp.eq.s32.totalorder %s21, 0
    %p200 = por %p198, %p199
    %p201 = scmp.le.s32.totalorder 1, %s15
    %p202 = scmp.lt.s32.totalorder %s15, 3
    %p203 = pnand %p201, %p202
    %p204 = pneg %p203
    // Predicated region
    $region9: #{tpu_custom_call.1} parent=5 // pred_check
      _
    $region10: #{tpu_custom_call.1} parent=5 // pred_check_branch
      %206 = sbr.rel (%p203) target = $region12
    $region11: #{tpu_custom_call.1} parent=5 // pred_region
      %s207 = ssub.s32 %s15, 1
      // Predicated region
      $region13: #{tpu_custom_call.1} parent=11 // pred_check
        %p208 = pneg %p62
      $region14: #{tpu_custom_call.1} parent=11 // pred_check_branch
        %210 = sbr.rel (%p208) target = $region16
      $region15: #{tpu_custom_call.1} parent=11 // pred_region
        _
      $region16: #{tpu_custom_call.1} parent=11 // pred_fallthru
        _
      // Predicated region
      $region17: #{tpu_custom_call.1} parent=11 // pred_check
        %p211 = pneg %p83
      $region18: #{tpu_custom_call.1} parent=11 // pred_check_branch
        %213 = sbr.rel (%p211) target = $region20
      $region19: #{tpu_custom_call.1} parent=11 // pred_region
        _
      $region20: #{tpu_custom_call.1} parent=11 // pred_fallthru
        _
      // Predicated region
      $region21: #{tpu_custom_call.1} parent=11 // pred_check
        %p214 = pneg %p104
      $region22: #{tpu_custom_call.1} parent=11 // pred_check_branch
        %216 = sbr.rel (%p214) target = $region24
      $region23: #{tpu_custom_call.1} parent=11 // pred_region
        _
      $region24: #{tpu_custom_call.1} parent=11 // pred_fallthru
        _
      // Predicated region
      $region25: #{tpu_custom_call.1} parent=11 // pred_check
        %p217 = pneg %p125
      $region26: #{tpu_custom_call.1} parent=11 // pred_check_branch
        %219 = sbr.rel (%p217) target = $region28
      $region27: #{tpu_custom_call.1} parent=11 // pred_region
        _
      $region28: #{tpu_custom_call.1} parent=11 // pred_fallthru
        _
      // Predicated region
      $region29: #{tpu_custom_call.1} parent=11 // pred_check
        %p220 = pneg %p146
      $region30: #{tpu_custom_call.1} parent=11 // pred_check_branch
        %222 = sbr.rel (%p220) target = $region32
      $region31: #{tpu_custom_call.1} parent=11 // pred_region
        _
      $region32: #{tpu_custom_call.1} parent=11 // pred_fallthru
        _
      // Predicated region
      $region33: #{tpu_custom_call.1} parent=11 // pred_check
        %p223 = pneg %p167
      $region34: #{tpu_custom_call.1} parent=11 // pred_check_branch
        %225 = sbr.rel (%p223) target = $region36
      $region35: #{tpu_custom_call.1} parent=11 // pred_region
        _
      $region36: #{tpu_custom_call.1} parent=11 // pred_fallthru
        _
    $region12: #{tpu_custom_call.1} parent=5 // pred_fallthru
      _
    %p226 = scmp.lt.s32.totalorder %s15, 2
    // Predicated region
    $region37: #{tpu_custom_call.1} parent=5 // pred_check
      %p227 = pneg %p226
    $region38: #{tpu_custom_call.1} parent=5 // pred_check_branch
      %229 = sbr.rel (%p227) target = $region40
    $region39: #{tpu_custom_call.1} parent=5 // pred_region
      // Predicated region
      $region41: #{tpu_custom_call.1} parent=39 // pred_check
        %p230 = pneg %p35
      $region42: #{tpu_custom_call.1} parent=39 // pred_check_branch
        %232 = sbr.rel (%p230) target = $region44
      $region43: #{tpu_custom_call.1} parent=39 // pred_region
        %s233 = smul.u32 16, %s15
        %p234 = scmp.lt.s32.totalorder %s233, 31
        %s235 = scalar_select %p234, %s233, 31
        %s236 = smul.addr %s235, 8
        %s237 = scalar_lea.vmem %s0, %s236
        %s238 = smul.u32 16, %s15
      $region44: #{tpu_custom_call.1} parent=39 // pred_fallthru
        _
    $region40: #{tpu_custom_call.1} parent=5 // pred_fallthru
      _
    %p239 = scmp.le.s32.totalorder 1, %s15
    %p240 = scmp.lt.s32.totalorder %s15, 3
    %p241 = pnand %p239, %p240
    %p242 = pneg %p241
    // Predicated region
    $region45: #{tpu_custom_call.1} parent=5 // pred_check
      _
    $region46: #{tpu_custom_call.1} parent=5 // pred_check_branch
      %244 = sbr.rel (%p241) target = $region48
    $region47: #{tpu_custom_call.1} parent=5 // pred_region
      %s245 = ssub.s32 %s15, 1
      %s246 = smul.u32 16, %s20
      %p247 = scmp.lt.s32.totalorder %s246, 31
      %s248 = scalar_select %p247, %s246, 31
      %s249 = smul.addr %s248, 8
      %s250 = scalar_lea.vmem %s0, %s249
      %p251 = pneg %p41
      %p252 = pneg %p38
      %p253 = pneg %p62
      %p254 = pneg %p59
      %p255 = pneg %p83
      %p256 = pneg %p80
      %p257 = pneg %p104
      %p258 = pneg %p101
      %p259 = pneg %p125
      %p260 = pneg %p122
      %p261 = pneg %p146
      %p262 = pneg %p143
      %p263 = pneg %p167
      %p264 = pneg %p164
      %p265 = pneg %p193
      %p266 = pneg %p190
      %s267 = smul.u32 16, %s20
      %p268 = scmp.lt.s32.totalorder %s267, 31
      %s269 = scalar_select %p268, %s267, 31
      %s270 = smul.addr %s269, 8
      %s271 = scalar_lea.vmem %s7, %s270
      %s272 = smul.u32 16, %s20
      %p273 = scmp.lt.s32.totalorder %s272, 31
      %s274 = scalar_select %p273, %s272, 31
      %s275 = smul.addr %s274, 8
      %s276 = scalar_lea.vmem %s0, %s275
      %s277 = smul.u32 16, %s20
      %s278 = smul.u32 16, %s20
      %p279 = scmp.lt.s32.totalorder %s278, 31
      %s280 = scalar_select %p279, %s278, 31
      %s281 = smul.addr %s280, 8
      %s282 = scalar_lea.vmem %s7, %s281
      %s283 = smul.u32 16, %s20
      %v284 = vld [vmem:[%s276] sm:$0xff]
      %v285 = vld [vmem:[%s276 + $0x8] sm:$0xff]
      %v286 = vld [vmem:[%s276 + $0x10] sm:$0xff]
      %v287 = vld [vmem:[%s276 + $0x18] sm:$0xff]
      %v288 = vld [vmem:[%s276 + $0x20] sm:$0xff]
      %v289 = vld [vmem:[%s276 + $0x28] sm:$0xff]
      %v290 = vld [vmem:[%s276 + $0x30] sm:$0xff]
      %v291 = vld [vmem:[%s276 + $0x38] sm:$0xff]
      %v292 = vld [vmem:[%s276 + $0x40] sm:$0xff]
      %v293 = vld [vmem:[%s276 + $0x48] sm:$0xff]
      %v294 = vld [vmem:[%s276 + $0x50] sm:$0xff]
      %v295 = vld [vmem:[%s276 + $0x58] sm:$0xff]
      %v296 = vld [vmem:[%s276 + $0x60] sm:$0xff]
      %v297 = vld [vmem:[%s276 + $0x68] sm:$0xff]
      %v298 = vld [vmem:[%s276 + $0x70] sm:$0xff]
      %v299 = vld [vmem:[%s276 + $0x78] sm:$0xff]
      %v300 = vld [vmem:[%s1] sm:$0x3]
      %v301 = vld [vmem:[%s2] sm:$0x1]
      %v303 = vlaneseq
      %v304 = vshrl.u32 %v303, 7
      %v305 = vsub.s32 0, %v304
      %v306 = vrot.slane %v301, %v305
      %vm308 = vcmask 15360
      %v310 = vsel %vm308, %v284, 0
      %v313 = vsel %vm308, %v285, 0
      %v316 = vsel %vm308, %v286, 0
      %v319 = vsel %vm308, %v287, 0
      %v322 = vsel %vm308, %v288, 0
      %v325 = vsel %vm308, %v289, 0
      %v328 = vsel %vm308, %v290, 0
      %v331 = vsel %vm308, %v291, 0
      %v334 = vsel %vm308, %v292, 0
      %v337 = vsel %vm308, %v293, 0
      %v340 = vsel %vm308, %v294, 0
      %v343 = vsel %vm308, %v295, 0
      %v346 = vsel %vm308, %v296, 0
      %v349 = vsel %vm308, %v297, 0
      %v352 = vsel %vm308, %v298, 0
      %v355 = vsel %vm308, %v299, 0
      %vm357 = vcmask 1041408
      %v359 = vsel %vm357, %v300, 0
      %361 = vmatprep.subr.mxu0 0.0
      %362 = vmatpush1.msra.mxu0 0.0
      %363 = vmatprep.subr.mxu0 0.0
      %364 = vmatpush1.msra.mxu0 0.0
      %365 = vmatprep.subr.mxu0 0.0
      %366 = vmatpush1.msra.mxu0 0.0
      %367 = vmatprep.subr.mxu0 0.0
      %368 = vmatpush1.msra.mxu0 0.0
      %369 = vmatprep.subr.mxu0 0.0
      %370 = vmatpush1.msra.mxu0 0.0
      %371 = vmatprep.subr.mxu0 0.0
      %372 = vmatpush1.msra.mxu0 0.0
      %373 = vmatprep.subr.mxu0 0.0
      %374 = vmatpush1.msra.mxu0 0.0
      %375 = vmatprep.subr.mxu0 0.0
      %376 = vmatpush1.msra.mxu0 0.0
      %377 = vmatprep.subr.mxu0 0.0
      %378 = vmatpush1.msra.mxu0 0.0
      %379 = vmatprep.subr.mxu0 0.0
      %380 = vmatpush1.msra.mxu0 0.0
      %381 = vmatprep.subr.mxu0 0.0
      %382 = vmatpush1.msra.mxu0 0.0
      %383 = vmatprep.subr.mxu0 0.0
      %384 = vmatpush1.msra.mxu0 0.0
      %385 = vmatprep.subr.mxu0 0.0
      %386 = vmatpush1.msra.mxu0 0.0
      %387 = vmatprep.subr.mxu0 0.0
      %388 = vmatpush1.msra.mxu0 0.0
      %389 = vmatprep.subr.mxu0 0.0
      %390 = vmatpush1.msra.mxu0 0.0
      %391 = vmatprep.subr.mxu0 0.0
      %392 = vmatpush1.msra.mxu0 %v359
      %393 = vmatprep.subr.mxu0 0.0
      %394 = vmatpush2.msra.mxu0 0.0
      %395 = vmatprep.subr.mxu0 0.0
      %396 = vmatpush2.msra.mxu0 0.0
      %397 = vmatprep.subr.mxu0 0.0
      %398 = vmatpush2.msra.mxu0 0.0
      %399 = vmatprep.subr.mxu0 0.0
      %400 = vmatpush2.msra.mxu0 0.0
      %401 = vmatprep.subr.mxu0 0.0
      %402 = vmatpush2.msra.mxu0 0.0
      %403 = vmatprep.subr.mxu0 0.0
      %404 = vmatpush2.msra.mxu0 0.0
      %405 = vmatprep.subr.mxu0 0.0
      %406 = vmatpush2.msra.mxu0 0.0
      %407 = vmatprep.subr.mxu0 0.0
      %408 = vmatpush2.msra.mxu0 0.0
      %409 = vmatprep.subr.mxu0 0.0
      %410 = vmatpush2.msra.mxu0 0.0
      %411 = vmatprep.subr.mxu0 0.0
      %412 = vmatpush2.msra.mxu0 0.0
      %413 = vmatprep.subr.mxu0 0.0
      %414 = vmatpush2.msra.mxu0 0.0
      %415 = vmatprep.subr.mxu0 0.0
      %416 = vmatpush2.msra.mxu0 0.0
      %417 = vmatprep.subr.mxu0 0.0
      %418 = vmatpush2.msra.mxu0 0.0
      %419 = vmatprep.subr.mxu0 0.0
      %420 = vmatpush2.msra.mxu0 0.0
      %421 = vmatprep.subr.mxu0 0.0
      %422 = vmatpush2.msra.mxu0 0.0
      %423 = vmatprep.subr.mxu0 0.0
      %424 = vmatpush2.msra.mxu0 0.0
      %425 = vmatprep.mubr.f32.mxu0 0.0
      %426 = vmatmul.mubr.f32.gmra.mxu0 %v310
      %v427 = vpop.f32.mrf.mxu0
      %v428 = vadd.f32 %v306, %v427
      %v429 = vpop.f32.mrf.mxu0
      %430 = vmatprep.mubr.f32.mxu0 0.0
      %431 = vmatmul.mubr.f32.gmra.mxu0 %v313
      %v432 = vpop.f32.mrf.mxu0
      %v433 = vadd.f32 %v306, %v432
      %v434 = vpop.f32.mrf.mxu0
      %435 = vmatprep.mubr.f32.mxu0 0.0
      %436 = vmatmul.mubr.f32.gmra.mxu0 %v316
      %v437 = vpop.f32.mrf.mxu0
      %v438 = vadd.f32 %v306, %v437
      %v439 = vpop.f32.mrf.mxu0
      %440 = vmatprep.mubr.f32.mxu0 0.0
      %441 = vmatmul.mubr.f32.gmra.mxu0 %v319
      %v442 = vpop.f32.mrf.mxu0
      %v443 = vadd.f32 %v306, %v442
      %v444 = vpop.f32.mrf.mxu0
      %445 = vmatprep.mubr.f32.mxu0 0.0
      %446 = vmatmul.mubr.f32.gmra.mxu0 %v322
      %v447 = vpop.f32.mrf.mxu0
      %v448 = vadd.f32 %v306, %v447
      %v449 = vpop.f32.mrf.mxu0
      %450 = vmatprep.mubr.f32.mxu0 0.0
      %451 = vmatmul.mubr.f32.gmra.mxu0 %v325
      %v452 = vpop.f32.mrf.mxu0
      %v453 = vadd.f32 %v306, %v452
      %v454 = vpop.f32.mrf.mxu0
      %455 = vmatprep.mubr.f32.mxu0 0.0
      %456 = vmatmul.mubr.f32.gmra.mxu0 %v328
      %v457 = vpop.f32.mrf.mxu0
      %v458 = vadd.f32 %v306, %v457
      %v459 = vpop.f32.mrf.mxu0
      %460 = vmatprep.mubr.f32.mxu0 0.0
      %461 = vmatmul.mubr.f32.gmra.mxu0 %v331
      %v462 = vpop.f32.mrf.mxu0
      %v463 = vadd.f32 %v306, %v462
      %v464 = vpop.f32.mrf.mxu0
      %465 = vmatprep.mubr.f32.mxu0 0.0
      %466 = vmatmul.mubr.f32.gmra.mxu0 %v334
      %v467 = vpop.f32.mrf.mxu0
      %v468 = vadd.f32 %v306, %v467
      %v469 = vpop.f32.mrf.mxu0
      %470 = vmatprep.mubr.f32.mxu0 0.0
      %471 = vmatmul.mubr.f32.gmra.mxu0 %v337
      %v472 = vpop.f32.mrf.mxu0
      %v473 = vadd.f32 %v306, %v472
      %v474 = vpop.f32.mrf.mxu0
      %475 = vmatprep.mubr.f32.mxu0 0.0
      %476 = vmatmul.mubr.f32.gmra.mxu0 %v340
      %v477 = vpop.f32.mrf.mxu0
      %v478 = vadd.f32 %v306, %v477
      %v479 = vpop.f32.mrf.mxu0
      %480 = vmatprep.mubr.f32.mxu0 0.0
      %481 = vmatmul.mubr.f32.gmra.mxu0 %v343
      %v482 = vpop.f32.mrf.mxu0
      %v483 = vadd.f32 %v306, %v482
      %v484 = vpop.f32.mrf.mxu0
      %485 = vmatprep.mubr.f32.mxu0 0.0
      %486 = vmatmul.mubr.f32.gmra.mxu0 %v346
      %v487 = vpop.f32.mrf.mxu0
      %v488 = vadd.f32 %v306, %v487
      %v489 = vpop.f32.mrf.mxu0
      %490 = vmatprep.mubr.f32.mxu0 0.0
      %491 = vmatmul.mubr.f32.gmra.mxu0 %v349
      %v492 = vpop.f32.mrf.mxu0
      %v493 = vadd.f32 %v306, %v492
      %v494 = vpop.f32.mrf.mxu0
      %495 = vmatprep.mubr.f32.mxu0 0.0
      %496 = vmatmul.mubr.f32.gmra.mxu0 %v352
      %v497 = vpop.f32.mrf.mxu0
      %v498 = vadd.f32 %v306, %v497
      %v499 = vpop.f32.mrf.mxu0
      %500 = vmatprep.mubr.f32.mxu0 0.0
      %501 = vmatmul.mubr.f32.gmra.mxu0 %v355
      %v502 = vpop.f32.mrf.mxu0
      %v503 = vadd.f32 %v306, %v502
      %v504 = vpop.f32.mrf.mxu0
      %505 = vdwg.mxu0
      %v506 = vtanh.pop %v428
      %v507 = vtanh.pop %v433
      %v508 = vtanh.pop %v438
      %v509 = vtanh.pop %v443
      %v510 = vtanh.pop %v448
      %v511 = vtanh.pop %v453
      %v512 = vtanh.pop %v458
      %v513 = vtanh.pop %v463
      %v514 = vtanh.pop %v468
      %v515 = vtanh.pop %v473
      %v516 = vtanh.pop %v478
      %v517 = vtanh.pop %v483
      %v518 = vtanh.pop %v488
      %v519 = vtanh.pop %v493
      %v520 = vtanh.pop %v498
      %v521 = vtanh.pop %v503
      %v522 = vld [vmem:[%s3] sm:$0xff]
      %v523 = vld [vmem:[%s3 + $0x8] sm:$0xff]
      %v524 = vld [vmem:[%s3 + $0x10] sm:$0xff]
      %v525 = vld [vmem:[%s3 + $0x18] sm:$0xff]
      %v526 = vld [vmem:[%s4] sm:$0x1]
      %v528 = vlaneseq
      %v529 = vshrl.u32 %v528, 7
      %v530 = vsub.s32 0, %v529
      %v531 = vrot.slane %v526, %v530
      %vm533 = vcmask 261120
      %v535 = vsel %vm533, %v506, 0
      %v538 = vsel %vm533, %v507, 0
      %v541 = vsel %vm533, %v508, 0
      %v544 = vsel %vm533, %v509, 0
      %v547 = vsel %vm533, %v510, 0
      %v550 = vsel %vm533, %v511, 0
      %v553 = vsel %vm533, %v512, 0
      %v556 = vsel %vm533, %v513, 0
      %v559 = vsel %vm533, %v514, 0
      %v562 = vsel %vm533, %v515, 0
      %v565 = vsel %vm533, %v516, 0
      %v568 = vsel %vm533, %v517, 0
      %v571 = vsel %vm533, %v518, 0
      %v574 = vsel %vm533, %v519, 0
      %v577 = vsel %vm533, %v520, 0
      %v580 = vsel %vm533, %v521, 0
      %582 = vmatprep.subr.mxu0 0.0
      %583 = vmatpush1.msra.mxu0 0.0
      %584 = vmatprep.subr.mxu0 0.0
      %585 = vmatpush1.msra.mxu0 0.0
      %586 = vmatprep.subr.mxu0 0.0
      %587 = vmatpush1.msra.mxu0 0.0
      %588 = vmatprep.subr.mxu0 0.0
      %589 = vmatpush1.msra.mxu0 0.0
      %590 = vmatprep.subr.mxu0 0.0
      %591 = vmatpush1.msra.mxu0 0.0
      %592 = vmatprep.subr.mxu0 0.0
      %593 = vmatpush1.msra.mxu0 0.0
      %594 = vmatprep.subr.mxu0 0.0
      %595 = vmatpush1.msra.mxu0 0.0
      %596 = vmatprep.subr.mxu0 0.0
      %597 = vmatpush1.msra.mxu0 0.0
      %598 = vmatprep.subr.mxu0 0.0
      %599 = vmatpush1.msra.mxu0 0.0
      %600 = vmatprep.subr.mxu0 0.0
      %601 = vmatpush1.msra.mxu0 0.0
      %602 = vmatprep.subr.mxu0 0.0
      %603 = vmatpush1.msra.mxu0 0.0
      %604 = vmatprep.subr.mxu0 0.0
      %605 = vmatpush1.msra.mxu0 0.0
      %606 = vmatprep.subr.mxu0 0.0
      %607 = vmatpush1.msra.mxu0 %v525
      %608 = vmatprep.subr.mxu0 0.0
      %609 = vmatpush1.msra.mxu0 %v524
      %610 = vmatprep.subr.mxu0 0.0
      %611 = vmatpush1.msra.mxu0 %v523
      %612 = vmatprep.subr.mxu0 0.0
      %613 = vmatpush1.msra.mxu0 %v522
      %614 = vmatprep.subr.mxu0 0.0
      %615 = vmatpush2.msra.mxu0 0.0
      %616 = vmatprep.subr.mxu0 0.0
      %617 = vmatpush2.msra.mxu0 0.0
      %618 = vmatprep.subr.mxu0 0.0
      %619 = vmatpush2.msra.mxu0 0.0
      %620 = vmatprep.subr.mxu0 0.0
      %621 = vmatpush2.msra.mxu0 0.0
      %622 = vmatprep.subr.mxu0 0.0
      %623 = vmatpush2.msra.mxu0 0.0
      %624 = vmatprep.subr.mxu0 0.0
      %625 = vmatpush2.msra.mxu0 0.0
      %626 = vmatprep.subr.mxu0 0.0
      %627 = vmatpush2.msra.mxu0 0.0
      %628 = vmatprep.subr.mxu0 0.0
      %629 = vmatpush2.msra.mxu0 0.0
      %630 = vmatprep.subr.mxu0 0.0
      %631 = vmatpush2.msra.mxu0 0.0
      %632 = vmatprep.subr.mxu0 0.0
      %633 = vmatpush2.msra.mxu0 0.0
      %634 = vmatprep.subr.mxu0 0.0
      %635 = vmatpush2.msra.mxu0 0.0
      %636 = vmatprep.subr.mxu0 0.0
      %637 = vmatpush2.msra.mxu0 0.0
      %638 = vmatprep.subr.mxu0 0.0
      %639 = vmatpush2.msra.mxu0 0.0
      %640 = vmatprep.subr.mxu0 0.0
      %641 = vmatpush2.msra.mxu0 0.0
      %642 = vmatprep.subr.mxu0 0.0
      %643 = vmatpush2.msra.mxu0 0.0
      %644 = vmatprep.subr.mxu0 0.0
      %645 = vmatpush2.msra.mxu0 0.0
      %646 = vmatprep.mubr.f32.mxu0 0.0
      %647 = vmatmul.mubr.f32.gmra.mxu0 %v535
      %v648 = vpop.f32.mrf.mxu0
      %v649 = vadd.f32 %v531, %v648
      %v650 = vpop.f32.mrf.mxu0
      %651 = vmatprep.mubr.f32.mxu0 0.0
      %652 = vmatmul.mubr.f32.gmra.mxu0 %v538
      %v653 = vpop.f32.mrf.mxu0
      %v654 = vadd.f32 %v531, %v653
      %v655 = vpop.f32.mrf.mxu0
      %656 = vmatprep.mubr.f32.mxu0 0.0
      %657 = vmatmul.mubr.f32.gmra.mxu0 %v541
      %v658 = vpop.f32.mrf.mxu0
      %v659 = vadd.f32 %v531, %v658
      %v660 = vpop.f32.mrf.mxu0
      %661 = vmatprep.mubr.f32.mxu0 0.0
      %662 = vmatmul.mubr.f32.gmra.mxu0 %v544
      %v663 = vpop.f32.mrf.mxu0
      %v664 = vadd.f32 %v531, %v663
      %v665 = vpop.f32.mrf.mxu0
      %666 = vmatprep.mubr.f32.mxu0 0.0
      %667 = vmatmul.mubr.f32.gmra.mxu0 %v547
      %v668 = vpop.f32.mrf.mxu0
      %v669 = vadd.f32 %v531, %v668
      %v670 = vpop.f32.mrf.mxu0
      %671 = vmatprep.mubr.f32.mxu0 0.0
      %672 = vmatmul.mubr.f32.gmra.mxu0 %v550
      %v673 = vpop.f32.mrf.mxu0
      %v674 = vadd.f32 %v531, %v673
      %v675 = vpop.f32.mrf.mxu0
      %676 = vmatprep.mubr.f32.mxu0 0.0
      %677 = vmatmul.mubr.f32.gmra.mxu0 %v553
      %v678 = vpop.f32.mrf.mxu0
      %v679 = vadd.f32 %v531, %v678
      %v680 = vpop.f32.mrf.mxu0
      %681 = vmatprep.mubr.f32.mxu0 0.0
      %682 = vmatmul.mubr.f32.gmra.mxu0 %v556
      %v683 = vpop.f32.mrf.mxu0
      %v684 = vadd.f32 %v531, %v683
      %v685 = vpop.f32.mrf.mxu0
      %686 = vmatprep.mubr.f32.mxu0 0.0
      %687 = vmatmul.mubr.f32.gmra.mxu0 %v559
      %v688 = vpop.f32.mrf.mxu0
      %v689 = vadd.f32 %v531, %v688
      %v690 = vpop.f32.mrf.mxu0
      %691 = vmatprep.mubr.f32.mxu0 0.0
      %692 = vmatmul.mubr.f32.gmra.mxu0 %v562
      %v693 = vpop.f32.mrf.mxu0
      %v694 = vadd.f32 %v531, %v693
      %v695 = vpop.f32.mrf.mxu0
      %696 = vmatprep.mubr.f32.mxu0 0.0
      %697 = vmatmul.mubr.f32.gmra.mxu0 %v565
      %v698 = vpop.f32.mrf.mxu0
      %v699 = vadd.f32 %v531, %v698
      %v700 = vpop.f32.mrf.mxu0
      %701 = vmatprep.mubr.f32.mxu0 0.0
      %702 = vmatmul.mubr.f32.gmra.mxu0 %v568
      %v703 = vpop.f32.mrf.mxu0
      %v704 = vadd.f32 %v531, %v703
      %v705 = vpop.f32.mrf.mxu0
      %706 = vmatprep.mubr.f32.mxu0 0.0
      %707 = vmatmul.mubr.f32.gmra.mxu0 %v571
      %v708 = vpop.f32.mrf.mxu0
      %v709 = vadd.f32 %v531, %v708
      %v710 = vpop.f32.mrf.mxu0
      %711 = vmatprep.mubr.f32.mxu0 0.0
      %712 = vmatmul.mubr.f32.gmra.mxu0 %v574
      %v713 = vpop.f32.mrf.mxu0
      %v714 = vadd.f32 %v531, %v713
      %v715 = vpop.f32.mrf.mxu0
      %716 = vmatprep.mubr.f32.mxu0 0.0
      %717 = vmatmul.mubr.f32.gmra.mxu0 %v577
      %v718 = vpop.f32.mrf.mxu0
      %v719 = vadd.f32 %v531, %v718
      %v720 = vpop.f32.mrf.mxu0
      %721 = vmatprep.mubr.f32.mxu0 0.0
      %722 = vmatmul.mubr.f32.gmra.mxu0 %v580
      %v723 = vpop.f32.mrf.mxu0
      %v724 = vadd.f32 %v531, %v723
      %v725 = vpop.f32.mrf.mxu0
      %726 = vdwg.mxu0
      %v727 = vadd.f32 %v649, %v531
      %v728 = vadd.f32 %v654, %v531
      %v729 = vadd.f32 %v659, %v531
      %v730 = vadd.f32 %v664, %v531
      %v731 = vadd.f32 %v669, %v531
      %v732 = vadd.f32 %v674, %v531
      %v733 = vadd.f32 %v679, %v531
      %v734 = vadd.f32 %v684, %v531
      %v735 = vadd.f32 %v689, %v531
      %v736 = vadd.f32 %v694, %v531
      %v737 = vadd.f32 %v699, %v531
      %v738 = vadd.f32 %v704, %v531
      %v739 = vadd.f32 %v709, %v531
      %v740 = vadd.f32 %v714, %v531
      %v741 = vadd.f32 %v719, %v531
      %v742 = vadd.f32 %v724, %v531
      %v743 = vtanh.pop %v649
      %v744 = vtanh.pop %v654
      %v745 = vtanh.pop %v659
      %v746 = vtanh.pop %v664
      %v747 = vtanh.pop %v669
      %v748 = vtanh.pop %v674
      %v749 = vtanh.pop %v679
      %v750 = vtanh.pop %v684
      %v751 = vtanh.pop %v689
      %v752 = vtanh.pop %v694
      %v753 = vtanh.pop %v699
      %v754 = vtanh.pop %v704
      %v755 = vtanh.pop %v709
      %v756 = vtanh.pop %v714
      %v757 = vtanh.pop %v719
      %v758 = vtanh.pop %v724
      %v760 = vsel %vm533, %v743, 0
      %v763 = vsel %vm533, %v744, 0
      %v766 = vsel %vm533, %v745, 0
      %v769 = vsel %vm533, %v746, 0
      %v772 = vsel %vm533, %v747, 0
      %v775 = vsel %vm533, %v748, 0
      %v778 = vsel %vm533, %v749, 0
      %v781 = vsel %vm533, %v750, 0
      %v784 = vsel %vm533, %v751, 0
      %v787 = vsel %vm533, %v752, 0
      %v790 = vsel %vm533, %v753, 0
      %v793 = vsel %vm533, %v754, 0
      %v796 = vsel %vm533, %v755, 0
      %v799 = vsel %vm533, %v756, 0
      %v802 = vsel %vm533, %v757, 0
      %v805 = vsel %vm533, %v758, 0
      %807 = vmatprep.subr.mxu0 0.0
      %808 = vmatpush1.msra.mxu0 0.0
      %809 = vmatprep.subr.mxu0 0.0
      %810 = vmatpush1.msra.mxu0 0.0
      %811 = vmatprep.subr.mxu0 0.0
      %812 = vmatpush1.msra.mxu0 0.0
      %813 = vmatprep.subr.mxu0 0.0
      %814 = vmatpush1.msra.mxu0 0.0
      %815 = vmatprep.subr.mxu0 0.0
      %816 = vmatpush1.msra.mxu0 0.0
      %817 = vmatprep.subr.mxu0 0.0
      %818 = vmatpush1.msra.mxu0 0.0
      %819 = vmatprep.subr.mxu0 0.0
      %820 = vmatpush1.msra.mxu0 0.0
      %821 = vmatprep.subr.mxu0 0.0
      %822 = vmatpush1.msra.mxu0 0.0
      %823 = vmatprep.subr.mxu0 0.0
      %824 = vmatpush1.msra.mxu0 0.0
      %825 = vmatprep.subr.mxu0 0.0
      %826 = vmatpush1.msra.mxu0 0.0
      %827 = vmatprep.subr.mxu0 0.0
      %828 = vmatpush1.msra.mxu0 0.0
      %829 = vmatprep.subr.mxu0 0.0
      %830 = vmatpush1.msra.mxu0 0.0
      %831 = vmatprep.subr.mxu0 0.0
      %832 = vmatpush1.msra.mxu0 %v525
      %833 = vmatprep.subr.mxu0 0.0
      %834 = vmatpush1.msra.mxu0 %v524
      %835 = vmatprep.subr.mxu0 0.0
      %836 = vmatpush1.msra.mxu0 %v523
      %837 = vmatprep.subr.mxu0 0.0
      %838 = vmatpush1.msra.mxu0 %v522
      %839 = vmatprep.subr.mxu0 0.0
      %840 = vmatpush2.msra.mxu0 0.0
      %841 = vmatprep.subr.mxu0 0.0
      %842 = vmatpush2.msra.mxu0 0.0
      %843 = vmatprep.subr.mxu0 0.0
      %844 = vmatpush2.msra.mxu0 0.0
      %845 = vmatprep.subr.mxu0 0.0
      %846 = vmatpush2.msra.mxu0 0.0
      %847 = vmatprep.subr.mxu0 0.0
      %848 = vmatpush2.msra.mxu0 0.0
      %849 = vmatprep.subr.mxu0 0.0
      %850 = vmatpush2.msra.mxu0 0.0
      %851 = vmatprep.subr.mxu0 0.0
      %852 = vmatpush2.msra.mxu0 0.0
      %853 = vmatprep.subr.mxu0 0.0
      %854 = vmatpush2.msra.mxu0 0.0
      %855 = vmatprep.subr.mxu0 0.0
      %856 = vmatpush2.msra.mxu0 0.0
      %857 = vmatprep.subr.mxu0 0.0
      %858 = vmatpush2.msra.mxu0 0.0
      %859 = vmatprep.subr.mxu0 0.0
      %860 = vmatpush2.msra.mxu0 0.0
      %861 = vmatprep.subr.mxu0 0.0
      %862 = vmatpush2.msra.mxu0 0.0
      %863 = vmatprep.subr.mxu0 0.0
      %864 = vmatpush2.msra.mxu0 0.0
      %865 = vmatprep.subr.mxu0 0.0
      %866 = vmatpush2.msra.mxu0 0.0
      %867 = vmatprep.subr.mxu0 0.0
      %868 = vmatpush2.msra.mxu0 0.0
      %869 = vmatprep.subr.mxu0 0.0
      %870 = vmatpush2.msra.mxu0 0.0
      %871 = vmatprep.mubr.f32.mxu0 0.0
      %872 = vmatmul.mubr.f32.gmra.mxu0 %v760
      %v873 = vpop.f32.mrf.mxu0
      %v874 = vadd.f32 0.0, %v873
      %v875 = vpop.f32.mrf.mxu0
      %876 = vmatprep.mubr.f32.mxu0 0.0
      %877 = vmatmul.mubr.f32.gmra.mxu0 %v763
      %v878 = vpop.f32.mrf.mxu0
      %v879 = vadd.f32 0.0, %v878
      %v880 = vpop.f32.mrf.mxu0
      %881 = vmatprep.mubr.f32.mxu0 0.0
      %882 = vmatmul.mubr.f32.gmra.mxu0 %v766
      %v883 = vpop.f32.mrf.mxu0
      %v884 = vadd.f32 0.0, %v883
      %v885 = vpop.f32.mrf.mxu0
      %886 = vmatprep.mubr.f32.mxu0 0.0
      %887 = vmatmul.mubr.f32.gmra.mxu0 %v769
      %v888 = vpop.f32.mrf.mxu0
      %v889 = vadd.f32 0.0, %v888
      %v890 = vpop.f32.mrf.mxu0
      %891 = vmatprep.mubr.f32.mxu0 0.0
      %892 = vmatmul.mubr.f32.gmra.mxu0 %v772
      %v893 = vpop.f32.mrf.mxu0
      %v894 = vadd.f32 0.0, %v893
      %v895 = vpop.f32.mrf.mxu0
      %896 = vmatprep.mubr.f32.mxu0 0.0
      %897 = vmatmul.mubr.f32.gmra.mxu0 %v775
      %v898 = vpop.f32.mrf.mxu0
      %v899 = vadd.f32 0.0, %v898
      %v900 = vpop.f32.mrf.mxu0
      %901 = vmatprep.mubr.f32.mxu0 0.0
      %902 = vmatmul.mubr.f32.gmra.mxu0 %v778
      %v903 = vpop.f32.mrf.mxu0
      %v904 = vadd.f32 0.0, %v903
      %v905 = vpop.f32.mrf.mxu0
      %906 = vmatprep.mubr.f32.mxu0 0.0
      %907 = vmatmul.mubr.f32.gmra.mxu0 %v781
      %v908 = vpop.f32.mrf.mxu0
      %v909 = vadd.f32 0.0, %v908
      %v910 = vpop.f32.mrf.mxu0
      %911 = vmatprep.mubr.f32.mxu0 0.0
      %912 = vmatmul.mubr.f32.gmra.mxu0 %v784
      %v913 = vpop.f32.mrf.mxu0
      %v914 = vadd.f32 0.0, %v913
      %v915 = vpop.f32.mrf.mxu0
      %916 = vmatprep.mubr.f32.mxu0 0.0
      %917 = vmatmul.mubr.f32.gmra.mxu0 %v787
      %v918 = vpop.f32.mrf.mxu0
      %v919 = vadd.f32 0.0, %v918
      %v920 = vpop.f32.mrf.mxu0
      %921 = vmatprep.mubr.f32.mxu0 0.0
      %922 = vmatmul.mubr.f32.gmra.mxu0 %v790
      %v923 = vpop.f32.mrf.mxu0
      %v924 = vadd.f32 0.0, %v923
      %v925 = vpop.f32.mrf.mxu0
      %926 = vmatprep.mubr.f32.mxu0 0.0
      %927 = vmatmul.mubr.f32.gmra.mxu0 %v793
      %v928 = vpop.f32.mrf.mxu0
      %v929 = vadd.f32 0.0, %v928
      %v930 = vpop.f32.mrf.mxu0
      %931 = vmatprep.mubr.f32.mxu0 0.0
      %932 = vmatmul.mubr.f32.gmra.mxu0 %v796
      %v933 = vpop.f32.mrf.mxu0
      %v934 = vadd.f32 0.0, %v933
      %v935 = vpop.f32.mrf.mxu0
      %936 = vmatprep.mubr.f32.mxu0 0.0
      %937 = vmatmul.mubr.f32.gmra.mxu0 %v799
      %v938 = vpop.f32.mrf.mxu0
      %v939 = vadd.f32 0.0, %v938
      %v940 = vpop.f32.mrf.mxu0
      %941 = vmatprep.mubr.f32.mxu0 0.0
      %942 = vmatmul.mubr.f32.gmra.mxu0 %v802
      %v943 = vpop.f32.mrf.mxu0
      %v944 = vadd.f32 0.0, %v943
      %v945 = vpop.f32.mrf.mxu0
      %946 = vmatprep.mubr.f32.mxu0 0.0
      %947 = vmatmul.mubr.f32.gmra.mxu0 %v805
      %v948 = vpop.f32.mrf.mxu0
      %v949 = vadd.f32 0.0, %v948
      %v950 = vpop.f32.mrf.mxu0
      %951 = vdwg.mxu0
      %v952 = vadd.f32 %v727, %v874
      %v953 = vadd.f32 %v728, %v879
      %v954 = vadd.f32 %v729, %v884
      %v955 = vadd.f32 %v730, %v889
      %v956 = vadd.f32 %v731, %v894
      %v957 = vadd.f32 %v732, %v899
      %v958 = vadd.f32 %v733, %v904
      %v959 = vadd.f32 %v734, %v909
      %v960 = vadd.f32 %v735, %v914
      %v961 = vadd.f32 %v736, %v919
      %v962 = vadd.f32 %v737, %v924
      %v963 = vadd.f32 %v738, %v929
      %v964 = vadd.f32 %v739, %v934
      %v965 = vadd.f32 %v740, %v939
      %v966 = vadd.f32 %v741, %v944
      %v967 = vadd.f32 %v742, %v949
      %v968 = vtanh.pop %v952
      %v969 = vtanh.pop %v953
      %v970 = vtanh.pop %v954
      %v971 = vtanh.pop %v955
      %v972 = vtanh.pop %v956
      %v973 = vtanh.pop %v957
      %v974 = vtanh.pop %v958
      %v975 = vtanh.pop %v959
      %v976 = vtanh.pop %v960
      %v977 = vtanh.pop %v961
      %v978 = vtanh.pop %v962
      %v979 = vtanh.pop %v963
      %v980 = vtanh.pop %v964
      %v981 = vtanh.pop %v965
      %v982 = vtanh.pop %v966
      %v983 = vtanh.pop %v967
      %v985 = vsel %vm533, %v968, 0
      %v988 = vsel %vm533, %v969, 0
      %v991 = vsel %vm533, %v970, 0
      %v994 = vsel %vm533, %v971, 0
      %v997 = vsel %vm533, %v972, 0
      %v1000 = vsel %vm533, %v973, 0
      %v1003 = vsel %vm533, %v974, 0
      %v1006 = vsel %vm533, %v975, 0
      %v1009 = vsel %vm533, %v976, 0
      %v1012 = vsel %vm533, %v977, 0
      %v1015 = vsel %vm533, %v978, 0
      %v1018 = vsel %vm533, %v979, 0
      %v1021 = vsel %vm533, %v980, 0
      %v1024 = vsel %vm533, %v981, 0
      %v1027 = vsel %vm533, %v982, 0
      %v1030 = vsel %vm533, %v983, 0
      %1032 = vmatprep.subr.mxu0 0.0
      %1033 = vmatpush1.msra.mxu0 0.0
      %1034 = vmatprep.subr.mxu0 0.0
      %1035 = vmatpush1.msra.mxu0 0.0
      %1036 = vmatprep.subr.mxu0 0.0
      %1037 = vmatpush1.msra.mxu0 0.0
      %1038 = vmatprep.subr.mxu0 0.0
      %1039 = vmatpush1.msra.mxu0 0.0
      %1040 = vmatprep.subr.mxu0 0.0
      %1041 = vmatpush1.msra.mxu0 0.0
      %1042 = vmatprep.subr.mxu0 0.0
      %1043 = vmatpush1.msra.mxu0 0.0
      %1044 = vmatprep.subr.mxu0 0.0
      %1045 = vmatpush1.msra.mxu0 0.0
      %1046 = vmatprep.subr.mxu0 0.0
      %1047 = vmatpush1.msra.mxu0 0.0
      %1048 = vmatprep.subr.mxu0 0.0
      %1049 = vmatpush1.msra.mxu0 0.0
      %1050 = vmatprep.subr.mxu0 0.0
      %1051 = vmatpush1.msra.mxu0 0.0
      %1052 = vmatprep.subr.mxu0 0.0
      %1053 = vmatpush1.msra.mxu0 0.0
      %1054 = vmatprep.subr.mxu0 0.0
      %1055 = vmatpush1.msra.mxu0 0.0
      %1056 = vmatprep.subr.mxu0 0.0
      %1057 = vmatpush1.msra.mxu0 %v525
      %1058 = vmatprep.subr.mxu0 0.0
      %1059 = vmatpush1.msra.mxu0 %v524
      %1060 = vmatprep.subr.mxu0 0.0
      %1061 = vmatpush1.msra.mxu0 %v523
      %1062 = vmatprep.subr.mxu0 0.0
      %1063 = vmatpush1.msra.mxu0 %v522
      %1064 = vmatprep.subr.mxu0 0.0
      %1065 = vmatpush2.msra.mxu0 0.0
      %1066 = vmatprep.subr.mxu0 0.0
      %1067 = vmatpush2.msra.mxu0 0.0
      %1068 = vmatprep.subr.mxu0 0.0
      %1069 = vmatpush2.msra.mxu0 0.0
      %1070 = vmatprep.subr.mxu0 0.0
      %1071 = vmatpush2.msra.mxu0 0.0
      %1072 = vmatprep.subr.mxu0 0.0
      %1073 = vmatpush2.msra.mxu0 0.0
      %1074 = vmatprep.subr.mxu0 0.0
      %1075 = vmatpush2.msra.mxu0 0.0
      %1076 = vmatprep.subr.mxu0 0.0
      %1077 = vmatpush2.msra.mxu0 0.0
      %1078 = vmatprep.subr.mxu0 0.0
      %1079 = vmatpush2.msra.mxu0 0.0
      %1080 = vmatprep.subr.mxu0 0.0
      %1081 = vmatpush2.msra.mxu0 0.0
      %1082 = vmatprep.subr.mxu0 0.0
      %1083 = vmatpush2.msra.mxu0 0.0
      %1084 = vmatprep.subr.mxu0 0.0
      %1085 = vmatpush2.msra.mxu0 0.0
      %1086 = vmatprep.subr.mxu0 0.0
      %1087 = vmatpush2.msra.mxu0 0.0
      %1088 = vmatprep.subr.mxu0 0.0
      %1089 = vmatpush2.msra.mxu0 0.0
      %1090 = vmatprep.subr.mxu0 0.0
      %1091 = vmatpush2.msra.mxu0 0.0
      %1092 = vmatprep.subr.mxu0 0.0
      %1093 = vmatpush2.msra.mxu0 0.0
      %1094 = vmatprep.subr.mxu0 0.0
      %1095 = vmatpush2.msra.mxu0 0.0
      %1096 = vmatprep.mubr.f32.mxu0 0.0
      %1097 = vmatmul.mubr.f32.gmra.mxu0 %v985
      %v1098 = vpop.f32.mrf.mxu0
      %v1099 = vadd.f32 0.0, %v1098
      %v1100 = vpop.f32.mrf.mxu0
      %1101 = vmatprep.mubr.f32.mxu0 0.0
      %1102 = vmatmul.mubr.f32.gmra.mxu0 %v988
      %v1103 = vpop.f32.mrf.mxu0
      %v1104 = vadd.f32 0.0, %v1103
      %v1105 = vpop.f32.mrf.mxu0
      %1106 = vmatprep.mubr.f32.mxu0 0.0
      %1107 = vmatmul.mubr.f32.gmra.mxu0 %v991
      %v1108 = vpop.f32.mrf.mxu0
      %v1109 = vadd.f32 0.0, %v1108
      %v1110 = vpop.f32.mrf.mxu0
      %1111 = vmatprep.mubr.f32.mxu0 0.0
      %1112 = vmatmul.mubr.f32.gmra.mxu0 %v994
      %v1113 = vpop.f32.mrf.mxu0
      %v1114 = vadd.f32 0.0, %v1113
      %v1115 = vpop.f32.mrf.mxu0
      %1116 = vmatprep.mubr.f32.mxu0 0.0
      %1117 = vmatmul.mubr.f32.gmra.mxu0 %v997
      %v1118 = vpop.f32.mrf.mxu0
      %v1119 = vadd.f32 0.0, %v1118
      %v1120 = vpop.f32.mrf.mxu0
      %1121 = vmatprep.mubr.f32.mxu0 0.0
      %1122 = vmatmul.mubr.f32.gmra.mxu0 %v1000
      %v1123 = vpop.f32.mrf.mxu0
      %v1124 = vadd.f32 0.0, %v1123
      %v1125 = vpop.f32.mrf.mxu0
      %1126 = vmatprep.mubr.f32.mxu0 0.0
      %1127 = vmatmul.mubr.f32.gmra.mxu0 %v1003
      %v1128 = vpop.f32.mrf.mxu0
      %v1129 = vadd.f32 0.0, %v1128
      %v1130 = vpop.f32.mrf.mxu0
      %1131 = vmatprep.mubr.f32.mxu0 0.0
      %1132 = vmatmul.mubr.f32.gmra.mxu0 %v1006
      %v1133 = vpop.f32.mrf.mxu0
      %v1134 = vadd.f32 0.0, %v1133
      %v1135 = vpop.f32.mrf.mxu0
      %1136 = vmatprep.mubr.f32.mxu0 0.0
      %1137 = vmatmul.mubr.f32.gmra.mxu0 %v1009
      %v1138 = vpop.f32.mrf.mxu0
      %v1139 = vadd.f32 0.0, %v1138
      %v1140 = vpop.f32.mrf.mxu0
      %1141 = vmatprep.mubr.f32.mxu0 0.0
      %1142 = vmatmul.mubr.f32.gmra.mxu0 %v1012
      %v1143 = vpop.f32.mrf.mxu0
      %v1144 = vadd.f32 0.0, %v1143
      %v1145 = vpop.f32.mrf.mxu0
      %1146 = vmatprep.mubr.f32.mxu0 0.0
      %1147 = vmatmul.mubr.f32.gmra.mxu0 %v1015
      %v1148 = vpop.f32.mrf.mxu0
      %v1149 = vadd.f32 0.0, %v1148
      %v1150 = vpop.f32.mrf.mxu0
      %1151 = vmatprep.mubr.f32.mxu0 0.0
      %1152 = vmatmul.mubr.f32.gmra.mxu0 %v1018
      %v1153 = vpop.f32.mrf.mxu0
      %v1154 = vadd.f32 0.0, %v1153
      %v1155 = vpop.f32.mrf.mxu0
      %1156 = vmatprep.mubr.f32.mxu0 0.0
      %1157 = vmatmul.mubr.f32.gmra.mxu0 %v1021
      %v1158 = vpop.f32.mrf.mxu0
      %v1159 = vadd.f32 0.0, %v1158
      %v1160 = vpop.f32.mrf.mxu0
      %1161 = vmatprep.mubr.f32.mxu0 0.0
      %1162 = vmatmul.mubr.f32.gmra.mxu0 %v1024
      %v1163 = vpop.f32.mrf.mxu0
      %v1164 = vadd.f32 0.0, %v1163
      %v1165 = vpop.f32.mrf.mxu0
      %1166 = vmatprep.mubr.f32.mxu0 0.0
      %1167 = vmatmul.mubr.f32.gmra.mxu0 %v1027
      %v1168 = vpop.f32.mrf.mxu0
      %v1169 = vadd.f32 0.0, %v1168
      %v1170 = vpop.f32.mrf.mxu0
      %1171 = vmatprep.mubr.f32.mxu0 0.0
      %1172 = vmatmul.mubr.f32.gmra.mxu0 %v1030
      %v1173 = vpop.f32.mrf.mxu0
      %v1174 = vadd.f32 0.0, %v1173
      %v1175 = vpop.f32.mrf.mxu0
      %1176 = vdwg.mxu0
      %v1177 = vadd.f32 %v727, %v1099
      %v1178 = vadd.f32 %v728, %v1104
      %v1179 = vadd.f32 %v729, %v1109
      %v1180 = vadd.f32 %v730, %v1114
      %v1181 = vadd.f32 %v731, %v1119
      %v1182 = vadd.f32 %v732, %v1124
      %v1183 = vadd.f32 %v733, %v1129
      %v1184 = vadd.f32 %v734, %v1134
      %v1185 = vadd.f32 %v735, %v1139
      %v1186 = vadd.f32 %v736, %v1144
      %v1187 = vadd.f32 %v737, %v1149
      %v1188 = vadd.f32 %v738, %v1154
      %v1189 = vadd.f32 %v739, %v1159
      %v1190 = vadd.f32 %v740, %v1164
      %v1191 = vadd.f32 %v741, %v1169
      %v1192 = vadd.f32 %v742, %v1174
      %v1193 = vtanh.pop %v1177
      %v1194 = vtanh.pop %v1178
      %v1195 = vtanh.pop %v1179
      %v1196 = vtanh.pop %v1180
      %v1197 = vtanh.pop %v1181
      %v1198 = vtanh.pop %v1182
      %v1199 = vtanh.pop %v1183
      %v1200 = vtanh.pop %v1184
      %v1201 = vtanh.pop %v1185
      %v1202 = vtanh.pop %v1186
      %v1203 = vtanh.pop %v1187
      %v1204 = vtanh.pop %v1188
      %v1205 = vtanh.pop %v1189
      %v1206 = vtanh.pop %v1190
      %v1207 = vtanh.pop %v1191
      %v1208 = vtanh.pop %v1192
      %v1210 = vsel %vm533, %v1193, 0
      %v1213 = vsel %vm533, %v1194, 0
      %v1216 = vsel %vm533, %v1195, 0
      %v1219 = vsel %vm533, %v1196, 0
      %v1222 = vsel %vm533, %v1197, 0
      %v1225 = vsel %vm533, %v1198, 0
      %v1228 = vsel %vm533, %v1199, 0
      %v1231 = vsel %vm533, %v1200, 0
      %v1234 = vsel %vm533, %v1201, 0
      %v1237 = vsel %vm533, %v1202, 0
      %v1240 = vsel %vm533, %v1203, 0
      %v1243 = vsel %vm533, %v1204, 0
      %v1246 = vsel %vm533, %v1205, 0
      %v1249 = vsel %vm533, %v1206, 0
      %v1252 = vsel %vm533, %v1207, 0
      %v1255 = vsel %vm533, %v1208, 0
      %1257 = vmatprep.subr.mxu0 0.0
      %1258 = vmatpush1.msra.mxu0 0.0
      %1259 = vmatprep.subr.mxu0 0.0
      %1260 = vmatpush1.msra.mxu0 0.0
      %1261 = vmatprep.subr.mxu0 0.0
      %1262 = vmatpush1.msra.mxu0 0.0
      %1263 = vmatprep.subr.mxu0 0.0
      %1264 = vmatpush1.msra.mxu0 0.0
      %1265 = vmatprep.subr.mxu0 0.0
      %1266 = vmatpush1.msra.mxu0 0.0
      %1267 = vmatprep.subr.mxu0 0.0
      %1268 = vmatpush1.msra.mxu0 0.0
      %1269 = vmatprep.subr.mxu0 0.0
      %1270 = vmatpush1.msra.mxu0 0.0
      %1271 = vmatprep.subr.mxu0 0.0
      %1272 = vmatpush1.msra.mxu0 0.0
      %1273 = vmatprep.subr.mxu0 0.0
      %1274 = vmatpush1.msra.mxu0 0.0
      %1275 = vmatprep.subr.mxu0 0.0
      %1276 = vmatpush1.msra.mxu0 0.0
      %1277 = vmatprep.subr.mxu0 0.0
      %1278 = vmatpush1.msra.mxu0 0.0
      %1279 = vmatprep.subr.mxu0 0.0
      %1280 = vmatpush1.msra.mxu0 0.0
      %1281 = vmatprep.subr.mxu0 0.0
      %1282 = vmatpush1.msra.mxu0 %v525
      %1283 = vmatprep.subr.mxu0 0.0
      %1284 = vmatpush1.msra.mxu0 %v524
      %1285 = vmatprep.subr.mxu0 0.0
      %1286 = vmatpush1.msra.mxu0 %v523
      %1287 = vmatprep.subr.mxu0 0.0
      %1288 = vmatpush1.msra.mxu0 %v522
      %1289 = vmatprep.subr.mxu0 0.0
      %1290 = vmatpush2.msra.mxu0 0.0
      %1291 = vmatprep.subr.mxu0 0.0
      %1292 = vmatpush2.msra.mxu0 0.0
      %1293 = vmatprep.subr.mxu0 0.0
      %1294 = vmatpush2.msra.mxu0 0.0
      %1295 = vmatprep.subr.mxu0 0.0
      %1296 = vmatpush2.msra.mxu0 0.0
      %1297 = vmatprep.subr.mxu0 0.0
      %1298 = vmatpush2.msra.mxu0 0.0
      %1299 = vmatprep.subr.mxu0 0.0
      %1300 = vmatpush2.msra.mxu0 0.0
      %1301 = vmatprep.subr.mxu0 0.0
      %1302 = vmatpush2.msra.mxu0 0.0
      %1303 = vmatprep.subr.mxu0 0.0
      %1304 = vmatpush2.msra.mxu0 0.0
      %1305 = vmatprep.subr.mxu0 0.0
      %1306 = vmatpush2.msra.mxu0 0.0
      %1307 = vmatprep.subr.mxu0 0.0
      %1308 = vmatpush2.msra.mxu0 0.0
      %1309 = vmatprep.subr.mxu0 0.0
      %1310 = vmatpush2.msra.mxu0 0.0
      %1311 = vmatprep.subr.mxu0 0.0
      %1312 = vmatpush2.msra.mxu0 0.0
      %1313 = vmatprep.subr.mxu0 0.0
      %1314 = vmatpush2.msra.mxu0 0.0
      %1315 = vmatprep.subr.mxu0 0.0
      %1316 = vmatpush2.msra.mxu0 0.0
      %1317 = vmatprep.subr.mxu0 0.0
      %1318 = vmatpush2.msra.mxu0 0.0
      %1319 = vmatprep.subr.mxu0 0.0
      %1320 = vmatpush2.msra.mxu0 0.0
      %1321 = vmatprep.mubr.f32.mxu0 0.0
      %1322 = vmatmul.mubr.f32.gmra.mxu0 %v1210
      %v1323 = vpop.f32.mrf.mxu0
      %v1324 = vadd.f32 0.0, %v1323
      %v1325 = vpop.f32.mrf.mxu0
      %1326 = vmatprep.mubr.f32.mxu0 0.0
      %1327 = vmatmul.mubr.f32.gmra.mxu0 %v1213
      %v1328 = vpop.f32.mrf.mxu0
      %v1329 = vadd.f32 0.0, %v1328
      %v1330 = vpop.f32.mrf.mxu0
      %1331 = vmatprep.mubr.f32.mxu0 0.0
      %1332 = vmatmul.mubr.f32.gmra.mxu0 %v1216
      %v1333 = vpop.f32.mrf.mxu0
      %v1334 = vadd.f32 0.0, %v1333
      %v1335 = vpop.f32.mrf.mxu0
      %1336 = vmatprep.mubr.f32.mxu0 0.0
      %1337 = vmatmul.mubr.f32.gmra.mxu0 %v1219
      %v1338 = vpop.f32.mrf.mxu0
      %v1339 = vadd.f32 0.0, %v1338
      %v1340 = vpop.f32.mrf.mxu0
      %1341 = vmatprep.mubr.f32.mxu0 0.0
      %1342 = vmatmul.mubr.f32.gmra.mxu0 %v1222
      %v1343 = vpop.f32.mrf.mxu0
      %v1344 = vadd.f32 0.0, %v1343
      %v1345 = vpop.f32.mrf.mxu0
      %1346 = vmatprep.mubr.f32.mxu0 0.0
      %1347 = vmatmul.mubr.f32.gmra.mxu0 %v1225
      %v1348 = vpop.f32.mrf.mxu0
      %v1349 = vadd.f32 0.0, %v1348
      %v1350 = vpop.f32.mrf.mxu0
      %1351 = vmatprep.mubr.f32.mxu0 0.0
      %1352 = vmatmul.mubr.f32.gmra.mxu0 %v1228
      %v1353 = vpop.f32.mrf.mxu0
      %v1354 = vadd.f32 0.0, %v1353
      %v1355 = vpop.f32.mrf.mxu0
      %1356 = vmatprep.mubr.f32.mxu0 0.0
      %1357 = vmatmul.mubr.f32.gmra.mxu0 %v1231
      %v1358 = vpop.f32.mrf.mxu0
      %v1359 = vadd.f32 0.0, %v1358
      %v1360 = vpop.f32.mrf.mxu0
      %1361 = vmatprep.mubr.f32.mxu0 0.0
      %1362 = vmatmul.mubr.f32.gmra.mxu0 %v1234
      %v1363 = vpop.f32.mrf.mxu0
      %v1364 = vadd.f32 0.0, %v1363
      %v1365 = vpop.f32.mrf.mxu0
      %1366 = vmatprep.mubr.f32.mxu0 0.0
      %1367 = vmatmul.mubr.f32.gmra.mxu0 %v1237
      %v1368 = vpop.f32.mrf.mxu0
      %v1369 = vadd.f32 0.0, %v1368
      %v1370 = vpop.f32.mrf.mxu0
      %1371 = vmatprep.mubr.f32.mxu0 0.0
      %1372 = vmatmul.mubr.f32.gmra.mxu0 %v1240
      %v1373 = vpop.f32.mrf.mxu0
      %v1374 = vadd.f32 0.0, %v1373
      %v1375 = vpop.f32.mrf.mxu0
      %1376 = vmatprep.mubr.f32.mxu0 0.0
      %1377 = vmatmul.mubr.f32.gmra.mxu0 %v1243
      %v1378 = vpop.f32.mrf.mxu0
      %v1379 = vadd.f32 0.0, %v1378
      %v1380 = vpop.f32.mrf.mxu0
      %1381 = vmatprep.mubr.f32.mxu0 0.0
      %1382 = vmatmul.mubr.f32.gmra.mxu0 %v1246
      %v1383 = vpop.f32.mrf.mxu0
      %v1384 = vadd.f32 0.0, %v1383
      %v1385 = vpop.f32.mrf.mxu0
      %1386 = vmatprep.mubr.f32.mxu0 0.0
      %1387 = vmatmul.mubr.f32.gmra.mxu0 %v1249
      %v1388 = vpop.f32.mrf.mxu0
      %v1389 = vadd.f32 0.0, %v1388
      %v1390 = vpop.f32.mrf.mxu0
      %1391 = vmatprep.mubr.f32.mxu0 0.0
      %1392 = vmatmul.mubr.f32.gmra.mxu0 %v1252
      %v1393 = vpop.f32.mrf.mxu0
      %v1394 = vadd.f32 0.0, %v1393
      %v1395 = vpop.f32.mrf.mxu0
      %1396 = vmatprep.mubr.f32.mxu0 0.0
      %1397 = vmatmul.mubr.f32.gmra.mxu0 %v1255
      %v1398 = vpop.f32.mrf.mxu0
      %v1399 = vadd.f32 0.0, %v1398
      %v1400 = vpop.f32.mrf.mxu0
      %1401 = vdwg.mxu0
      %v1402 = vadd.f32 %v727, %v1324
      %v1403 = vadd.f32 %v728, %v1329
      %v1404 = vadd.f32 %v729, %v1334
      %v1405 = vadd.f32 %v730, %v1339
      %v1406 = vadd.f32 %v731, %v1344
      %v1407 = vadd.f32 %v732, %v1349
      %v1408 = vadd.f32 %v733, %v1354
      %v1409 = vadd.f32 %v734, %v1359
      %v1410 = vadd.f32 %v735, %v1364
      %v1411 = vadd.f32 %v736, %v1369
      %v1412 = vadd.f32 %v737, %v1374
      %v1413 = vadd.f32 %v738, %v1379
      %v1414 = vadd.f32 %v739, %v1384
      %v1415 = vadd.f32 %v740, %v1389
      %v1416 = vadd.f32 %v741, %v1394
      %v1417 = vadd.f32 %v742, %v1399
      %v1418 = vtanh.pop %v1402
      %v1419 = vtanh.pop %v1403
      %v1420 = vtanh.pop %v1404
      %v1421 = vtanh.pop %v1405
      %v1422 = vtanh.pop %v1406
      %v1423 = vtanh.pop %v1407
      %v1424 = vtanh.pop %v1408
      %v1425 = vtanh.pop %v1409
      %v1426 = vtanh.pop %v1410
      %v1427 = vtanh.pop %v1411
      %v1428 = vtanh.pop %v1412
      %v1429 = vtanh.pop %v1413
      %v1430 = vtanh.pop %v1414
      %v1431 = vtanh.pop %v1415
      %v1432 = vtanh.pop %v1416
      %v1433 = vtanh.pop %v1417
      %v1434 = vsub.f32 1.0, %v968
      %v1435 = vsub.f32 1.0, %v969
      %v1436 = vsub.f32 1.0, %v970
      %v1437 = vsub.f32 1.0, %v971
      %v1438 = vsub.f32 1.0, %v972
      %v1439 = vsub.f32 1.0, %v973
      %v1440 = vsub.f32 1.0, %v974
      %v1441 = vsub.f32 1.0, %v975
      %v1442 = vsub.f32 1.0, %v976
      %v1443 = vsub.f32 1.0, %v977
      %v1444 = vsub.f32 1.0, %v978
      %v1445 = vsub.f32 1.0, %v979
      %v1446 = vsub.f32 1.0, %v980
      %v1447 = vsub.f32 1.0, %v981
      %v1448 = vsub.f32 1.0, %v982
      %v1449 = vsub.f32 1.0, %v983
      %v1450 = vmul.f32 %v1434, %v1418
      %v1451 = vmul.f32 %v1435, %v1419
      %v1452 = vmul.f32 %v1436, %v1420
      %v1453 = vmul.f32 %v1437, %v1421
      %v1454 = vmul.f32 %v1438, %v1422
      %v1455 = vmul.f32 %v1439, %v1423
      %v1456 = vmul.f32 %v1440, %v1424
      %v1457 = vmul.f32 %v1441, %v1425
      %v1458 = vmul.f32 %v1442, %v1426
      %v1459 = vmul.f32 %v1443, %v1427
      %v1460 = vmul.f32 %v1444, %v1428
      %v1461 = vmul.f32 %v1445, %v1429
      %v1462 = vmul.f32 %v1446, %v1430
      %v1463 = vmul.f32 %v1447, %v1431
      %v1464 = vmul.f32 %v1448, %v1432
      %v1465 = vmul.f32 %v1449, %v1433
      %v1466 = vadd.f32 %v1450, %v743
      %v1467 = vadd.f32 %v1451, %v744
      %v1468 = vadd.f32 %v1452, %v745
      %v1469 = vadd.f32 %v1453, %v746
      %v1470 = vadd.f32 %v1454, %v747
      %v1471 = vadd.f32 %v1455, %v748
      %v1472 = vadd.f32 %v1456, %v749
      %v1473 = vadd.f32 %v1457, %v750
      %v1474 = vadd.f32 %v1458, %v751
      %v1475 = vadd.f32 %v1459, %v752
      %v1476 = vadd.f32 %v1460, %v753
      %v1477 = vadd.f32 %v1461, %v754
      %v1478 = vadd.f32 %v1462, %v755
      %v1479 = vadd.f32 %v1463, %v756
      %v1480 = vadd.f32 %v1464, %v757
      %v1481 = vadd.f32 %v1465, %v758
      %s1482 = scalar_lea.vmem %s3, 32
      %v1483 = vld [vmem:[%s1482] sm:$0xff]
      %v1484 = vld [vmem:[%s1482 + $0x8] sm:$0xff]
      %v1485 = vld [vmem:[%s1482 + $0x10] sm:$0xff]
      %v1486 = vld [vmem:[%s1482 + $0x18] sm:$0xff]
      %s1487 = scalar_lea.vmem %s4, 1
      %v1488 = vld [vmem:[%s1487] sm:$0x1]
      %v1490 = vlaneseq
      %v1491 = vshrl.u32 %v1490, 7
      %v1492 = vsub.s32 0, %v1491
      %v1493 = vrot.slane %v1488, %v1492
      %v1496 = vsel %vm533, %v1466, 0
      %v1499 = vsel %vm533, %v1467, 0
      %v1502 = vsel %vm533, %v1468, 0
      %v1505 = vsel %vm533, %v1469, 0
      %v1508 = vsel %vm533, %v1470, 0
      %v1511 = vsel %vm533, %v1471, 0
      %v1514 = vsel %vm533, %v1472, 0
      %v1517 = vsel %vm533, %v1473, 0
      %v1520 = vsel %vm533, %v1474, 0
      %v1523 = vsel %vm533, %v1475, 0
      %v1526 = vsel %vm533, %v1476, 0
      %v1529 = vsel %vm533, %v1477, 0
      %v1532 = vsel %vm533, %v1478, 0
      %v1535 = vsel %vm533, %v1479, 0
      %v1538 = vsel %vm533, %v1480, 0
      %v1541 = vsel %vm533, %v1481, 0
      %1543 = vmatprep.subr.mxu0 0.0
      %1544 = vmatpush1.msra.mxu0 0.0
      %1545 = vmatprep.subr.mxu0 0.0
      %1546 = vmatpush1.msra.mxu0 0.0
      %1547 = vmatprep.subr.mxu0 0.0
      %1548 = vmatpush1.msra.mxu0 0.0
      %1549 = vmatprep.subr.mxu0 0.0
      %1550 = vmatpush1.msra.mxu0 0.0
      %1551 = vmatprep.subr.mxu0 0.0
      %1552 = vmatpush1.msra.mxu0 0.0
      %1553 = vmatprep.subr.mxu0 0.0
      %1554 = vmatpush1.msra.mxu0 0.0
      %1555 = vmatprep.subr.mxu0 0.0
      %1556 = vmatpush1.msra.mxu0 0.0
      %1557 = vmatprep.subr.mxu0 0.0
      %1558 = vmatpush1.msra.mxu0 0.0
      %1559 = vmatprep.subr.mxu0 0.0
      %1560 = vmatpush1.msra.mxu0 0.0
      %1561 = vmatprep.subr.mxu0 0.0
      %1562 = vmatpush1.msra.mxu0 0.0
      %1563 = vmatprep.subr.mxu0 0.0
      %1564 = vmatpush1.msra.mxu0 0.0
      %1565 = vmatprep.subr.mxu0 0.0
      %1566 = vmatpush1.msra.mxu0 0.0
      %1567 = vmatprep.subr.mxu0 0.0
      %1568 = vmatpush1.msra.mxu0 %v1486
      %1569 = vmatprep.subr.mxu0 0.0
      %1570 = vmatpush1.msra.mxu0 %v1485
      %1571 = vmatprep.subr.mxu0 0.0
      %1572 = vmatpush1.msra.mxu0 %v1484
      %1573 = vmatprep.subr.mxu0 0.0
      %1574 = vmatpush1.msra.mxu0 %v1483
      %1575 = vmatprep.subr.mxu0 0.0
      %1576 = vmatpush2.msra.mxu0 0.0
      %1577 = vmatprep.subr.mxu0 0.0
      %1578 = vmatpush2.msra.mxu0 0.0
      %1579 = vmatprep.subr.mxu0 0.0
      %1580 = vmatpush2.msra.mxu0 0.0
      %1581 = vmatprep.subr.mxu0 0.0
      %1582 = vmatpush2.msra.mxu0 0.0
      %1583 = vmatprep.subr.mxu0 0.0
      %1584 = vmatpush2.msra.mxu0 0.0
      %1585 = vmatprep.subr.mxu0 0.0
      %1586 = vmatpush2.msra.mxu0 0.0
      %1587 = vmatprep.subr.mxu0 0.0
      %1588 = vmatpush2.msra.mxu0 0.0
      %1589 = vmatprep.subr.mxu0 0.0
      %1590 = vmatpush2.msra.mxu0 0.0
      %1591 = vmatprep.subr.mxu0 0.0
      %1592 = vmatpush2.msra.mxu0 0.0
      %1593 = vmatprep.subr.mxu0 0.0
      %1594 = vmatpush2.msra.mxu0 0.0
      %1595 = vmatprep.subr.mxu0 0.0
      %1596 = vmatpush2.msra.mxu0 0.0
      %1597 = vmatprep.subr.mxu0 0.0
      %1598 = vmatpush2.msra.mxu0 0.0
      %1599 = vmatprep.subr.mxu0 0.0
      %1600 = vmatpush2.msra.mxu0 0.0
      %1601 = vmatprep.subr.mxu0 0.0
      %1602 = vmatpush2.msra.mxu0 0.0
      %1603 = vmatprep.subr.mxu0 0.0
      %1604 = vmatpush2.msra.mxu0 0.0
      %1605 = vmatprep.subr.mxu0 0.0
      %1606 = vmatpush2.msra.mxu0 0.0
      %1607 = vmatprep.mubr.f32.mxu0 0.0
      %1608 = vmatmul.mubr.f32.gmra.mxu0 %v1496
      %v1609 = vpop.f32.mrf.mxu0
      %v1610 = vadd.f32 %v1493, %v1609
      %v1611 = vpop.f32.mrf.mxu0
      %1612 = vmatprep.mubr.f32.mxu0 0.0
      %1613 = vmatmul.mubr.f32.gmra.mxu0 %v1499
      %v1614 = vpop.f32.mrf.mxu0
      %v1615 = vadd.f32 %v1493, %v1614
      %v1616 = vpop.f32.mrf.mxu0
      %1617 = vmatprep.mubr.f32.mxu0 0.0
      %1618 = vmatmul.mubr.f32.gmra.mxu0 %v1502
      %v1619 = vpop.f32.mrf.mxu0
      %v1620 = vadd.f32 %v1493, %v1619
      %v1621 = vpop.f32.mrf.mxu0
      %1622 = vmatprep.mubr.f32.mxu0 0.0
      %1623 = vmatmul.mubr.f32.gmra.mxu0 %v1505
      %v1624 = vpop.f32.mrf.mxu0
      %v1625 = vadd.f32 %v1493, %v1624
      %v1626 = vpop.f32.mrf.mxu0
      %1627 = vmatprep.mubr.f32.mxu0 0.0
      %1628 = vmatmul.mubr.f32.gmra.mxu0 %v1508
      %v1629 = vpop.f32.mrf.mxu0
      %v1630 = vadd.f32 %v1493, %v1629
      %v1631 = vpop.f32.mrf.mxu0
      %1632 = vmatprep.mubr.f32.mxu0 0.0
      %1633 = vmatmul.mubr.f32.gmra.mxu0 %v1511
      %v1634 = vpop.f32.mrf.mxu0
      %v1635 = vadd.f32 %v1493, %v1634
      %v1636 = vpop.f32.mrf.mxu0
      %1637 = vmatprep.mubr.f32.mxu0 0.0
      %1638 = vmatmul.mubr.f32.gmra.mxu0 %v1514
      %v1639 = vpop.f32.mrf.mxu0
      %v1640 = vadd.f32 %v1493, %v1639
      %v1641 = vpop.f32.mrf.mxu0
      %1642 = vmatprep.mubr.f32.mxu0 0.0
      %1643 = vmatmul.mubr.f32.gmra.mxu0 %v1517
      %v1644 = vpop.f32.mrf.mxu0
      %v1645 = vadd.f32 %v1493, %v1644
      %v1646 = vpop.f32.mrf.mxu0
      %1647 = vmatprep.mubr.f32.mxu0 0.0
      %1648 = vmatmul.mubr.f32.gmra.mxu0 %v1520
      %v1649 = vpop.f32.mrf.mxu0
      %v1650 = vadd.f32 %v1493, %v1649
      %v1651 = vpop.f32.mrf.mxu0
      %1652 = vmatprep.mubr.f32.mxu0 0.0
      %1653 = vmatmul.mubr.f32.gmra.mxu0 %v1523
      %v1654 = vpop.f32.mrf.mxu0
      %v1655 = vadd.f32 %v1493, %v1654
      %v1656 = vpop.f32.mrf.mxu0
      %1657 = vmatprep.mubr.f32.mxu0 0.0
      %1658 = vmatmul.mubr.f32.gmra.mxu0 %v1526
      %v1659 = vpop.f32.mrf.mxu0
      %v1660 = vadd.f32 %v1493, %v1659
      %v1661 = vpop.f32.mrf.mxu0
      %1662 = vmatprep.mubr.f32.mxu0 0.0
      %1663 = vmatmul.mubr.f32.gmra.mxu0 %v1529
      %v1664 = vpop.f32.mrf.mxu0
      %v1665 = vadd.f32 %v1493, %v1664
      %v1666 = vpop.f32.mrf.mxu0
      %1667 = vmatprep.mubr.f32.mxu0 0.0
      %1668 = vmatmul.mubr.f32.gmra.mxu0 %v1532
      %v1669 = vpop.f32.mrf.mxu0
      %v1670 = vadd.f32 %v1493, %v1669
      %v1671 = vpop.f32.mrf.mxu0
      %1672 = vmatprep.mubr.f32.mxu0 0.0
      %1673 = vmatmul.mubr.f32.gmra.mxu0 %v1535
      %v1674 = vpop.f32.mrf.mxu0
      %v1675 = vadd.f32 %v1493, %v1674
      %v1676 = vpop.f32.mrf.mxu0
      %1677 = vmatprep.mubr.f32.mxu0 0.0
      %1678 = vmatmul.mubr.f32.gmra.mxu0 %v1538
      %v1679 = vpop.f32.mrf.mxu0
      %v1680 = vadd.f32 %v1493, %v1679
      %v1681 = vpop.f32.mrf.mxu0
      %1682 = vmatprep.mubr.f32.mxu0 0.0
      %1683 = vmatmul.mubr.f32.gmra.mxu0 %v1541
      %v1684 = vpop.f32.mrf.mxu0
      %v1685 = vadd.f32 %v1493, %v1684
      %v1686 = vpop.f32.mrf.mxu0
      %1687 = vdwg.mxu0
      %v1688 = vadd.f32 %v1610, %v1493
      %v1689 = vadd.f32 %v1615, %v1493
      %v1690 = vadd.f32 %v1620, %v1493
      %v1691 = vadd.f32 %v1625, %v1493
      %v1692 = vadd.f32 %v1630, %v1493
      %v1693 = vadd.f32 %v1635, %v1493
      %v1694 = vadd.f32 %v1640, %v1493
      %v1695 = vadd.f32 %v1645, %v1493
      %v1696 = vadd.f32 %v1650, %v1493
      %v1697 = vadd.f32 %v1655, %v1493
      %v1698 = vadd.f32 %v1660, %v1493
      %v1699 = vadd.f32 %v1665, %v1493
      %v1700 = vadd.f32 %v1670, %v1493
      %v1701 = vadd.f32 %v1675, %v1493
      %v1702 = vadd.f32 %v1680, %v1493
      %v1703 = vadd.f32 %v1685, %v1493
      %v1704 = vtanh.pop %v1610
      %v1705 = vtanh.pop %v1615
      %v1706 = vtanh.pop %v1620
      %v1707 = vtanh.pop %v1625
      %v1708 = vtanh.pop %v1630
      %v1709 = vtanh.pop %v1635
      %v1710 = vtanh.pop %v1640
      %v1711 = vtanh.pop %v1645
      %v1712 = vtanh.pop %v1650
      %v1713 = vtanh.pop %v1655
      %v1714 = vtanh.pop %v1660
      %v1715 = vtanh.pop %v1665
      %v1716 = vtanh.pop %v1670
      %v1717 = vtanh.pop %v1675
      %v1718 = vtanh.pop %v1680
      %v1719 = vtanh.pop %v1685
      %v1721 = vsel %vm533, %v1704, 0
      %v1724 = vsel %vm533, %v1705, 0
      %v1727 = vsel %vm533, %v1706, 0
      %v1730 = vsel %vm533, %v1707, 0
      %v1733 = vsel %vm533, %v1708, 0
      %v1736 = vsel %vm533, %v1709, 0
      %v1739 = vsel %vm533, %v1710, 0
      %v1742 = vsel %vm533, %v1711, 0
      %v1745 = vsel %vm533, %v1712, 0
      %v1748 = vsel %vm533, %v1713, 0
      %v1751 = vsel %vm533, %v1714, 0
      %v1754 = vsel %vm533, %v1715, 0
      %v1757 = vsel %vm533, %v1716, 0
      %v1760 = vsel %vm533, %v1717, 0
      %v1763 = vsel %vm533, %v1718, 0
      %v1766 = vsel %vm533, %v1719, 0
      %1768 = vmatprep.subr.mxu0 0.0
      %1769 = vmatpush1.msra.mxu0 0.0
      %1770 = vmatprep.subr.mxu0 0.0
      %1771 = vmatpush1.msra.mxu0 0.0
      %1772 = vmatprep.subr.mxu0 0.0
      %1773 = vmatpush1.msra.mxu0 0.0
      %1774 = vmatprep.subr.mxu0 0.0
      %1775 = vmatpush1.msra.mxu0 0.0
      %1776 = vmatprep.subr.mxu0 0.0
      %1777 = vmatpush1.msra.mxu0 0.0
      %1778 = vmatprep.subr.mxu0 0.0
      %1779 = vmatpush1.msra.mxu0 0.0
      %1780 = vmatprep.subr.mxu0 0.0
      %1781 = vmatpush1.msra.mxu0 0.0
      %1782 = vmatprep.subr.mxu0 0.0
      %1783 = vmatpush1.msra.mxu0 0.0
      %1784 = vmatprep.subr.mxu0 0.0
      %1785 = vmatpush1.msra.mxu0 0.0
      %1786 = vmatprep.subr.mxu0 0.0
      %1787 = vmatpush1.msra.mxu0 0.0
      %1788 = vmatprep.subr.mxu0 0.0
      %1789 = vmatpush1.msra.mxu0 0.0
      %1790 = vmatprep.subr.mxu0 0.0
      %1791 = vmatpush1.msra.mxu0 0.0
      %1792 = vmatprep.subr.mxu0 0.0
      %1793 = vmatpush1.msra.mxu0 %v1486
      %1794 = vmatprep.subr.mxu0 0.0
      %1795 = vmatpush1.msra.mxu0 %v1485
      %1796 = vmatprep.subr.mxu0 0.0
      %1797 = vmatpush1.msra.mxu0 %v1484
      %1798 = vmatprep.subr.mxu0 0.0
      %1799 = vmatpush1.msra.mxu0 %v1483
      %1800 = vmatprep.subr.mxu0 0.0
      %1801 = vmatpush2.msra.mxu0 0.0
      %1802 = vmatprep.subr.mxu0 0.0
      %1803 = vmatpush2.msra.mxu0 0.0
      %1804 = vmatprep.subr.mxu0 0.0
      %1805 = vmatpush2.msra.mxu0 0.0
      %1806 = vmatprep.subr.mxu0 0.0
      %1807 = vmatpush2.msra.mxu0 0.0
      %1808 = vmatprep.subr.mxu0 0.0
      %1809 = vmatpush2.msra.mxu0 0.0
      %1810 = vmatprep.subr.mxu0 0.0
      %1811 = vmatpush2.msra.mxu0 0.0
      %1812 = vmatprep.subr.mxu0 0.0
      %1813 = vmatpush2.msra.mxu0 0.0
      %1814 = vmatprep.subr.mxu0 0.0
      %1815 = vmatpush2.msra.mxu0 0.0
      %1816 = vmatprep.subr.mxu0 0.0
      %1817 = vmatpush2.msra.mxu0 0.0
      %1818 = vmatprep.subr.mxu0 0.0
      %1819 = vmatpush2.msra.mxu0 0.0
      %1820 = vmatprep.subr.mxu0 0.0
      %1821 = vmatpush2.msra.mxu0 0.0
      %1822 = vmatprep.subr.mxu0 0.0
      %1823 = vmatpush2.msra.mxu0 0.0
      %1824 = vmatprep.subr.mxu0 0.0
      %1825 = vmatpush2.msra.mxu0 0.0
      %1826 = vmatprep.subr.mxu0 0.0
      %1827 = vmatpush2.msra.mxu0 0.0
      %1828 = vmatprep.subr.mxu0 0.0
      %1829 = vmatpush2.msra.mxu0 0.0
      %1830 = vmatprep.subr.mxu0 0.0
      %1831 = vmatpush2.msra.mxu0 0.0
      %1832 = vmatprep.mubr.f32.mxu0 0.0
      %1833 = vmatmul.mubr.f32.gmra.mxu0 %v1721
      %v1834 = vpop.f32.mrf.mxu0
      %v1835 = vadd.f32 0.0, %v1834
      %v1836 = vpop.f32.mrf.mxu0
      %1837 = vmatprep.mubr.f32.mxu0 0.0
      %1838 = vmatmul.mubr.f32.gmra.mxu0 %v1724
      %v1839 = vpop.f32.mrf.mxu0
      %v1840 = vadd.f32 0.0, %v1839
      %v1841 = vpop.f32.mrf.mxu0
      %1842 = vmatprep.mubr.f32.mxu0 0.0
      %1843 = vmatmul.mubr.f32.gmra.mxu0 %v1727
      %v1844 = vpop.f32.mrf.mxu0
      %v1845 = vadd.f32 0.0, %v1844
      %v1846 = vpop.f32.mrf.mxu0
      %1847 = vmatprep.mubr.f32.mxu0 0.0
      %1848 = vmatmul.mubr.f32.gmra.mxu0 %v1730
      %v1849 = vpop.f32.mrf.mxu0
      %v1850 = vadd.f32 0.0, %v1849
      %v1851 = vpop.f32.mrf.mxu0
      %1852 = vmatprep.mubr.f32.mxu0 0.0
      %1853 = vmatmul.mubr.f32.gmra.mxu0 %v1733
      %v1854 = vpop.f32.mrf.mxu0
      %v1855 = vadd.f32 0.0, %v1854
      %v1856 = vpop.f32.mrf.mxu0
      %1857 = vmatprep.mubr.f32.mxu0 0.0
      %1858 = vmatmul.mubr.f32.gmra.mxu0 %v1736
      %v1859 = vpop.f32.mrf.mxu0
      %v1860 = vadd.f32 0.0, %v1859
      %v1861 = vpop.f32.mrf.mxu0
      %1862 = vmatprep.mubr.f32.mxu0 0.0
      %1863 = vmatmul.mubr.f32.gmra.mxu0 %v1739
      %v1864 = vpop.f32.mrf.mxu0
      %v1865 = vadd.f32 0.0, %v1864
      %v1866 = vpop.f32.mrf.mxu0
      %1867 = vmatprep.mubr.f32.mxu0 0.0
      %1868 = vmatmul.mubr.f32.gmra.mxu0 %v1742
      %v1869 = vpop.f32.mrf.mxu0
      %v1870 = vadd.f32 0.0, %v1869
      %v1871 = vpop.f32.mrf.mxu0
      %1872 = vmatprep.mubr.f32.mxu0 0.0
      %1873 = vmatmul.mubr.f32.gmra.mxu0 %v1745
      %v1874 = vpop.f32.mrf.mxu0
      %v1875 = vadd.f32 0.0, %v1874
      %v1876 = vpop.f32.mrf.mxu0
      %1877 = vmatprep.mubr.f32.mxu0 0.0
      %1878 = vmatmul.mubr.f32.gmra.mxu0 %v1748
      %v1879 = vpop.f32.mrf.mxu0
      %v1880 = vadd.f32 0.0, %v1879
      %v1881 = vpop.f32.mrf.mxu0
      %1882 = vmatprep.mubr.f32.mxu0 0.0
      %1883 = vmatmul.mubr.f32.gmra.mxu0 %v1751
      %v1884 = vpop.f32.mrf.mxu0
      %v1885 = vadd.f32 0.0, %v1884
      %v1886 = vpop.f32.mrf.mxu0
      %1887 = vmatprep.mubr.f32.mxu0 0.0
      %1888 = vmatmul.mubr.f32.gmra.mxu0 %v1754
      %v1889 = vpop.f32.mrf.mxu0
      %v1890 = vadd.f32 0.0, %v1889
      %v1891 = vpop.f32.mrf.mxu0
      %1892 = vmatprep.mubr.f32.mxu0 0.0
      %1893 = vmatmul.mubr.f32.gmra.mxu0 %v1757
      %v1894 = vpop.f32.mrf.mxu0
      %v1895 = vadd.f32 0.0, %v1894
      %v1896 = vpop.f32.mrf.mxu0
      %1897 = vmatprep.mubr.f32.mxu0 0.0
      %1898 = vmatmul.mubr.f32.gmra.mxu0 %v1760
      %v1899 = vpop.f32.mrf.mxu0
      %v1900 = vadd.f32 0.0, %v1899
      %v1901 = vpop.f32.mrf.mxu0
      %1902 = vmatprep.mubr.f32.mxu0 0.0
      %1903 = vmatmul.mubr.f32.gmra.mxu0 %v1763
      %v1904 = vpop.f32.mrf.mxu0
      %v1905 = vadd.f32 0.0, %v1904
      %v1906 = vpop.f32.mrf.mxu0
      %1907 = vmatprep.mubr.f32.mxu0 0.0
      %1908 = vmatmul.mubr.f32.gmra.mxu0 %v1766
      %v1909 = vpop.f32.mrf.mxu0
      %v1910 = vadd.f32 0.0, %v1909
      %v1911 = vpop.f32.mrf.mxu0
      %1912 = vdwg.mxu0
      %v1913 = vadd.f32 %v1688, %v1835
      %v1914 = vadd.f32 %v1689, %v1840
      %v1915 = vadd.f32 %v1690, %v1845
      %v1916 = vadd.f32 %v1691, %v1850
      %v1917 = vadd.f32 %v1692, %v1855
      %v1918 = vadd.f32 %v1693, %v1860
      %v1919 = vadd.f32 %v1694, %v1865
      %v1920 = vadd.f32 %v1695, %v1870
      %v1921 = vadd.f32 %v1696, %v1875
      %v1922 = vadd.f32 %v1697, %v1880
      %v1923 = vadd.f32 %v1698, %v1885
      %v1924 = vadd.f32 %v1699, %v1890
      %v1925 = vadd.f32 %v1700, %v1895
      %v1926 = vadd.f32 %v1701, %v1900
      %v1927 = vadd.f32 %v1702, %v1905
      %v1928 = vadd.f32 %v1703, %v1910
      %v1929 = vtanh.pop %v1913
      %v1930 = vtanh.pop %v1914
      %v1931 = vtanh.pop %v1915
      %v1932 = vtanh.pop %v1916
      %v1933 = vtanh.pop %v1917
      %v1934 = vtanh.pop %v1918
      %v1935 = vtanh.pop %v1919
      %v1936 = vtanh.pop %v1920
      %v1937 = vtanh.pop %v1921
      %v1938 = vtanh.pop %v1922
      %v1939 = vtanh.pop %v1923
      %v1940 = vtanh.pop %v1924
      %v1941 = vtanh.pop %v1925
      %v1942 = vtanh.pop %v1926
      %v1943 = vtanh.pop %v1927
      %v1944 = vtanh.pop %v1928
      %v1946 = vsel %vm533, %v1929, 0
      %v1949 = vsel %vm533, %v1930, 0
      %v1952 = vsel %vm533, %v1931, 0
      %v1955 = vsel %vm533, %v1932, 0
      %v1958 = vsel %vm533, %v1933, 0
      %v1961 = vsel %vm533, %v1934, 0
      %v1964 = vsel %vm533, %v1935, 0
      %v1967 = vsel %vm533, %v1936, 0
      %v1970 = vsel %vm533, %v1937, 0
      %v1973 = vsel %vm533, %v1938, 0
      %v1976 = vsel %vm533, %v1939, 0
      %v1979 = vsel %vm533, %v1940, 0
      %v1982 = vsel %vm533, %v1941, 0
      %v1985 = vsel %vm533, %v1942, 0
      %v1988 = vsel %vm533, %v1943, 0
      %v1991 = vsel %vm533, %v1944, 0
      %1993 = vmatprep.subr.mxu0 0.0
      %1994 = vmatpush1.msra.mxu0 0.0
      %1995 = vmatprep.subr.mxu0 0.0
      %1996 = vmatpush1.msra.mxu0 0.0
      %1997 = vmatprep.subr.mxu0 0.0
      %1998 = vmatpush1.msra.mxu0 0.0
      %1999 = vmatprep.subr.mxu0 0.0
      %2000 = vmatpush1.msra.mxu0 0.0
      %2001 = vmatprep.subr.mxu0 0.0
      %2002 = vmatpush1.msra.mxu0 0.0
      %2003 = vmatprep.subr.mxu0 0.0
      %2004 = vmatpush1.msra.mxu0 0.0
      %2005 = vmatprep.subr.mxu0 0.0
      %2006 = vmatpush1.msra.mxu0 0.0
      %2007 = vmatprep.subr.mxu0 0.0
      %2008 = vmatpush1.msra.mxu0 0.0
      %2009 = vmatprep.subr.mxu0 0.0
      %2010 = vmatpush1.msra.mxu0 0.0
      %2011 = vmatprep.subr.mxu0 0.0
      %2012 = vmatpush1.msra.mxu0 0.0
      %2013 = vmatprep.subr.mxu0 0.0
      %2014 = vmatpush1.msra.mxu0 0.0
      %2015 = vmatprep.subr.mxu0 0.0
      %2016 = vmatpush1.msra.mxu0 0.0
      %2017 = vmatprep.subr.mxu0 0.0
      %2018 = vmatpush1.msra.mxu0 %v1486
      %2019 = vmatprep.subr.mxu0 0.0
      %2020 = vmatpush1.msra.mxu0 %v1485
      %2021 = vmatprep.subr.mxu0 0.0
      %2022 = vmatpush1.msra.mxu0 %v1484
      %2023 = vmatprep.subr.mxu0 0.0
      %2024 = vmatpush1.msra.mxu0 %v1483
      %2025 = vmatprep.subr.mxu0 0.0
      %2026 = vmatpush2.msra.mxu0 0.0
      %2027 = vmatprep.subr.mxu0 0.0
      %2028 = vmatpush2.msra.mxu0 0.0
      %2029 = vmatprep.subr.mxu0 0.0
      %2030 = vmatpush2.msra.mxu0 0.0
      %2031 = vmatprep.subr.mxu0 0.0
      %2032 = vmatpush2.msra.mxu0 0.0
      %2033 = vmatprep.subr.mxu0 0.0
      %2034 = vmatpush2.msra.mxu0 0.0
      %2035 = vmatprep.subr.mxu0 0.0
      %2036 = vmatpush2.msra.mxu0 0.0
      %2037 = vmatprep.subr.mxu0 0.0
      %2038 = vmatpush2.msra.mxu0 0.0
      %2039 = vmatprep.subr.mxu0 0.0
      %2040 = vmatpush2.msra.mxu0 0.0
      %2041 = vmatprep.subr.mxu0 0.0
      %2042 = vmatpush2.msra.mxu0 0.0
      %2043 = vmatprep.subr.mxu0 0.0
      %2044 = vmatpush2.msra.mxu0 0.0
      %2045 = vmatprep.subr.mxu0 0.0
      %2046 = vmatpush2.msra.mxu0 0.0
      %2047 = vmatprep.subr.mxu0 0.0
      %2048 = vmatpush2.msra.mxu0 0.0
      %2049 = vmatprep.subr.mxu0 0.0
      %2050 = vmatpush2.msra.mxu0 0.0
      %2051 = vmatprep.subr.mxu0 0.0
      %2052 = vmatpush2.msra.mxu0 0.0
      %2053 = vmatprep.subr.mxu0 0.0
      %2054 = vmatpush2.msra.mxu0 0.0
      %2055 = vmatprep.subr.mxu0 0.0
      %2056 = vmatpush2.msra.mxu0 0.0
      %2057 = vmatprep.mubr.f32.mxu0 0.0
      %2058 = vmatmul.mubr.f32.gmra.mxu0 %v1946
      %v2059 = vpop.f32.mrf.mxu0
      %v2060 = vadd.f32 0.0, %v2059
      %v2061 = vpop.f32.mrf.mxu0
      %2062 = vmatprep.mubr.f32.mxu0 0.0
      %2063 = vmatmul.mubr.f32.gmra.mxu0 %v1949
      %v2064 = vpop.f32.mrf.mxu0
      %v2065 = vadd.f32 0.0, %v2064
      %v2066 = vpop.f32.mrf.mxu0
      %2067 = vmatprep.mubr.f32.mxu0 0.0
      %2068 = vmatmul.mubr.f32.gmra.mxu0 %v1952
      %v2069 = vpop.f32.mrf.mxu0
      %v2070 = vadd.f32 0.0, %v2069
      %v2071 = vpop.f32.mrf.mxu0
      %2072 = vmatprep.mubr.f32.mxu0 0.0
      %2073 = vmatmul.mubr.f32.gmra.mxu0 %v1955
      %v2074 = vpop.f32.mrf.mxu0
      %v2075 = vadd.f32 0.0, %v2074
      %v2076 = vpop.f32.mrf.mxu0
      %2077 = vmatprep.mubr.f32.mxu0 0.0
      %2078 = vmatmul.mubr.f32.gmra.mxu0 %v1958
      %v2079 = vpop.f32.mrf.mxu0
      %v2080 = vadd.f32 0.0, %v2079
      %v2081 = vpop.f32.mrf.mxu0
      %2082 = vmatprep.mubr.f32.mxu0 0.0
      %2083 = vmatmul.mubr.f32.gmra.mxu0 %v1961
      %v2084 = vpop.f32.mrf.mxu0
      %v2085 = vadd.f32 0.0, %v2084
      %v2086 = vpop.f32.mrf.mxu0
      %2087 = vmatprep.mubr.f32.mxu0 0.0
      %2088 = vmatmul.mubr.f32.gmra.mxu0 %v1964
      %v2089 = vpop.f32.mrf.mxu0
      %v2090 = vadd.f32 0.0, %v2089
      %v2091 = vpop.f32.mrf.mxu0
      %2092 = vmatprep.mubr.f32.mxu0 0.0
      %2093 = vmatmul.mubr.f32.gmra.mxu0 %v1967
      %v2094 = vpop.f32.mrf.mxu0
      %v2095 = vadd.f32 0.0, %v2094
      %v2096 = vpop.f32.mrf.mxu0
      %2097 = vmatprep.mubr.f32.mxu0 0.0
      %2098 = vmatmul.mubr.f32.gmra.mxu0 %v1970
      %v2099 = vpop.f32.mrf.mxu0
      %v2100 = vadd.f32 0.0, %v2099
      %v2101 = vpop.f32.mrf.mxu0
      %2102 = vmatprep.mubr.f32.mxu0 0.0
      %2103 = vmatmul.mubr.f32.gmra.mxu0 %v1973
      %v2104 = vpop.f32.mrf.mxu0
      %v2105 = vadd.f32 0.0, %v2104
      %v2106 = vpop.f32.mrf.mxu0
      %2107 = vmatprep.mubr.f32.mxu0 0.0
      %2108 = vmatmul.mubr.f32.gmra.mxu0 %v1976
      %v2109 = vpop.f32.mrf.mxu0
      %v2110 = vadd.f32 0.0, %v2109
      %v2111 = vpop.f32.mrf.mxu0
      %2112 = vmatprep.mubr.f32.mxu0 0.0
      %2113 = vmatmul.mubr.f32.gmra.mxu0 %v1979
      %v2114 = vpop.f32.mrf.mxu0
      %v2115 = vadd.f32 0.0, %v2114
      %v2116 = vpop.f32.mrf.mxu0
      %2117 = vmatprep.mubr.f32.mxu0 0.0
      %2118 = vmatmul.mubr.f32.gmra.mxu0 %v1982
      %v2119 = vpop.f32.mrf.mxu0
      %v2120 = vadd.f32 0.0, %v2119
      %v2121 = vpop.f32.mrf.mxu0
      %2122 = vmatprep.mubr.f32.mxu0 0.0
      %2123 = vmatmul.mubr.f32.gmra.mxu0 %v1985
      %v2124 = vpop.f32.mrf.mxu0
      %v2125 = vadd.f32 0.0, %v2124
      %v2126 = vpop.f32.mrf.mxu0
      %2127 = vmatprep.mubr.f32.mxu0 0.0
      %2128 = vmatmul.mubr.f32.gmra.mxu0 %v1988
      %v2129 = vpop.f32.mrf.mxu0
      %v2130 = vadd.f32 0.0, %v2129
      %v2131 = vpop.f32.mrf.mxu0
      %2132 = vmatprep.mubr.f32.mxu0 0.0
      %2133 = vmatmul.mubr.f32.gmra.mxu0 %v1991
      %v2134 = vpop.f32.mrf.mxu0
      %v2135 = vadd.f32 0.0, %v2134
      %v2136 = vpop.f32.mrf.mxu0
      %2137 = vdwg.mxu0
      %v2138 = vadd.f32 %v1688, %v2060
      %v2139 = vadd.f32 %v1689, %v2065
      %v2140 = vadd.f32 %v1690, %v2070
      %v2141 = vadd.f32 %v1691, %v2075
      %v2142 = vadd.f32 %v1692, %v2080
      %v2143 = vadd.f32 %v1693, %v2085
      %v2144 = vadd.f32 %v1694, %v2090
      %v2145 = vadd.f32 %v1695, %v2095
      %v2146 = vadd.f32 %v1696, %v2100
      %v2147 = vadd.f32 %v1697, %v2105
      %v2148 = vadd.f32 %v1698, %v2110
      %v2149 = vadd.f32 %v1699, %v2115
      %v2150 = vadd.f32 %v1700, %v2120
      %v2151 = vadd.f32 %v1701, %v2125
      %v2152 = vadd.f32 %v1702, %v2130
      %v2153 = vadd.f32 %v1703, %v2135
      %v2154 = vtanh.pop %v2138
      %v2155 = vtanh.pop %v2139
      %v2156 = vtanh.pop %v2140
      %v2157 = vtanh.pop %v2141
      %v2158 = vtanh.pop %v2142
      %v2159 = vtanh.pop %v2143
      %v2160 = vtanh.pop %v2144
      %v2161 = vtanh.pop %v2145
      %v2162 = vtanh.pop %v2146
      %v2163 = vtanh.pop %v2147
      %v2164 = vtanh.pop %v2148
      %v2165 = vtanh.pop %v2149
      %v2166 = vtanh.pop %v2150
      %v2167 = vtanh.pop %v2151
      %v2168 = vtanh.pop %v2152
      %v2169 = vtanh.pop %v2153
      %v2171 = vsel %vm533, %v2154, 0
      %v2174 = vsel %vm533, %v2155, 0
      %v2177 = vsel %vm533, %v2156, 0
      %v2180 = vsel %vm533, %v2157, 0
      %v2183 = vsel %vm533, %v2158, 0
      %v2186 = vsel %vm533, %v2159, 0
      %v2189 = vsel %vm533, %v2160, 0
      %v2192 = vsel %vm533, %v2161, 0
      %v2195 = vsel %vm533, %v2162, 0
      %v2198 = vsel %vm533, %v2163, 0
      %v2201 = vsel %vm533, %v2164, 0
      %v2204 = vsel %vm533, %v2165, 0
      %v2207 = vsel %vm533, %v2166, 0
      %v2210 = vsel %vm533, %v2167, 0
      %v2213 = vsel %vm533, %v2168, 0
      %v2216 = vsel %vm533, %v2169, 0
      %2218 = vmatprep.subr.mxu0 0.0
      %2219 = vmatpush1.msra.mxu0 0.0
      %2220 = vmatprep.subr.mxu0 0.0
      %2221 = vmatpush1.msra.mxu0 0.0
      %2222 = vmatprep.subr.mxu0 0.0
      %2223 = vmatpush1.msra.mxu0 0.0
      %2224 = vmatprep.subr.mxu0 0.0
      %2225 = vmatpush1.msra.mxu0 0.0
      %2226 = vmatprep.subr.mxu0 0.0
      %2227 = vmatpush1.msra.mxu0 0.0
      %2228 = vmatprep.subr.mxu0 0.0
      %2229 = vmatpush1.msra.mxu0 0.0
      %2230 = vmatprep.subr.mxu0 0.0
      %2231 = vmatpush1.msra.mxu0 0.0
      %2232 = vmatprep.subr.mxu0 0.0
      %2233 = vmatpush1.msra.mxu0 0.0
      %2234 = vmatprep.subr.mxu0 0.0
      %2235 = vmatpush1.msra.mxu0 0.0
      %2236 = vmatprep.subr.mxu0 0.0
      %2237 = vmatpush1.msra.mxu0 0.0
      %2238 = vmatprep.subr.mxu0 0.0
      %2239 = vmatpush1.msra.mxu0 0.0
      %2240 = vmatprep.subr.mxu0 0.0
      %2241 = vmatpush1.msra.mxu0 0.0
      %2242 = vmatprep.subr.mxu0 0.0
      %2243 = vmatpush1.msra.mxu0 %v1486
      %2244 = vmatprep.subr.mxu0 0.0
      %2245 = vmatpush1.msra.mxu0 %v1485
      %2246 = vmatprep.subr.mxu0 0.0
      %2247 = vmatpush1.msra.mxu0 %v1484
      %2248 = vmatprep.subr.mxu0 0.0
      %2249 = vmatpush1.msra.mxu0 %v1483
      %2250 = vmatprep.subr.mxu0 0.0
      %2251 = vmatpush2.msra.mxu0 0.0
      %2252 = vmatprep.subr.mxu0 0.0
      %2253 = vmatpush2.msra.mxu0 0.0
      %2254 = vmatprep.subr.mxu0 0.0
      %2255 = vmatpush2.msra.mxu0 0.0
      %2256 = vmatprep.subr.mxu0 0.0
      %2257 = vmatpush2.msra.mxu0 0.0
      %2258 = vmatprep.subr.mxu0 0.0
      %2259 = vmatpush2.msra.mxu0 0.0
      %2260 = vmatprep.subr.mxu0 0.0
      %2261 = vmatpush2.msra.mxu0 0.0
      %2262 = vmatprep.subr.mxu0 0.0
      %2263 = vmatpush2.msra.mxu0 0.0
      %2264 = vmatprep.subr.mxu0 0.0
      %2265 = vmatpush2.msra.mxu0 0.0
      %2266 = vmatprep.subr.mxu0 0.0
      %2267 = vmatpush2.msra.mxu0 0.0
      %2268 = vmatprep.subr.mxu0 0.0
      %2269 = vmatpush2.msra.mxu0 0.0
      %2270 = vmatprep.subr.mxu0 0.0
      %2271 = vmatpush2.msra.mxu0 0.0
      %2272 = vmatprep.subr.mxu0 0.0
      %2273 = vmatpush2.msra.mxu0 0.0
      %2274 = vmatprep.subr.mxu0 0.0
      %2275 = vmatpush2.msra.mxu0 0.0
      %2276 = vmatprep.subr.mxu0 0.0
      %2277 = vmatpush2.msra.mxu0 0.0
      %2278 = vmatprep.subr.mxu0 0.0
      %2279 = vmatpush2.msra.mxu0 0.0
      %2280 = vmatprep.subr.mxu0 0.0
      %2281 = vmatpush2.msra.mxu0 0.0
      %2282 = vmatprep.mubr.f32.mxu0 0.0
      %2283 = vmatmul.mubr.f32.gmra.mxu0 %v2171
      %v2284 = vpop.f32.mrf.mxu0
      %v2285 = vadd.f32 0.0, %v2284
      %v2286 = vpop.f32.mrf.mxu0
      %2287 = vmatprep.mubr.f32.mxu0 0.0
      %2288 = vmatmul.mubr.f32.gmra.mxu0 %v2174
      %v2289 = vpop.f32.mrf.mxu0
      %v2290 = vadd.f32 0.0, %v2289
      %v2291 = vpop.f32.mrf.mxu0
      %2292 = vmatprep.mubr.f32.mxu0 0.0
      %2293 = vmatmul.mubr.f32.gmra.mxu0 %v2177
      %v2294 = vpop.f32.mrf.mxu0
      %v2295 = vadd.f32 0.0, %v2294
      %v2296 = vpop.f32.mrf.mxu0
      %2297 = vmatprep.mubr.f32.mxu0 0.0
      %2298 = vmatmul.mubr.f32.gmra.mxu0 %v2180
      %v2299 = vpop.f32.mrf.mxu0
      %v2300 = vadd.f32 0.0, %v2299
      %v2301 = vpop.f32.mrf.mxu0
      %2302 = vmatprep.mubr.f32.mxu0 0.0
      %2303 = vmatmul.mubr.f32.gmra.mxu0 %v2183
      %v2304 = vpop.f32.mrf.mxu0
      %v2305 = vadd.f32 0.0, %v2304
      %v2306 = vpop.f32.mrf.mxu0
      %2307 = vmatprep.mubr.f32.mxu0 0.0
      %2308 = vmatmul.mubr.f32.gmra.mxu0 %v2186
      %v2309 = vpop.f32.mrf.mxu0
      %v2310 = vadd.f32 0.0, %v2309
      %v2311 = vpop.f32.mrf.mxu0
      %2312 = vmatprep.mubr.f32.mxu0 0.0
      %2313 = vmatmul.mubr.f32.gmra.mxu0 %v2189
      %v2314 = vpop.f32.mrf.mxu0
      %v2315 = vadd.f32 0.0, %v2314
      %v2316 = vpop.f32.mrf.mxu0
      %2317 = vmatprep.mubr.f32.mxu0 0.0
      %2318 = vmatmul.mubr.f32.gmra.mxu0 %v2192
      %v2319 = vpop.f32.mrf.mxu0
      %v2320 = vadd.f32 0.0, %v2319
      %v2321 = vpop.f32.mrf.mxu0
      %2322 = vmatprep.mubr.f32.mxu0 0.0
      %2323 = vmatmul.mubr.f32.gmra.mxu0 %v2195
      %v2324 = vpop.f32.mrf.mxu0
      %v2325 = vadd.f32 0.0, %v2324
      %v2326 = vpop.f32.mrf.mxu0
      %2327 = vmatprep.mubr.f32.mxu0 0.0
      %2328 = vmatmul.mubr.f32.gmra.mxu0 %v2198
      %v2329 = vpop.f32.mrf.mxu0
      %v2330 = vadd.f32 0.0, %v2329
      %v2331 = vpop.f32.mrf.mxu0
      %2332 = vmatprep.mubr.f32.mxu0 0.0
      %2333 = vmatmul.mubr.f32.gmra.mxu0 %v2201
      %v2334 = vpop.f32.mrf.mxu0
      %v2335 = vadd.f32 0.0, %v2334
      %v2336 = vpop.f32.mrf.mxu0
      %2337 = vmatprep.mubr.f32.mxu0 0.0
      %2338 = vmatmul.mubr.f32.gmra.mxu0 %v2204
      %v2339 = vpop.f32.mrf.mxu0
      %v2340 = vadd.f32 0.0, %v2339
      %v2341 = vpop.f32.mrf.mxu0
      %2342 = vmatprep.mubr.f32.mxu0 0.0
      %2343 = vmatmul.mubr.f32.gmra.mxu0 %v2207
      %v2344 = vpop.f32.mrf.mxu0
      %v2345 = vadd.f32 0.0, %v2344
      %v2346 = vpop.f32.mrf.mxu0
      %2347 = vmatprep.mubr.f32.mxu0 0.0
      %2348 = vmatmul.mubr.f32.gmra.mxu0 %v2210
      %v2349 = vpop.f32.mrf.mxu0
      %v2350 = vadd.f32 0.0, %v2349
      %v2351 = vpop.f32.mrf.mxu0
      %2352 = vmatprep.mubr.f32.mxu0 0.0
      %2353 = vmatmul.mubr.f32.gmra.mxu0 %v2213
      %v2354 = vpop.f32.mrf.mxu0
      %v2355 = vadd.f32 0.0, %v2354
      %v2356 = vpop.f32.mrf.mxu0
      %2357 = vmatprep.mubr.f32.mxu0 0.0
      %2358 = vmatmul.mubr.f32.gmra.mxu0 %v2216
      %v2359 = vpop.f32.mrf.mxu0
      %v2360 = vadd.f32 0.0, %v2359
      %v2361 = vpop.f32.mrf.mxu0
      %2362 = vdwg.mxu0
      %v2363 = vadd.f32 %v1688, %v2285
      %v2364 = vadd.f32 %v1689, %v2290
      %v2365 = vadd.f32 %v1690, %v2295
      %v2366 = vadd.f32 %v1691, %v2300
      %v2367 = vadd.f32 %v1692, %v2305
      %v2368 = vadd.f32 %v1693, %v2310
      %v2369 = vadd.f32 %v1694, %v2315
      %v2370 = vadd.f32 %v1695, %v2320
      %v2371 = vadd.f32 %v1696, %v2325
      %v2372 = vadd.f32 %v1697, %v2330
      %v2373 = vadd.f32 %v1698, %v2335
      %v2374 = vadd.f32 %v1699, %v2340
      %v2375 = vadd.f32 %v1700, %v2345
      %v2376 = vadd.f32 %v1701, %v2350
      %v2377 = vadd.f32 %v1702, %v2355
      %v2378 = vadd.f32 %v1703, %v2360
      %v2379 = vtanh.pop %v2363
      %v2380 = vtanh.pop %v2364
      %v2381 = vtanh.pop %v2365
      %v2382 = vtanh.pop %v2366
      %v2383 = vtanh.pop %v2367
      %v2384 = vtanh.pop %v2368
      %v2385 = vtanh.pop %v2369
      %v2386 = vtanh.pop %v2370
      %v2387 = vtanh.pop %v2371
      %v2388 = vtanh.pop %v2372
      %v2389 = vtanh.pop %v2373
      %v2390 = vtanh.pop %v2374
      %v2391 = vtanh.pop %v2375
      %v2392 = vtanh.pop %v2376
      %v2393 = vtanh.pop %v2377
      %v2394 = vtanh.pop %v2378
      %v2395 = vsub.f32 1.0, %v1929
      %v2396 = vsub.f32 1.0, %v1930
      %v2397 = vsub.f32 1.0, %v1931
      %v2398 = vsub.f32 1.0, %v1932
      %v2399 = vsub.f32 1.0, %v1933
      %v2400 = vsub.f32 1.0, %v1934
      %v2401 = vsub.f32 1.0, %v1935
      %v2402 = vsub.f32 1.0, %v1936
      %v2403 = vsub.f32 1.0, %v1937
      %v2404 = vsub.f32 1.0, %v1938
      %v2405 = vsub.f32 1.0, %v1939
      %v2406 = vsub.f32 1.0, %v1940
      %v2407 = vsub.f32 1.0, %v1941
      %v2408 = vsub.f32 1.0, %v1942
      %v2409 = vsub.f32 1.0, %v1943
      %v2410 = vsub.f32 1.0, %v1944
      %v2411 = vmul.f32 %v2395, %v2379
      %v2412 = vmul.f32 %v2396, %v2380
      %v2413 = vmul.f32 %v2397, %v2381
      %v2414 = vmul.f32 %v2398, %v2382
      %v2415 = vmul.f32 %v2399, %v2383
      %v2416 = vmul.f32 %v2400, %v2384
      %v2417 = vmul.f32 %v2401, %v2385
      %v2418 = vmul.f32 %v2402, %v2386
      %v2419 = vmul.f32 %v2403, %v2387
      %v2420 = vmul.f32 %v2404, %v2388
      %v2421 = vmul.f32 %v2405, %v2389
      %v2422 = vmul.f32 %v2406, %v2390
      %v2423 = vmul.f32 %v2407, %v2391
      %v2424 = vmul.f32 %v2408, %v2392
      %v2425 = vmul.f32 %v2409, %v2393
      %v2426 = vmul.f32 %v2410, %v2394
      %v2427 = vadd.f32 %v2411, %v1704
      %v2428 = vadd.f32 %v2412, %v1705
      %v2429 = vadd.f32 %v2413, %v1706
      %v2430 = vadd.f32 %v2414, %v1707
      %v2431 = vadd.f32 %v2415, %v1708
      %v2432 = vadd.f32 %v2416, %v1709
      %v2433 = vadd.f32 %v2417, %v1710
      %v2434 = vadd.f32 %v2418, %v1711
      %v2435 = vadd.f32 %v2419, %v1712
      %v2436 = vadd.f32 %v2420, %v1713
      %v2437 = vadd.f32 %v2421, %v1714
      %v2438 = vadd.f32 %v2422, %v1715
      %v2439 = vadd.f32 %v2423, %v1716
      %v2440 = vadd.f32 %v2424, %v1717
      %v2441 = vadd.f32 %v2425, %v1718
      %v2442 = vadd.f32 %v2426, %v1719
      %s2443 = scalar_lea.vmem %s3, 64
      %v2444 = vld [vmem:[%s2443] sm:$0xff]
      %v2445 = vld [vmem:[%s2443 + $0x8] sm:$0xff]
      %v2446 = vld [vmem:[%s2443 + $0x10] sm:$0xff]
      %v2447 = vld [vmem:[%s2443 + $0x18] sm:$0xff]
      %s2448 = scalar_lea.vmem %s4, 2
      %v2449 = vld [vmem:[%s2448] sm:$0x1]
      %v2451 = vlaneseq
      %v2452 = vshrl.u32 %v2451, 7
      %v2453 = vsub.s32 0, %v2452
      %v2454 = vrot.slane %v2449, %v2453
      %v2457 = vsel %vm533, %v2427, 0
      %v2460 = vsel %vm533, %v2428, 0
      %v2463 = vsel %vm533, %v2429, 0
      %v2466 = vsel %vm533, %v2430, 0
      %v2469 = vsel %vm533, %v2431, 0
      %v2472 = vsel %vm533, %v2432, 0
      %v2475 = vsel %vm533, %v2433, 0
      %v2478 = vsel %vm533, %v2434, 0
      %v2481 = vsel %vm533, %v2435, 0
      %v2484 = vsel %vm533, %v2436, 0
      %v2487 = vsel %vm533, %v2437, 0
      %v2490 = vsel %vm533, %v2438, 0
      %v2493 = vsel %vm533, %v2439, 0
      %v2496 = vsel %vm533, %v2440, 0
      %v2499 = vsel %vm533, %v2441, 0
      %v2502 = vsel %vm533, %v2442, 0
      %2504 = vmatprep.subr.mxu0 0.0
      %2505 = vmatpush1.msra.mxu0 0.0
      %2506 = vmatprep.subr.mxu0 0.0
      %2507 = vmatpush1.msra.mxu0 0.0
      %2508 = vmatprep.subr.mxu0 0.0
      %2509 = vmatpush1.msra.mxu0 0.0
      %2510 = vmatprep.subr.mxu0 0.0
      %2511 = vmatpush1.msra.mxu0 0.0
      %2512 = vmatprep.subr.mxu0 0.0
      %2513 = vmatpush1.msra.mxu0 0.0
      %2514 = vmatprep.subr.mxu0 0.0
      %2515 = vmatpush1.msra.mxu0 0.0
      %2516 = vmatprep.subr.mxu0 0.0
      %2517 = vmatpush1.msra.mxu0 0.0
      %2518 = vmatprep.subr.mxu0 0.0
      %2519 = vmatpush1.msra.mxu0 0.0
      %2520 = vmatprep.subr.mxu0 0.0
      %2521 = vmatpush1.msra.mxu0 0.0
      %2522 = vmatprep.subr.mxu0 0.0
      %2523 = vmatpush1.msra.mxu0 0.0
      %2524 = vmatprep.subr.mxu0 0.0
      %2525 = vmatpush1.msra.mxu0 0.0
      %2526 = vmatprep.subr.mxu0 0.0
      %2527 = vmatpush1.msra.mxu0 0.0
      %2528 = vmatprep.subr.mxu0 0.0
      %2529 = vmatpush1.msra.mxu0 %v2447
      %2530 = vmatprep.subr.mxu0 0.0
      %2531 = vmatpush1.msra.mxu0 %v2446
      %2532 = vmatprep.subr.mxu0 0.0
      %2533 = vmatpush1.msra.mxu0 %v2445
      %2534 = vmatprep.subr.mxu0 0.0
      %2535 = vmatpush1.msra.mxu0 %v2444
      %2536 = vmatprep.subr.mxu0 0.0
      %2537 = vmatpush2.msra.mxu0 0.0
      %2538 = vmatprep.subr.mxu0 0.0
      %2539 = vmatpush2.msra.mxu0 0.0
      %2540 = vmatprep.subr.mxu0 0.0
      %2541 = vmatpush2.msra.mxu0 0.0
      %2542 = vmatprep.subr.mxu0 0.0
      %2543 = vmatpush2.msra.mxu0 0.0
      %2544 = vmatprep.subr.mxu0 0.0
      %2545 = vmatpush2.msra.mxu0 0.0
      %2546 = vmatprep.subr.mxu0 0.0
      %2547 = vmatpush2.msra.mxu0 0.0
      %2548 = vmatprep.subr.mxu0 0.0
      %2549 = vmatpush2.msra.mxu0 0.0
      %2550 = vmatprep.subr.mxu0 0.0
      %2551 = vmatpush2.msra.mxu0 0.0
      %2552 = vmatprep.subr.mxu0 0.0
      %2553 = vmatpush2.msra.mxu0 0.0
      %2554 = vmatprep.subr.mxu0 0.0
      %2555 = vmatpush2.msra.mxu0 0.0
      %2556 = vmatprep.subr.mxu0 0.0
      %2557 = vmatpush2.msra.mxu0 0.0
      %2558 = vmatprep.subr.mxu0 0.0
      %2559 = vmatpush2.msra.mxu0 0.0
      %2560 = vmatprep.subr.mxu0 0.0
      %2561 = vmatpush2.msra.mxu0 0.0
      %2562 = vmatprep.subr.mxu0 0.0
      %2563 = vmatpush2.msra.mxu0 0.0
      %2564 = vmatprep.subr.mxu0 0.0
      %2565 = vmatpush2.msra.mxu0 0.0
      %2566 = vmatprep.subr.mxu0 0.0
      %2567 = vmatpush2.msra.mxu0 0.0
      %2568 = vmatprep.mubr.f32.mxu0 0.0
      %2569 = vmatmul.mubr.f32.gmra.mxu0 %v2457
      %v2570 = vpop.f32.mrf.mxu0
      %v2571 = vadd.f32 %v2454, %v2570
      %v2572 = vpop.f32.mrf.mxu0
      %2573 = vmatprep.mubr.f32.mxu0 0.0
      %2574 = vmatmul.mubr.f32.gmra.mxu0 %v2460
      %v2575 = vpop.f32.mrf.mxu0
      %v2576 = vadd.f32 %v2454, %v2575
      %v2577 = vpop.f32.mrf.mxu0
      %2578 = vmatprep.mubr.f32.mxu0 0.0
      %2579 = vmatmul.mubr.f32.gmra.mxu0 %v2463
      %v2580 = vpop.f32.mrf.mxu0
      %v2581 = vadd.f32 %v2454, %v2580
      %v2582 = vpop.f32.mrf.mxu0
      %2583 = vmatprep.mubr.f32.mxu0 0.0
      %2584 = vmatmul.mubr.f32.gmra.mxu0 %v2466
      %v2585 = vpop.f32.mrf.mxu0
      %v2586 = vadd.f32 %v2454, %v2585
      %v2587 = vpop.f32.mrf.mxu0
      %2588 = vmatprep.mubr.f32.mxu0 0.0
      %2589 = vmatmul.mubr.f32.gmra.mxu0 %v2469
      %v2590 = vpop.f32.mrf.mxu0
      %v2591 = vadd.f32 %v2454, %v2590
      %v2592 = vpop.f32.mrf.mxu0
      %2593 = vmatprep.mubr.f32.mxu0 0.0
      %2594 = vmatmul.mubr.f32.gmra.mxu0 %v2472
      %v2595 = vpop.f32.mrf.mxu0
      %v2596 = vadd.f32 %v2454, %v2595
      %v2597 = vpop.f32.mrf.mxu0
      %2598 = vmatprep.mubr.f32.mxu0 0.0
      %2599 = vmatmul.mubr.f32.gmra.mxu0 %v2475
      %v2600 = vpop.f32.mrf.mxu0
      %v2601 = vadd.f32 %v2454, %v2600
      %v2602 = vpop.f32.mrf.mxu0
      %2603 = vmatprep.mubr.f32.mxu0 0.0
      %2604 = vmatmul.mubr.f32.gmra.mxu0 %v2478
      %v2605 = vpop.f32.mrf.mxu0
      %v2606 = vadd.f32 %v2454, %v2605
      %v2607 = vpop.f32.mrf.mxu0
      %2608 = vmatprep.mubr.f32.mxu0 0.0
      %2609 = vmatmul.mubr.f32.gmra.mxu0 %v2481
      %v2610 = vpop.f32.mrf.mxu0
      %v2611 = vadd.f32 %v2454, %v2610
      %v2612 = vpop.f32.mrf.mxu0
      %2613 = vmatprep.mubr.f32.mxu0 0.0
      %2614 = vmatmul.mubr.f32.gmra.mxu0 %v2484
      %v2615 = vpop.f32.mrf.mxu0
      %v2616 = vadd.f32 %v2454, %v2615
      %v2617 = vpop.f32.mrf.mxu0
      %2618 = vmatprep.mubr.f32.mxu0 0.0
      %2619 = vmatmul.mubr.f32.gmra.mxu0 %v2487
      %v2620 = vpop.f32.mrf.mxu0
      %v2621 = vadd.f32 %v2454, %v2620
      %v2622 = vpop.f32.mrf.mxu0
      %2623 = vmatprep.mubr.f32.mxu0 0.0
      %2624 = vmatmul.mubr.f32.gmra.mxu0 %v2490
      %v2625 = vpop.f32.mrf.mxu0
      %v2626 = vadd.f32 %v2454, %v2625
      %v2627 = vpop.f32.mrf.mxu0
      %2628 = vmatprep.mubr.f32.mxu0 0.0
      %2629 = vmatmul.mubr.f32.gmra.mxu0 %v2493
      %v2630 = vpop.f32.mrf.mxu0
      %v2631 = vadd.f32 %v2454, %v2630
      %v2632 = vpop.f32.mrf.mxu0
      %2633 = vmatprep.mubr.f32.mxu0 0.0
      %2634 = vmatmul.mubr.f32.gmra.mxu0 %v2496
      %v2635 = vpop.f32.mrf.mxu0
      %v2636 = vadd.f32 %v2454, %v2635
      %v2637 = vpop.f32.mrf.mxu0
      %2638 = vmatprep.mubr.f32.mxu0 0.0
      %2639 = vmatmul.mubr.f32.gmra.mxu0 %v2499
      %v2640 = vpop.f32.mrf.mxu0
      %v2641 = vadd.f32 %v2454, %v2640
      %v2642 = vpop.f32.mrf.mxu0
      %2643 = vmatprep.mubr.f32.mxu0 0.0
      %2644 = vmatmul.mubr.f32.gmra.mxu0 %v2502
      %v2645 = vpop.f32.mrf.mxu0
      %v2646 = vadd.f32 %v2454, %v2645
      %v2647 = vpop.f32.mrf.mxu0
      %2648 = vdwg.mxu0
      %v2649 = vadd.f32 %v2571, %v2454
      %v2650 = vadd.f32 %v2576, %v2454
      %v2651 = vadd.f32 %v2581, %v2454
      %v2652 = vadd.f32 %v2586, %v2454
      %v2653 = vadd.f32 %v2591, %v2454
      %v2654 = vadd.f32 %v2596, %v2454
      %v2655 = vadd.f32 %v2601, %v2454
      %v2656 = vadd.f32 %v2606, %v2454
      %v2657 = vadd.f32 %v2611, %v2454
      %v2658 = vadd.f32 %v2616, %v2454
      %v2659 = vadd.f32 %v2621, %v2454
      %v2660 = vadd.f32 %v2626, %v2454
      %v2661 = vadd.f32 %v2631, %v2454
      %v2662 = vadd.f32 %v2636, %v2454
      %v2663 = vadd.f32 %v2641, %v2454
      %v2664 = vadd.f32 %v2646, %v2454
      %v2665 = vtanh.pop %v2571
      %v2666 = vtanh.pop %v2576
      %v2667 = vtanh.pop %v2581
      %v2668 = vtanh.pop %v2586
      %v2669 = vtanh.pop %v2591
      %v2670 = vtanh.pop %v2596
      %v2671 = vtanh.pop %v2601
      %v2672 = vtanh.pop %v2606
      %v2673 = vtanh.pop %v2611
      %v2674 = vtanh.pop %v2616
      %v2675 = vtanh.pop %v2621
      %v2676 = vtanh.pop %v2626
      %v2677 = vtanh.pop %v2631
      %v2678 = vtanh.pop %v2636
      %v2679 = vtanh.pop %v2641
      %v2680 = vtanh.pop %v2646
      %v2682 = vsel %vm533, %v2665, 0
      %v2685 = vsel %vm533, %v2666, 0
      %v2688 = vsel %vm533, %v2667, 0
      %v2691 = vsel %vm533, %v2668, 0
      %v2694 = vsel %vm533, %v2669, 0
      %v2697 = vsel %vm533, %v2670, 0
      %v2700 = vsel %vm533, %v2671, 0
      %v2703 = vsel %vm533, %v2672, 0
      %v2706 = vsel %vm533, %v2673, 0
      %v2709 = vsel %vm533, %v2674, 0
      %v2712 = vsel %vm533, %v2675, 0
      %v2715 = vsel %vm533, %v2676, 0
      %v2718 = vsel %vm533, %v2677, 0
      %v2721 = vsel %vm533, %v2678, 0
      %v2724 = vsel %vm533, %v2679, 0
      %v2727 = vsel %vm533, %v2680, 0
      %2729 = vmatprep.subr.mxu0 0.0
      %2730 = vmatpush1.msra.mxu0 0.0
      %2731 = vmatprep.subr.mxu0 0.0
      %2732 = vmatpush1.msra.mxu0 0.0
      %2733 = vmatprep.subr.mxu0 0.0
      %2734 = vmatpush1.msra.mxu0 0.0
      %2735 = vmatprep.subr.mxu0 0.0
      %2736 = vmatpush1.msra.mxu0 0.0
      %2737 = vmatprep.subr.mxu0 0.0
      %2738 = vmatpush1.msra.mxu0 0.0
      %2739 = vmatprep.subr.mxu0 0.0
      %2740 = vmatpush1.msra.mxu0 0.0
      %2741 = vmatprep.subr.mxu0 0.0
      %2742 = vmatpush1.msra.mxu0 0.0
      %2743 = vmatprep.subr.mxu0 0.0
      %2744 = vmatpush1.msra.mxu0 0.0
      %2745 = vmatprep.subr.mxu0 0.0
      %2746 = vmatpush1.msra.mxu0 0.0
      %2747 = vmatprep.subr.mxu0 0.0
      %2748 = vmatpush1.msra.mxu0 0.0
      %2749 = vmatprep.subr.mxu0 0.0
      %2750 = vmatpush1.msra.mxu0 0.0
      %2751 = vmatprep.subr.mxu0 0.0
      %2752 = vmatpush1.msra.mxu0 0.0
      %2753 = vmatprep.subr.mxu0 0.0
      %2754 = vmatpush1.msra.mxu0 %v2447
      %2755 = vmatprep.subr.mxu0 0.0
      %2756 = vmatpush1.msra.mxu0 %v2446
      %2757 = vmatprep.subr.mxu0 0.0
      %2758 = vmatpush1.msra.mxu0 %v2445
      %2759 = vmatprep.subr.mxu0 0.0
      %2760 = vmatpush1.msra.mxu0 %v2444
      %2761 = vmatprep.subr.mxu0 0.0
      %2762 = vmatpush2.msra.mxu0 0.0
      %2763 = vmatprep.subr.mxu0 0.0
      %2764 = vmatpush2.msra.mxu0 0.0
      %2765 = vmatprep.subr.mxu0 0.0
      %2766 = vmatpush2.msra.mxu0 0.0
      %2767 = vmatprep.subr.mxu0 0.0
      %2768 = vmatpush2.msra.mxu0 0.0
      %2769 = vmatprep.subr.mxu0 0.0
      %2770 = vmatpush2.msra.mxu0 0.0
      %2771 = vmatprep.subr.mxu0 0.0
      %2772 = vmatpush2.msra.mxu0 0.0
      %2773 = vmatprep.subr.mxu0 0.0
      %2774 = vmatpush2.msra.mxu0 0.0
      %2775 = vmatprep.subr.mxu0 0.0
      %2776 = vmatpush2.msra.mxu0 0.0
      %2777 = vmatprep.subr.mxu0 0.0
      %2778 = vmatpush2.msra.mxu0 0.0
      %2779 = vmatprep.subr.mxu0 0.0
      %2780 = vmatpush2.msra.mxu0 0.0
      %2781 = vmatprep.subr.mxu0 0.0
      %2782 = vmatpush2.msra.mxu0 0.0
      %2783 = vmatprep.subr.mxu0 0.0
      %2784 = vmatpush2.msra.mxu0 0.0
      %2785 = vmatprep.subr.mxu0 0.0
      %2786 = vmatpush2.msra.mxu0 0.0
      %2787 = vmatprep.subr.mxu0 0.0
      %2788 = vmatpush2.msra.mxu0 0.0
      %2789 = vmatprep.subr.mxu0 0.0
      %2790 = vmatpush2.msra.mxu0 0.0
      %2791 = vmatprep.subr.mxu0 0.0
      %2792 = vmatpush2.msra.mxu0 0.0
      %2793 = vmatprep.mubr.f32.mxu0 0.0
      %2794 = vmatmul.mubr.f32.gmra.mxu0 %v2682
      %v2795 = vpop.f32.mrf.mxu0
      %v2796 = vadd.f32 0.0, %v2795
      %v2797 = vpop.f32.mrf.mxu0
      %2798 = vmatprep.mubr.f32.mxu0 0.0
      %2799 = vmatmul.mubr.f32.gmra.mxu0 %v2685
      %v2800 = vpop.f32.mrf.mxu0
      %v2801 = vadd.f32 0.0, %v2800
      %v2802 = vpop.f32.mrf.mxu0
      %2803 = vmatprep.mubr.f32.mxu0 0.0
      %2804 = vmatmul.mubr.f32.gmra.mxu0 %v2688
      %v2805 = vpop.f32.mrf.mxu0
      %v2806 = vadd.f32 0.0, %v2805
      %v2807 = vpop.f32.mrf.mxu0
      %2808 = vmatprep.mubr.f32.mxu0 0.0
      %2809 = vmatmul.mubr.f32.gmra.mxu0 %v2691
      %v2810 = vpop.f32.mrf.mxu0
      %v2811 = vadd.f32 0.0, %v2810
      %v2812 = vpop.f32.mrf.mxu0
      %2813 = vmatprep.mubr.f32.mxu0 0.0
      %2814 = vmatmul.mubr.f32.gmra.mxu0 %v2694
      %v2815 = vpop.f32.mrf.mxu0
      %v2816 = vadd.f32 0.0, %v2815
      %v2817 = vpop.f32.mrf.mxu0
      %2818 = vmatprep.mubr.f32.mxu0 0.0
      %2819 = vmatmul.mubr.f32.gmra.mxu0 %v2697
      %v2820 = vpop.f32.mrf.mxu0
      %v2821 = vadd.f32 0.0, %v2820
      %v2822 = vpop.f32.mrf.mxu0
      %2823 = vmatprep.mubr.f32.mxu0 0.0
      %2824 = vmatmul.mubr.f32.gmra.mxu0 %v2700
      %v2825 = vpop.f32.mrf.mxu0
      %v2826 = vadd.f32 0.0, %v2825
      %v2827 = vpop.f32.mrf.mxu0
      %2828 = vmatprep.mubr.f32.mxu0 0.0
      %2829 = vmatmul.mubr.f32.gmra.mxu0 %v2703
      %v2830 = vpop.f32.mrf.mxu0
      %v2831 = vadd.f32 0.0, %v2830
      %v2832 = vpop.f32.mrf.mxu0
      %2833 = vmatprep.mubr.f32.mxu0 0.0
      %2834 = vmatmul.mubr.f32.gmra.mxu0 %v2706
      %v2835 = vpop.f32.mrf.mxu0
      %v2836 = vadd.f32 0.0, %v2835
      %v2837 = vpop.f32.mrf.mxu0
      %2838 = vmatprep.mubr.f32.mxu0 0.0
      %2839 = vmatmul.mubr.f32.gmra.mxu0 %v2709
      %v2840 = vpop.f32.mrf.mxu0
      %v2841 = vadd.f32 0.0, %v2840
      %v2842 = vpop.f32.mrf.mxu0
      %2843 = vmatprep.mubr.f32.mxu0 0.0
      %2844 = vmatmul.mubr.f32.gmra.mxu0 %v2712
      %v2845 = vpop.f32.mrf.mxu0
      %v2846 = vadd.f32 0.0, %v2845
      %v2847 = vpop.f32.mrf.mxu0
      %2848 = vmatprep.mubr.f32.mxu0 0.0
      %2849 = vmatmul.mubr.f32.gmra.mxu0 %v2715
      %v2850 = vpop.f32.mrf.mxu0
      %v2851 = vadd.f32 0.0, %v2850
      %v2852 = vpop.f32.mrf.mxu0
      %2853 = vmatprep.mubr.f32.mxu0 0.0
      %2854 = vmatmul.mubr.f32.gmra.mxu0 %v2718
      %v2855 = vpop.f32.mrf.mxu0
      %v2856 = vadd.f32 0.0, %v2855
      %v2857 = vpop.f32.mrf.mxu0
      %2858 = vmatprep.mubr.f32.mxu0 0.0
      %2859 = vmatmul.mubr.f32.gmra.mxu0 %v2721
      %v2860 = vpop.f32.mrf.mxu0
      %v2861 = vadd.f32 0.0, %v2860
      %v2862 = vpop.f32.mrf.mxu0
      %2863 = vmatprep.mubr.f32.mxu0 0.0
      %2864 = vmatmul.mubr.f32.gmra.mxu0 %v2724
      %v2865 = vpop.f32.mrf.mxu0
      %v2866 = vadd.f32 0.0, %v2865
      %v2867 = vpop.f32.mrf.mxu0
      %2868 = vmatprep.mubr.f32.mxu0 0.0
      %2869 = vmatmul.mubr.f32.gmra.mxu0 %v2727
      %v2870 = vpop.f32.mrf.mxu0
      %v2871 = vadd.f32 0.0, %v2870
      %v2872 = vpop.f32.mrf.mxu0
      %2873 = vdwg.mxu0
      %v2874 = vadd.f32 %v2649, %v2796
      %v2875 = vadd.f32 %v2650, %v2801
      %v2876 = vadd.f32 %v2651, %v2806
      %v2877 = vadd.f32 %v2652, %v2811
      %v2878 = vadd.f32 %v2653, %v2816
      %v2879 = vadd.f32 %v2654, %v2821
      %v2880 = vadd.f32 %v2655, %v2826
      %v2881 = vadd.f32 %v2656, %v2831
      %v2882 = vadd.f32 %v2657, %v2836
      %v2883 = vadd.f32 %v2658, %v2841
      %v2884 = vadd.f32 %v2659, %v2846
      %v2885 = vadd.f32 %v2660, %v2851
      %v2886 = vadd.f32 %v2661, %v2856
      %v2887 = vadd.f32 %v2662, %v2861
      %v2888 = vadd.f32 %v2663, %v2866
      %v2889 = vadd.f32 %v2664, %v2871
      %v2890 = vtanh.pop %v2874
      %v2891 = vtanh.pop %v2875
      %v2892 = vtanh.pop %v2876
      %v2893 = vtanh.pop %v2877
      %v2894 = vtanh.pop %v2878
      %v2895 = vtanh.pop %v2879
      %v2896 = vtanh.pop %v2880
      %v2897 = vtanh.pop %v2881
      %v2898 = vtanh.pop %v2882
      %v2899 = vtanh.pop %v2883
      %v2900 = vtanh.pop %v2884
      %v2901 = vtanh.pop %v2885
      %v2902 = vtanh.pop %v2886
      %v2903 = vtanh.pop %v2887
      %v2904 = vtanh.pop %v2888
      %v2905 = vtanh.pop %v2889
      %v2907 = vsel %vm533, %v2890, 0
      %v2910 = vsel %vm533, %v2891, 0
      %v2913 = vsel %vm533, %v2892, 0
      %v2916 = vsel %vm533, %v2893, 0
      %v2919 = vsel %vm533, %v2894, 0
      %v2922 = vsel %vm533, %v2895, 0
      %v2925 = vsel %vm533, %v2896, 0
      %v2928 = vsel %vm533, %v2897, 0
      %v2931 = vsel %vm533, %v2898, 0
      %v2934 = vsel %vm533, %v2899, 0
      %v2937 = vsel %vm533, %v2900, 0
      %v2940 = vsel %vm533, %v2901, 0
      %v2943 = vsel %vm533, %v2902, 0
      %v2946 = vsel %vm533, %v2903, 0
      %v2949 = vsel %vm533, %v2904, 0
      %v2952 = vsel %vm533, %v2905, 0
      %2954 = vmatprep.subr.mxu0 0.0
      %2955 = vmatpush1.msra.mxu0 0.0
      %2956 = vmatprep.subr.mxu0 0.0
      %2957 = vmatpush1.msra.mxu0 0.0
      %2958 = vmatprep.subr.mxu0 0.0
      %2959 = vmatpush1.msra.mxu0 0.0
      %2960 = vmatprep.subr.mxu0 0.0
      %2961 = vmatpush1.msra.mxu0 0.0
      %2962 = vmatprep.subr.mxu0 0.0
      %2963 = vmatpush1.msra.mxu0 0.0
      %2964 = vmatprep.subr.mxu0 0.0
      %2965 = vmatpush1.msra.mxu0 0.0
      %2966 = vmatprep.subr.mxu0 0.0
      %2967 = vmatpush1.msra.mxu0 0.0
      %2968 = vmatprep.subr.mxu0 0.0
      %2969 = vmatpush1.msra.mxu0 0.0
      %2970 = vmatprep.subr.mxu0 0.0
      %2971 = vmatpush1.msra.mxu0 0.0
      %2972 = vmatprep.subr.mxu0 0.0
      %2973 = vmatpush1.msra.mxu0 0.0
      %2974 = vmatprep.subr.mxu0 0.0
      %2975 = vmatpush1.msra.mxu0 0.0
      %2976 = vmatprep.subr.mxu0 0.0
      %2977 = vmatpush1.msra.mxu0 0.0
      %2978 = vmatprep.subr.mxu0 0.0
      %2979 = vmatpush1.msra.mxu0 %v2447
      %2980 = vmatprep.subr.mxu0 0.0
      %2981 = vmatpush1.msra.mxu0 %v2446
      %2982 = vmatprep.subr.mxu0 0.0
      %2983 = vmatpush1.msra.mxu0 %v2445
      %2984 = vmatprep.subr.mxu0 0.0
      %2985 = vmatpush1.msra.mxu0 %v2444
      %2986 = vmatprep.subr.mxu0 0.0
      %2987 = vmatpush2.msra.mxu0 0.0
      %2988 = vmatprep.subr.mxu0 0.0
      %2989 = vmatpush2.msra.mxu0 0.0
      %2990 = vmatprep.subr.mxu0 0.0
      %2991 = vmatpush2.msra.mxu0 0.0
      %2992 = vmatprep.subr.mxu0 0.0
      %2993 = vmatpush2.msra.mxu0 0.0
      %2994 = vmatprep.subr.mxu0 0.0
      %2995 = vmatpush2.msra.mxu0 0.0
      %2996 = vmatprep.subr.mxu0 0.0
      %2997 = vmatpush2.msra.mxu0 0.0
      %2998 = vmatprep.subr.mxu0 0.0
      %2999 = vmatpush2.msra.mxu0 0.0
      %3000 = vmatprep.subr.mxu0 0.0
      %3001 = vmatpush2.msra.mxu0 0.0
      %3002 = vmatprep.subr.mxu0 0.0
      %3003 = vmatpush2.msra.mxu0 0.0
      %3004 = vmatprep.subr.mxu0 0.0
      %3005 = vmatpush2.msra.mxu0 0.0
      %3006 = vmatprep.subr.mxu0 0.0
      %3007 = vmatpush2.msra.mxu0 0.0
      %3008 = vmatprep.subr.mxu0 0.0
      %3009 = vmatpush2.msra.mxu0 0.0
      %3010 = vmatprep.subr.mxu0 0.0
      %3011 = vmatpush2.msra.mxu0 0.0
      %3012 = vmatprep.subr.mxu0 0.0
      %3013 = vmatpush2.msra.mxu0 0.0
      %3014 = vmatprep.subr.mxu0 0.0
      %3015 = vmatpush2.msra.mxu0 0.0
      %3016 = vmatprep.subr.mxu0 0.0
      %3017 = vmatpush2.msra.mxu0 0.0
      %3018 = vmatprep.mubr.f32.mxu0 0.0
      %3019 = vmatmul.mubr.f32.gmra.mxu0 %v2907
      %v3020 = vpop.f32.mrf.mxu0
      %v3021 = vadd.f32 0.0, %v3020
      %v3022 = vpop.f32.mrf.mxu0
      %3023 = vmatprep.mubr.f32.mxu0 0.0
      %3024 = vmatmul.mubr.f32.gmra.mxu0 %v2910
      %v3025 = vpop.f32.mrf.mxu0
      %v3026 = vadd.f32 0.0, %v3025
      %v3027 = vpop.f32.mrf.mxu0
      %3028 = vmatprep.mubr.f32.mxu0 0.0
      %3029 = vmatmul.mubr.f32.gmra.mxu0 %v2913
      %v3030 = vpop.f32.mrf.mxu0
      %v3031 = vadd.f32 0.0, %v3030
      %v3032 = vpop.f32.mrf.mxu0
      %3033 = vmatprep.mubr.f32.mxu0 0.0
      %3034 = vmatmul.mubr.f32.gmra.mxu0 %v2916
      %v3035 = vpop.f32.mrf.mxu0
      %v3036 = vadd.f32 0.0, %v3035
      %v3037 = vpop.f32.mrf.mxu0
      %3038 = vmatprep.mubr.f32.mxu0 0.0
      %3039 = vmatmul.mubr.f32.gmra.mxu0 %v2919
      %v3040 = vpop.f32.mrf.mxu0
      %v3041 = vadd.f32 0.0, %v3040
      %v3042 = vpop.f32.mrf.mxu0
      %3043 = vmatprep.mubr.f32.mxu0 0.0
      %3044 = vmatmul.mubr.f32.gmra.mxu0 %v2922
      %v3045 = vpop.f32.mrf.mxu0
      %v3046 = vadd.f32 0.0, %v3045
      %v3047 = vpop.f32.mrf.mxu0
      %3048 = vmatprep.mubr.f32.mxu0 0.0
      %3049 = vmatmul.mubr.f32.gmra.mxu0 %v2925
      %v3050 = vpop.f32.mrf.mxu0
      %v3051 = vadd.f32 0.0, %v3050
      %v3052 = vpop.f32.mrf.mxu0
      %3053 = vmatprep.mubr.f32.mxu0 0.0
      %3054 = vmatmul.mubr.f32.gmra.mxu0 %v2928
      %v3055 = vpop.f32.mrf.mxu0
      %v3056 = vadd.f32 0.0, %v3055
      %v3057 = vpop.f32.mrf.mxu0
      %3058 = vmatprep.mubr.f32.mxu0 0.0
      %3059 = vmatmul.mubr.f32.gmra.mxu0 %v2931
      %v3060 = vpop.f32.mrf.mxu0
      %v3061 = vadd.f32 0.0, %v3060
      %v3062 = vpop.f32.mrf.mxu0
      %3063 = vmatprep.mubr.f32.mxu0 0.0
      %3064 = vmatmul.mubr.f32.gmra.mxu0 %v2934
      %v3065 = vpop.f32.mrf.mxu0
      %v3066 = vadd.f32 0.0, %v3065
      %v3067 = vpop.f32.mrf.mxu0
      %3068 = vmatprep.mubr.f32.mxu0 0.0
      %3069 = vmatmul.mubr.f32.gmra.mxu0 %v2937
      %v3070 = vpop.f32.mrf.mxu0
      %v3071 = vadd.f32 0.0, %v3070
      %v3072 = vpop.f32.mrf.mxu0
      %3073 = vmatprep.mubr.f32.mxu0 0.0
      %3074 = vmatmul.mubr.f32.gmra.mxu0 %v2940
      %v3075 = vpop.f32.mrf.mxu0
      %v3076 = vadd.f32 0.0, %v3075
      %v3077 = vpop.f32.mrf.mxu0
      %3078 = vmatprep.mubr.f32.mxu0 0.0
      %3079 = vmatmul.mubr.f32.gmra.mxu0 %v2943
      %v3080 = vpop.f32.mrf.mxu0
      %v3081 = vadd.f32 0.0, %v3080
      %v3082 = vpop.f32.mrf.mxu0
      %3083 = vmatprep.mubr.f32.mxu0 0.0
      %3084 = vmatmul.mubr.f32.gmra.mxu0 %v2946
      %v3085 = vpop.f32.mrf.mxu0
      %v3086 = vadd.f32 0.0, %v3085
      %v3087 = vpop.f32.mrf.mxu0
      %3088 = vmatprep.mubr.f32.mxu0 0.0
      %3089 = vmatmul.mubr.f32.gmra.mxu0 %v2949
      %v3090 = vpop.f32.mrf.mxu0
      %v3091 = vadd.f32 0.0, %v3090
      %v3092 = vpop.f32.mrf.mxu0
      %3093 = vmatprep.mubr.f32.mxu0 0.0
      %3094 = vmatmul.mubr.f32.gmra.mxu0 %v2952
      %v3095 = vpop.f32.mrf.mxu0
      %v3096 = vadd.f32 0.0, %v3095
      %v3097 = vpop.f32.mrf.mxu0
      %3098 = vdwg.mxu0
      %v3099 = vadd.f32 %v2649, %v3021
      %v3100 = vadd.f32 %v2650, %v3026
      %v3101 = vadd.f32 %v2651, %v3031
      %v3102 = vadd.f32 %v2652, %v3036
      %v3103 = vadd.f32 %v2653, %v3041
      %v3104 = vadd.f32 %v2654, %v3046
      %v3105 = vadd.f32 %v2655, %v3051
      %v3106 = vadd.f32 %v2656, %v3056
      %v3107 = vadd.f32 %v2657, %v3061
      %v3108 = vadd.f32 %v2658, %v3066
      %v3109 = vadd.f32 %v2659, %v3071
      %v3110 = vadd.f32 %v2660, %v3076
      %v3111 = vadd.f32 %v2661, %v3081
      %v3112 = vadd.f32 %v2662, %v3086
      %v3113 = vadd.f32 %v2663, %v3091
      %v3114 = vadd.f32 %v2664, %v3096
      %v3115 = vtanh.pop %v3099
      %v3116 = vtanh.pop %v3100
      %v3117 = vtanh.pop %v3101
      %v3118 = vtanh.pop %v3102
      %v3119 = vtanh.pop %v3103
      %v3120 = vtanh.pop %v3104
      %v3121 = vtanh.pop %v3105
      %v3122 = vtanh.pop %v3106
      %v3123 = vtanh.pop %v3107
      %v3124 = vtanh.pop %v3108
      %v3125 = vtanh.pop %v3109
      %v3126 = vtanh.pop %v3110
      %v3127 = vtanh.pop %v3111
      %v3128 = vtanh.pop %v3112
      %v3129 = vtanh.pop %v3113
      %v3130 = vtanh.pop %v3114
      %v3132 = vsel %vm533, %v3115, 0
      %v3135 = vsel %vm533, %v3116, 0
      %v3138 = vsel %vm533, %v3117, 0
      %v3141 = vsel %vm533, %v3118, 0
      %v3144 = vsel %vm533, %v3119, 0
      %v3147 = vsel %vm533, %v3120, 0
      %v3150 = vsel %vm533, %v3121, 0
      %v3153 = vsel %vm533, %v3122, 0
      %v3156 = vsel %vm533, %v3123, 0
      %v3159 = vsel %vm533, %v3124, 0
      %v3162 = vsel %vm533, %v3125, 0
      %v3165 = vsel %vm533, %v3126, 0
      %v3168 = vsel %vm533, %v3127, 0
      %v3171 = vsel %vm533, %v3128, 0
      %v3174 = vsel %vm533, %v3129, 0
      %v3177 = vsel %vm533, %v3130, 0
      %3179 = vmatprep.subr.mxu0 0.0
      %3180 = vmatpush1.msra.mxu0 0.0
      %3181 = vmatprep.subr.mxu0 0.0
      %3182 = vmatpush1.msra.mxu0 0.0
      %3183 = vmatprep.subr.mxu0 0.0
      %3184 = vmatpush1.msra.mxu0 0.0
      %3185 = vmatprep.subr.mxu0 0.0
      %3186 = vmatpush1.msra.mxu0 0.0
      %3187 = vmatprep.subr.mxu0 0.0
      %3188 = vmatpush1.msra.mxu0 0.0
      %3189 = vmatprep.subr.mxu0 0.0
      %3190 = vmatpush1.msra.mxu0 0.0
      %3191 = vmatprep.subr.mxu0 0.0
      %3192 = vmatpush1.msra.mxu0 0.0
      %3193 = vmatprep.subr.mxu0 0.0
      %3194 = vmatpush1.msra.mxu0 0.0
      %3195 = vmatprep.subr.mxu0 0.0
      %3196 = vmatpush1.msra.mxu0 0.0
      %3197 = vmatprep.subr.mxu0 0.0
      %3198 = vmatpush1.msra.mxu0 0.0
      %3199 = vmatprep.subr.mxu0 0.0
      %3200 = vmatpush1.msra.mxu0 0.0
      %3201 = vmatprep.subr.mxu0 0.0
      %3202 = vmatpush1.msra.mxu0 0.0
      %3203 = vmatprep.subr.mxu0 0.0
      %3204 = vmatpush1.msra.mxu0 %v2447
      %3205 = vmatprep.subr.mxu0 0.0
      %3206 = vmatpush1.msra.mxu0 %v2446
      %3207 = vmatprep.subr.mxu0 0.0
      %3208 = vmatpush1.msra.mxu0 %v2445
      %3209 = vmatprep.subr.mxu0 0.0
      %3210 = vmatpush1.msra.mxu0 %v2444
      %3211 = vmatprep.subr.mxu0 0.0
      %3212 = vmatpush2.msra.mxu0 0.0
      %3213 = vmatprep.subr.mxu0 0.0
      %3214 = vmatpush2.msra.mxu0 0.0
      %3215 = vmatprep.subr.mxu0 0.0
      %3216 = vmatpush2.msra.mxu0 0.0
      %3217 = vmatprep.subr.mxu0 0.0
      %3218 = vmatpush2.msra.mxu0 0.0
      %3219 = vmatprep.subr.mxu0 0.0
      %3220 = vmatpush2.msra.mxu0 0.0
      %3221 = vmatprep.subr.mxu0 0.0
      %3222 = vmatpush2.msra.mxu0 0.0
      %3223 = vmatprep.subr.mxu0 0.0
      %3224 = vmatpush2.msra.mxu0 0.0
      %3225 = vmatprep.subr.mxu0 0.0
      %3226 = vmatpush2.msra.mxu0 0.0
      %3227 = vmatprep.subr.mxu0 0.0
      %3228 = vmatpush2.msra.mxu0 0.0
      %3229 = vmatprep.subr.mxu0 0.0
      %3230 = vmatpush2.msra.mxu0 0.0
      %3231 = vmatprep.subr.mxu0 0.0
      %3232 = vmatpush2.msra.mxu0 0.0
      %3233 = vmatprep.subr.mxu0 0.0
      %3234 = vmatpush2.msra.mxu0 0.0
      %3235 = vmatprep.subr.mxu0 0.0
      %3236 = vmatpush2.msra.mxu0 0.0
      %3237 = vmatprep.subr.mxu0 0.0
      %3238 = vmatpush2.msra.mxu0 0.0
      %3239 = vmatprep.subr.mxu0 0.0
      %3240 = vmatpush2.msra.mxu0 0.0
      %3241 = vmatprep.subr.mxu0 0.0
      %3242 = vmatpush2.msra.mxu0 0.0
      %3243 = vmatprep.mubr.f32.mxu0 0.0
      %3244 = vmatmul.mubr.f32.gmra.mxu0 %v3132
      %v3245 = vpop.f32.mrf.mxu0
      %v3246 = vadd.f32 0.0, %v3245
      %v3247 = vpop.f32.mrf.mxu0
      %3248 = vmatprep.mubr.f32.mxu0 0.0
      %3249 = vmatmul.mubr.f32.gmra.mxu0 %v3135
      %v3250 = vpop.f32.mrf.mxu0
      %v3251 = vadd.f32 0.0, %v3250
      %v3252 = vpop.f32.mrf.mxu0
      %3253 = vmatprep.mubr.f32.mxu0 0.0
      %3254 = vmatmul.mubr.f32.gmra.mxu0 %v3138
      %v3255 = vpop.f32.mrf.mxu0
      %v3256 = vadd.f32 0.0, %v3255
      %v3257 = vpop.f32.mrf.mxu0
      %3258 = vmatprep.mubr.f32.mxu0 0.0
      %3259 = vmatmul.mubr.f32.gmra.mxu0 %v3141
      %v3260 = vpop.f32.mrf.mxu0
      %v3261 = vadd.f32 0.0, %v3260
      %v3262 = vpop.f32.mrf.mxu0
      %3263 = vmatprep.mubr.f32.mxu0 0.0
      %3264 = vmatmul.mubr.f32.gmra.mxu0 %v3144
      %v3265 = vpop.f32.mrf.mxu0
      %v3266 = vadd.f32 0.0, %v3265
      %v3267 = vpop.f32.mrf.mxu0
      %3268 = vmatprep.mubr.f32.mxu0 0.0
      %3269 = vmatmul.mubr.f32.gmra.mxu0 %v3147
      %v3270 = vpop.f32.mrf.mxu0
      %v3271 = vadd.f32 0.0, %v3270
      %v3272 = vpop.f32.mrf.mxu0
      %3273 = vmatprep.mubr.f32.mxu0 0.0
      %3274 = vmatmul.mubr.f32.gmra.mxu0 %v3150
      %v3275 = vpop.f32.mrf.mxu0
      %v3276 = vadd.f32 0.0, %v3275
      %v3277 = vpop.f32.mrf.mxu0
      %3278 = vmatprep.mubr.f32.mxu0 0.0
      %3279 = vmatmul.mubr.f32.gmra.mxu0 %v3153
      %v3280 = vpop.f32.mrf.mxu0
      %v3281 = vadd.f32 0.0, %v3280
      %v3282 = vpop.f32.mrf.mxu0
      %3283 = vmatprep.mubr.f32.mxu0 0.0
      %3284 = vmatmul.mubr.f32.gmra.mxu0 %v3156
      %v3285 = vpop.f32.mrf.mxu0
      %v3286 = vadd.f32 0.0, %v3285
      %v3287 = vpop.f32.mrf.mxu0
      %3288 = vmatprep.mubr.f32.mxu0 0.0
      %3289 = vmatmul.mubr.f32.gmra.mxu0 %v3159
      %v3290 = vpop.f32.mrf.mxu0
      %v3291 = vadd.f32 0.0, %v3290
      %v3292 = vpop.f32.mrf.mxu0
      %3293 = vmatprep.mubr.f32.mxu0 0.0
      %3294 = vmatmul.mubr.f32.gmra.mxu0 %v3162
      %v3295 = vpop.f32.mrf.mxu0
      %v3296 = vadd.f32 0.0, %v3295
      %v3297 = vpop.f32.mrf.mxu0
      %3298 = vmatprep.mubr.f32.mxu0 0.0
      %3299 = vmatmul.mubr.f32.gmra.mxu0 %v3165
      %v3300 = vpop.f32.mrf.mxu0
      %v3301 = vadd.f32 0.0, %v3300
      %v3302 = vpop.f32.mrf.mxu0
      %3303 = vmatprep.mubr.f32.mxu0 0.0
      %3304 = vmatmul.mubr.f32.gmra.mxu0 %v3168
      %v3305 = vpop.f32.mrf.mxu0
      %v3306 = vadd.f32 0.0, %v3305
      %v3307 = vpop.f32.mrf.mxu0
      %3308 = vmatprep.mubr.f32.mxu0 0.0
      %3309 = vmatmul.mubr.f32.gmra.mxu0 %v3171
      %v3310 = vpop.f32.mrf.mxu0
      %v3311 = vadd.f32 0.0, %v3310
      %v3312 = vpop.f32.mrf.mxu0
      %3313 = vmatprep.mubr.f32.mxu0 0.0
      %3314 = vmatmul.mubr.f32.gmra.mxu0 %v3174
      %v3315 = vpop.f32.mrf.mxu0
      %v3316 = vadd.f32 0.0, %v3315
      %v3317 = vpop.f32.mrf.mxu0
      %3318 = vmatprep.mubr.f32.mxu0 0.0
      %3319 = vmatmul.mubr.f32.gmra.mxu0 %v3177
      %v3320 = vpop.f32.mrf.mxu0
      %v3321 = vadd.f32 0.0, %v3320
      %v3322 = vpop.f32.mrf.mxu0
      %3323 = vdwg.mxu0
      %v3324 = vadd.f32 %v2649, %v3246
      %v3325 = vadd.f32 %v2650, %v3251
      %v3326 = vadd.f32 %v2651, %v3256
      %v3327 = vadd.f32 %v2652, %v3261
      %v3328 = vadd.f32 %v2653, %v3266
      %v3329 = vadd.f32 %v2654, %v3271
      %v3330 = vadd.f32 %v2655, %v3276
      %v3331 = vadd.f32 %v2656, %v3281
      %v3332 = vadd.f32 %v2657, %v3286
      %v3333 = vadd.f32 %v2658, %v3291
      %v3334 = vadd.f32 %v2659, %v3296
      %v3335 = vadd.f32 %v2660, %v3301
      %v3336 = vadd.f32 %v2661, %v3306
      %v3337 = vadd.f32 %v2662, %v3311
      %v3338 = vadd.f32 %v2663, %v3316
      %v3339 = vadd.f32 %v2664, %v3321
      %v3340 = vtanh.pop %v3324
      %v3341 = vtanh.pop %v3325
      %v3342 = vtanh.pop %v3326
      %v3343 = vtanh.pop %v3327
      %v3344 = vtanh.pop %v3328
      %v3345 = vtanh.pop %v3329
      %v3346 = vtanh.pop %v3330
      %v3347 = vtanh.pop %v3331
      %v3348 = vtanh.pop %v3332
      %v3349 = vtanh.pop %v3333
      %v3350 = vtanh.pop %v3334
      %v3351 = vtanh.pop %v3335
      %v3352 = vtanh.pop %v3336
      %v3353 = vtanh.pop %v3337
      %v3354 = vtanh.pop %v3338
      %v3355 = vtanh.pop %v3339
      %v3356 = vsub.f32 1.0, %v2890
      %v3357 = vsub.f32 1.0, %v2891
      %v3358 = vsub.f32 1.0, %v2892
      %v3359 = vsub.f32 1.0, %v2893
      %v3360 = vsub.f32 1.0, %v2894
      %v3361 = vsub.f32 1.0, %v2895
      %v3362 = vsub.f32 1.0, %v2896
      %v3363 = vsub.f32 1.0, %v2897
      %v3364 = vsub.f32 1.0, %v2898
      %v3365 = vsub.f32 1.0, %v2899
      %v3366 = vsub.f32 1.0, %v2900
      %v3367 = vsub.f32 1.0, %v2901
      %v3368 = vsub.f32 1.0, %v2902
      %v3369 = vsub.f32 1.0, %v2903
      %v3370 = vsub.f32 1.0, %v2904
      %v3371 = vsub.f32 1.0, %v2905
      %v3372 = vmul.f32 %v3356, %v3340
      %v3373 = vmul.f32 %v3357, %v3341
      %v3374 = vmul.f32 %v3358, %v3342
      %v3375 = vmul.f32 %v3359, %v3343
      %v3376 = vmul.f32 %v3360, %v3344
      %v3377 = vmul.f32 %v3361, %v3345
      %v3378 = vmul.f32 %v3362, %v3346
      %v3379 = vmul.f32 %v3363, %v3347
      %v3380 = vmul.f32 %v3364, %v3348
      %v3381 = vmul.f32 %v3365, %v3349
      %v3382 = vmul.f32 %v3366, %v3350
      %v3383 = vmul.f32 %v3367, %v3351
      %v3384 = vmul.f32 %v3368, %v3352
      %v3385 = vmul.f32 %v3369, %v3353
      %v3386 = vmul.f32 %v3370, %v3354
      %v3387 = vmul.f32 %v3371, %v3355
      %v3388 = vadd.f32 %v3372, %v2665
      %v3389 = vadd.f32 %v3373, %v2666
      %v3390 = vadd.f32 %v3374, %v2667
      %v3391 = vadd.f32 %v3375, %v2668
      %v3392 = vadd.f32 %v3376, %v2669
      %v3393 = vadd.f32 %v3377, %v2670
      %v3394 = vadd.f32 %v3378, %v2671
      %v3395 = vadd.f32 %v3379, %v2672
      %v3396 = vadd.f32 %v3380, %v2673
      %v3397 = vadd.f32 %v3381, %v2674
      %v3398 = vadd.f32 %v3382, %v2675
      %v3399 = vadd.f32 %v3383, %v2676
      %v3400 = vadd.f32 %v3384, %v2677
      %v3401 = vadd.f32 %v3385, %v2678
      %v3402 = vadd.f32 %v3386, %v2679
      %v3403 = vadd.f32 %v3387, %v2680
      %s3404 = scalar_lea.vmem %s3, 96
      %v3405 = vld [vmem:[%s3404] sm:$0xff]
      %v3406 = vld [vmem:[%s3404 + $0x8] sm:$0xff]
      %v3407 = vld [vmem:[%s3404 + $0x10] sm:$0xff]
      %v3408 = vld [vmem:[%s3404 + $0x18] sm:$0xff]
      %s3409 = scalar_lea.vmem %s4, 3
      %v3410 = vld [vmem:[%s3409] sm:$0x1]
      %v3412 = vlaneseq
      %v3413 = vshrl.u32 %v3412, 7
      %v3414 = vsub.s32 0, %v3413
      %v3415 = vrot.slane %v3410, %v3414
      %v3418 = vsel %vm533, %v3388, 0
      %v3421 = vsel %vm533, %v3389, 0
      %v3424 = vsel %vm533, %v3390, 0
      %v3427 = vsel %vm533, %v3391, 0
      %v3430 = vsel %vm533, %v3392, 0
      %v3433 = vsel %vm533, %v3393, 0
      %v3436 = vsel %vm533, %v3394, 0
      %v3439 = vsel %vm533, %v3395, 0
      %v3442 = vsel %vm533, %v3396, 0
      %v3445 = vsel %vm533, %v3397, 0
      %v3448 = vsel %vm533, %v3398, 0
      %v3451 = vsel %vm533, %v3399, 0
      %v3454 = vsel %vm533, %v3400, 0
      %v3457 = vsel %vm533, %v3401, 0
      %v3460 = vsel %vm533, %v3402, 0
      %v3463 = vsel %vm533, %v3403, 0
      %3465 = vmatprep.subr.mxu0 0.0
      %3466 = vmatpush1.msra.mxu0 0.0
      %3467 = vmatprep.subr.mxu0 0.0
      %3468 = vmatpush1.msra.mxu0 0.0
      %3469 = vmatprep.subr.mxu0 0.0
      %3470 = vmatpush1.msra.mxu0 0.0
      %3471 = vmatprep.subr.mxu0 0.0
      %3472 = vmatpush1.msra.mxu0 0.0
      %3473 = vmatprep.subr.mxu0 0.0
      %3474 = vmatpush1.msra.mxu0 0.0
      %3475 = vmatprep.subr.mxu0 0.0
      %3476 = vmatpush1.msra.mxu0 0.0
      %3477 = vmatprep.subr.mxu0 0.0
      %3478 = vmatpush1.msra.mxu0 0.0
      %3479 = vmatprep.subr.mxu0 0.0
      %3480 = vmatpush1.msra.mxu0 0.0
      %3481 = vmatprep.subr.mxu0 0.0
      %3482 = vmatpush1.msra.mxu0 0.0
      %3483 = vmatprep.subr.mxu0 0.0
      %3484 = vmatpush1.msra.mxu0 0.0
      %3485 = vmatprep.subr.mxu0 0.0
      %3486 = vmatpush1.msra.mxu0 0.0
      %3487 = vmatprep.subr.mxu0 0.0
      %3488 = vmatpush1.msra.mxu0 0.0
      %3489 = vmatprep.subr.mxu0 0.0
      %3490 = vmatpush1.msra.mxu0 %v3408
      %3491 = vmatprep.subr.mxu0 0.0
      %3492 = vmatpush1.msra.mxu0 %v3407
      %3493 = vmatprep.subr.mxu0 0.0
      %3494 = vmatpush1.msra.mxu0 %v3406
      %3495 = vmatprep.subr.mxu0 0.0
      %3496 = vmatpush1.msra.mxu0 %v3405
      %3497 = vmatprep.subr.mxu0 0.0
      %3498 = vmatpush2.msra.mxu0 0.0
      %3499 = vmatprep.subr.mxu0 0.0
      %3500 = vmatpush2.msra.mxu0 0.0
      %3501 = vmatprep.subr.mxu0 0.0
      %3502 = vmatpush2.msra.mxu0 0.0
      %3503 = vmatprep.subr.mxu0 0.0
      %3504 = vmatpush2.msra.mxu0 0.0
      %3505 = vmatprep.subr.mxu0 0.0
      %3506 = vmatpush2.msra.mxu0 0.0
      %3507 = vmatprep.subr.mxu0 0.0
      %3508 = vmatpush2.msra.mxu0 0.0
      %3509 = vmatprep.subr.mxu0 0.0
      %3510 = vmatpush2.msra.mxu0 0.0
      %3511 = vmatprep.subr.mxu0 0.0
      %3512 = vmatpush2.msra.mxu0 0.0
      %3513 = vmatprep.subr.mxu0 0.0
      %3514 = vmatpush2.msra.mxu0 0.0
      %3515 = vmatprep.subr.mxu0 0.0
      %3516 = vmatpush2.msra.mxu0 0.0
      %3517 = vmatprep.subr.mxu0 0.0
      %3518 = vmatpush2.msra.mxu0 0.0
      %3519 = vmatprep.subr.mxu0 0.0
      %3520 = vmatpush2.msra.mxu0 0.0
      %3521 = vmatprep.subr.mxu0 0.0
      %3522 = vmatpush2.msra.mxu0 0.0
      %3523 = vmatprep.subr.mxu0 0.0
      %3524 = vmatpush2.msra.mxu0 0.0
      %3525 = vmatprep.subr.mxu0 0.0
      %3526 = vmatpush2.msra.mxu0 0.0
      %3527 = vmatprep.subr.mxu0 0.0
      %3528 = vmatpush2.msra.mxu0 0.0
      %3529 = vmatprep.mubr.f32.mxu0 0.0
      %3530 = vmatmul.mubr.f32.gmra.mxu0 %v3418
      %v3531 = vpop.f32.mrf.mxu0
      %v3532 = vadd.f32 %v3415, %v3531
      %v3533 = vpop.f32.mrf.mxu0
      %3534 = vmatprep.mubr.f32.mxu0 0.0
      %3535 = vmatmul.mubr.f32.gmra.mxu0 %v3421
      %v3536 = vpop.f32.mrf.mxu0
      %v3537 = vadd.f32 %v3415, %v3536
      %v3538 = vpop.f32.mrf.mxu0
      %3539 = vmatprep.mubr.f32.mxu0 0.0
      %3540 = vmatmul.mubr.f32.gmra.mxu0 %v3424
      %v3541 = vpop.f32.mrf.mxu0
      %v3542 = vadd.f32 %v3415, %v3541
      %v3543 = vpop.f32.mrf.mxu0
      %3544 = vmatprep.mubr.f32.mxu0 0.0
      %3545 = vmatmul.mubr.f32.gmra.mxu0 %v3427
      %v3546 = vpop.f32.mrf.mxu0
      %v3547 = vadd.f32 %v3415, %v3546
      %v3548 = vpop.f32.mrf.mxu0
      %3549 = vmatprep.mubr.f32.mxu0 0.0
      %3550 = vmatmul.mubr.f32.gmra.mxu0 %v3430
      %v3551 = vpop.f32.mrf.mxu0
      %v3552 = vadd.f32 %v3415, %v3551
      %v3553 = vpop.f32.mrf.mxu0
      %3554 = vmatprep.mubr.f32.mxu0 0.0
      %3555 = vmatmul.mubr.f32.gmra.mxu0 %v3433
      %v3556 = vpop.f32.mrf.mxu0
      %v3557 = vadd.f32 %v3415, %v3556
      %v3558 = vpop.f32.mrf.mxu0
      %3559 = vmatprep.mubr.f32.mxu0 0.0
      %3560 = vmatmul.mubr.f32.gmra.mxu0 %v3436
      %v3561 = vpop.f32.mrf.mxu0
      %v3562 = vadd.f32 %v3415, %v3561
      %v3563 = vpop.f32.mrf.mxu0
      %3564 = vmatprep.mubr.f32.mxu0 0.0
      %3565 = vmatmul.mubr.f32.gmra.mxu0 %v3439
      %v3566 = vpop.f32.mrf.mxu0
      %v3567 = vadd.f32 %v3415, %v3566
      %v3568 = vpop.f32.mrf.mxu0
      %3569 = vmatprep.mubr.f32.mxu0 0.0
      %3570 = vmatmul.mubr.f32.gmra.mxu0 %v3442
      %v3571 = vpop.f32.mrf.mxu0
      %v3572 = vadd.f32 %v3415, %v3571
      %v3573 = vpop.f32.mrf.mxu0
      %3574 = vmatprep.mubr.f32.mxu0 0.0
      %3575 = vmatmul.mubr.f32.gmra.mxu0 %v3445
      %v3576 = vpop.f32.mrf.mxu0
      %v3577 = vadd.f32 %v3415, %v3576
      %v3578 = vpop.f32.mrf.mxu0
      %3579 = vmatprep.mubr.f32.mxu0 0.0
      %3580 = vmatmul.mubr.f32.gmra.mxu0 %v3448
      %v3581 = vpop.f32.mrf.mxu0
      %v3582 = vadd.f32 %v3415, %v3581
      %v3583 = vpop.f32.mrf.mxu0
      %3584 = vmatprep.mubr.f32.mxu0 0.0
      %3585 = vmatmul.mubr.f32.gmra.mxu0 %v3451
      %v3586 = vpop.f32.mrf.mxu0
      %v3587 = vadd.f32 %v3415, %v3586
      %v3588 = vpop.f32.mrf.mxu0
      %3589 = vmatprep.mubr.f32.mxu0 0.0
      %3590 = vmatmul.mubr.f32.gmra.mxu0 %v3454
      %v3591 = vpop.f32.mrf.mxu0
      %v3592 = vadd.f32 %v3415, %v3591
      %v3593 = vpop.f32.mrf.mxu0
      %3594 = vmatprep.mubr.f32.mxu0 0.0
      %3595 = vmatmul.mubr.f32.gmra.mxu0 %v3457
      %v3596 = vpop.f32.mrf.mxu0
      %v3597 = vadd.f32 %v3415, %v3596
      %v3598 = vpop.f32.mrf.mxu0
      %3599 = vmatprep.mubr.f32.mxu0 0.0
      %3600 = vmatmul.mubr.f32.gmra.mxu0 %v3460
      %v3601 = vpop.f32.mrf.mxu0
      %v3602 = vadd.f32 %v3415, %v3601
      %v3603 = vpop.f32.mrf.mxu0
      %3604 = vmatprep.mubr.f32.mxu0 0.0
      %3605 = vmatmul.mubr.f32.gmra.mxu0 %v3463
      %v3606 = vpop.f32.mrf.mxu0
      %v3607 = vadd.f32 %v3415, %v3606
      %v3608 = vpop.f32.mrf.mxu0
      %3609 = vdwg.mxu0
      %v3610 = vadd.f32 %v3532, %v3415
      %v3611 = vadd.f32 %v3537, %v3415
      %v3612 = vadd.f32 %v3542, %v3415
      %v3613 = vadd.f32 %v3547, %v3415
      %v3614 = vadd.f32 %v3552, %v3415
      %v3615 = vadd.f32 %v3557, %v3415
      %v3616 = vadd.f32 %v3562, %v3415
      %v3617 = vadd.f32 %v3567, %v3415
      %v3618 = vadd.f32 %v3572, %v3415
      %v3619 = vadd.f32 %v3577, %v3415
      %v3620 = vadd.f32 %v3582, %v3415
      %v3621 = vadd.f32 %v3587, %v3415
      %v3622 = vadd.f32 %v3592, %v3415
      %v3623 = vadd.f32 %v3597, %v3415
      %v3624 = vadd.f32 %v3602, %v3415
      %v3625 = vadd.f32 %v3607, %v3415
      %v3626 = vtanh.pop %v3532
      %v3627 = vtanh.pop %v3537
      %v3628 = vtanh.pop %v3542
      %v3629 = vtanh.pop %v3547
      %v3630 = vtanh.pop %v3552
      %v3631 = vtanh.pop %v3557
      %v3632 = vtanh.pop %v3562
      %v3633 = vtanh.pop %v3567
      %v3634 = vtanh.pop %v3572
      %v3635 = vtanh.pop %v3577
      %v3636 = vtanh.pop %v3582
      %v3637 = vtanh.pop %v3587
      %v3638 = vtanh.pop %v3592
      %v3639 = vtanh.pop %v3597
      %v3640 = vtanh.pop %v3602
      %v3641 = vtanh.pop %v3607
      %v3643 = vsel %vm533, %v3626, 0
      %v3646 = vsel %vm533, %v3627, 0
      %v3649 = vsel %vm533, %v3628, 0
      %v3652 = vsel %vm533, %v3629, 0
      %v3655 = vsel %vm533, %v3630, 0
      %v3658 = vsel %vm533, %v3631, 0
      %v3661 = vsel %vm533, %v3632, 0
      %v3664 = vsel %vm533, %v3633, 0
      %v3667 = vsel %vm533, %v3634, 0
      %v3670 = vsel %vm533, %v3635, 0
      %v3673 = vsel %vm533, %v3636, 0
      %v3676 = vsel %vm533, %v3637, 0
      %v3679 = vsel %vm533, %v3638, 0
      %v3682 = vsel %vm533, %v3639, 0
      %v3685 = vsel %vm533, %v3640, 0
      %v3688 = vsel %vm533, %v3641, 0
      %3690 = vmatprep.subr.mxu0 0.0
      %3691 = vmatpush1.msra.mxu0 0.0
      %3692 = vmatprep.subr.mxu0 0.0
      %3693 = vmatpush1.msra.mxu0 0.0
      %3694 = vmatprep.subr.mxu0 0.0
      %3695 = vmatpush1.msra.mxu0 0.0
      %3696 = vmatprep.subr.mxu0 0.0
      %3697 = vmatpush1.msra.mxu0 0.0
      %3698 = vmatprep.subr.mxu0 0.0
      %3699 = vmatpush1.msra.mxu0 0.0
      %3700 = vmatprep.subr.mxu0 0.0
      %3701 = vmatpush1.msra.mxu0 0.0
      %3702 = vmatprep.subr.mxu0 0.0
      %3703 = vmatpush1.msra.mxu0 0.0
      %3704 = vmatprep.subr.mxu0 0.0
      %3705 = vmatpush1.msra.mxu0 0.0
      %3706 = vmatprep.subr.mxu0 0.0
      %3707 = vmatpush1.msra.mxu0 0.0
      %3708 = vmatprep.subr.mxu0 0.0
      %3709 = vmatpush1.msra.mxu0 0.0
      %3710 = vmatprep.subr.mxu0 0.0
      %3711 = vmatpush1.msra.mxu0 0.0
      %3712 = vmatprep.subr.mxu0 0.0
      %3713 = vmatpush1.msra.mxu0 0.0
      %3714 = vmatprep.subr.mxu0 0.0
      %3715 = vmatpush1.msra.mxu0 %v3408
      %3716 = vmatprep.subr.mxu0 0.0
      %3717 = vmatpush1.msra.mxu0 %v3407
      %3718 = vmatprep.subr.mxu0 0.0
      %3719 = vmatpush1.msra.mxu0 %v3406
      %3720 = vmatprep.subr.mxu0 0.0
      %3721 = vmatpush1.msra.mxu0 %v3405
      %3722 = vmatprep.subr.mxu0 0.0
      %3723 = vmatpush2.msra.mxu0 0.0
      %3724 = vmatprep.subr.mxu0 0.0
      %3725 = vmatpush2.msra.mxu0 0.0
      %3726 = vmatprep.subr.mxu0 0.0
      %3727 = vmatpush2.msra.mxu0 0.0
      %3728 = vmatprep.subr.mxu0 0.0
      %3729 = vmatpush2.msra.mxu0 0.0
      %3730 = vmatprep.subr.mxu0 0.0
      %3731 = vmatpush2.msra.mxu0 0.0
      %3732 = vmatprep.subr.mxu0 0.0
      %3733 = vmatpush2.msra.mxu0 0.0
      %3734 = vmatprep.subr.mxu0 0.0
      %3735 = vmatpush2.msra.mxu0 0.0
      %3736 = vmatprep.subr.mxu0 0.0
      %3737 = vmatpush2.msra.mxu0 0.0
      %3738 = vmatprep.subr.mxu0 0.0
      %3739 = vmatpush2.msra.mxu0 0.0
      %3740 = vmatprep.subr.mxu0 0.0
      %3741 = vmatpush2.msra.mxu0 0.0
      %3742 = vmatprep.subr.mxu0 0.0
      %3743 = vmatpush2.msra.mxu0 0.0
      %3744 = vmatprep.subr.mxu0 0.0
      %3745 = vmatpush2.msra.mxu0 0.0
      %3746 = vmatprep.subr.mxu0 0.0
      %3747 = vmatpush2.msra.mxu0 0.0
      %3748 = vmatprep.subr.mxu0 0.0
      %3749 = vmatpush2.msra.mxu0 0.0
      %3750 = vmatprep.subr.mxu0 0.0
      %3751 = vmatpush2.msra.mxu0 0.0
      %3752 = vmatprep.subr.mxu0 0.0
      %3753 = vmatpush2.msra.mxu0 0.0
      %3754 = vmatprep.mubr.f32.mxu0 0.0
      %3755 = vmatmul.mubr.f32.gmra.mxu0 %v3643
      %v3756 = vpop.f32.mrf.mxu0
      %v3757 = vadd.f32 0.0, %v3756
      %v3758 = vpop.f32.mrf.mxu0
      %3759 = vmatprep.mubr.f32.mxu0 0.0
      %3760 = vmatmul.mubr.f32.gmra.mxu0 %v3646
      %v3761 = vpop.f32.mrf.mxu0
      %v3762 = vadd.f32 0.0, %v3761
      %v3763 = vpop.f32.mrf.mxu0
      %3764 = vmatprep.mubr.f32.mxu0 0.0
      %3765 = vmatmul.mubr.f32.gmra.mxu0 %v3649
      %v3766 = vpop.f32.mrf.mxu0
      %v3767 = vadd.f32 0.0, %v3766
      %v3768 = vpop.f32.mrf.mxu0
      %3769 = vmatprep.mubr.f32.mxu0 0.0
      %3770 = vmatmul.mubr.f32.gmra.mxu0 %v3652
      %v3771 = vpop.f32.mrf.mxu0
      %v3772 = vadd.f32 0.0, %v3771
      %v3773 = vpop.f32.mrf.mxu0
      %3774 = vmatprep.mubr.f32.mxu0 0.0
      %3775 = vmatmul.mubr.f32.gmra.mxu0 %v3655
      %v3776 = vpop.f32.mrf.mxu0
      %v3777 = vadd.f32 0.0, %v3776
      %v3778 = vpop.f32.mrf.mxu0
      %3779 = vmatprep.mubr.f32.mxu0 0.0
      %3780 = vmatmul.mubr.f32.gmra.mxu0 %v3658
      %v3781 = vpop.f32.mrf.mxu0
      %v3782 = vadd.f32 0.0, %v3781
      %v3783 = vpop.f32.mrf.mxu0
      %3784 = vmatprep.mubr.f32.mxu0 0.0
      %3785 = vmatmul.mubr.f32.gmra.mxu0 %v3661
      %v3786 = vpop.f32.mrf.mxu0
      %v3787 = vadd.f32 0.0, %v3786
      %v3788 = vpop.f32.mrf.mxu0
      %3789 = vmatprep.mubr.f32.mxu0 0.0
      %3790 = vmatmul.mubr.f32.gmra.mxu0 %v3664
      %v3791 = vpop.f32.mrf.mxu0
      %v3792 = vadd.f32 0.0, %v3791
      %v3793 = vpop.f32.mrf.mxu0
      %3794 = vmatprep.mubr.f32.mxu0 0.0
      %3795 = vmatmul.mubr.f32.gmra.mxu0 %v3667
      %v3796 = vpop.f32.mrf.mxu0
      %v3797 = vadd.f32 0.0, %v3796
      %v3798 = vpop.f32.mrf.mxu0
      %3799 = vmatprep.mubr.f32.mxu0 0.0
      %3800 = vmatmul.mubr.f32.gmra.mxu0 %v3670
      %v3801 = vpop.f32.mrf.mxu0
      %v3802 = vadd.f32 0.0, %v3801
      %v3803 = vpop.f32.mrf.mxu0
      %3804 = vmatprep.mubr.f32.mxu0 0.0
      %3805 = vmatmul.mubr.f32.gmra.mxu0 %v3673
      %v3806 = vpop.f32.mrf.mxu0
      %v3807 = vadd.f32 0.0, %v3806
      %v3808 = vpop.f32.mrf.mxu0
      %3809 = vmatprep.mubr.f32.mxu0 0.0
      %3810 = vmatmul.mubr.f32.gmra.mxu0 %v3676
      %v3811 = vpop.f32.mrf.mxu0
      %v3812 = vadd.f32 0.0, %v3811
      %v3813 = vpop.f32.mrf.mxu0
      %3814 = vmatprep.mubr.f32.mxu0 0.0
      %3815 = vmatmul.mubr.f32.gmra.mxu0 %v3679
      %v3816 = vpop.f32.mrf.mxu0
      %v3817 = vadd.f32 0.0, %v3816
      %v3818 = vpop.f32.mrf.mxu0
      %3819 = vmatprep.mubr.f32.mxu0 0.0
      %3820 = vmatmul.mubr.f32.gmra.mxu0 %v3682
      %v3821 = vpop.f32.mrf.mxu0
      %v3822 = vadd.f32 0.0, %v3821
      %v3823 = vpop.f32.mrf.mxu0
      %3824 = vmatprep.mubr.f32.mxu0 0.0
      %3825 = vmatmul.mubr.f32.gmra.mxu0 %v3685
      %v3826 = vpop.f32.mrf.mxu0
      %v3827 = vadd.f32 0.0, %v3826
      %v3828 = vpop.f32.mrf.mxu0
      %3829 = vmatprep.mubr.f32.mxu0 0.0
      %3830 = vmatmul.mubr.f32.gmra.mxu0 %v3688
      %v3831 = vpop.f32.mrf.mxu0
      %v3832 = vadd.f32 0.0, %v3831
      %v3833 = vpop.f32.mrf.mxu0
      %3834 = vdwg.mxu0
      %v3835 = vadd.f32 %v3610, %v3757
      %v3836 = vadd.f32 %v3611, %v3762
      %v3837 = vadd.f32 %v3612, %v3767
      %v3838 = vadd.f32 %v3613, %v3772
      %v3839 = vadd.f32 %v3614, %v3777
      %v3840 = vadd.f32 %v3615, %v3782
      %v3841 = vadd.f32 %v3616, %v3787
      %v3842 = vadd.f32 %v3617, %v3792
      %v3843 = vadd.f32 %v3618, %v3797
      %v3844 = vadd.f32 %v3619, %v3802
      %v3845 = vadd.f32 %v3620, %v3807
      %v3846 = vadd.f32 %v3621, %v3812
      %v3847 = vadd.f32 %v3622, %v3817
      %v3848 = vadd.f32 %v3623, %v3822
      %v3849 = vadd.f32 %v3624, %v3827
      %v3850 = vadd.f32 %v3625, %v3832
      %v3851 = vtanh.pop %v3835
      %v3852 = vtanh.pop %v3836
      %v3853 = vtanh.pop %v3837
      %v3854 = vtanh.pop %v3838
      %v3855 = vtanh.pop %v3839
      %v3856 = vtanh.pop %v3840
      %v3857 = vtanh.pop %v3841
      %v3858 = vtanh.pop %v3842
      %v3859 = vtanh.pop %v3843
      %v3860 = vtanh.pop %v3844
      %v3861 = vtanh.pop %v3845
      %v3862 = vtanh.pop %v3846
      %v3863 = vtanh.pop %v3847
      %v3864 = vtanh.pop %v3848
      %v3865 = vtanh.pop %v3849
      %v3866 = vtanh.pop %v3850
      %v3868 = vsel %vm533, %v3851, 0
      %v3871 = vsel %vm533, %v3852, 0
      %v3874 = vsel %vm533, %v3853, 0
      %v3877 = vsel %vm533, %v3854, 0
      %v3880 = vsel %vm533, %v3855, 0
      %v3883 = vsel %vm533, %v3856, 0
      %v3886 = vsel %vm533, %v3857, 0
      %v3889 = vsel %vm533, %v3858, 0
      %v3892 = vsel %vm533, %v3859, 0
      %v3895 = vsel %vm533, %v3860, 0
      %v3898 = vsel %vm533, %v3861, 0
      %v3901 = vsel %vm533, %v3862, 0
      %v3904 = vsel %vm533, %v3863, 0
      %v3907 = vsel %vm533, %v3864, 0
      %v3910 = vsel %vm533, %v3865, 0
      %v3913 = vsel %vm533, %v3866, 0
      %3915 = vmatprep.subr.mxu0 0.0
      %3916 = vmatpush1.msra.mxu0 0.0
      %3917 = vmatprep.subr.mxu0 0.0
      %3918 = vmatpush1.msra.mxu0 0.0
      %3919 = vmatprep.subr.mxu0 0.0
      %3920 = vmatpush1.msra.mxu0 0.0
      %3921 = vmatprep.subr.mxu0 0.0
      %3922 = vmatpush1.msra.mxu0 0.0
      %3923 = vmatprep.subr.mxu0 0.0
      %3924 = vmatpush1.msra.mxu0 0.0
      %3925 = vmatprep.subr.mxu0 0.0
      %3926 = vmatpush1.msra.mxu0 0.0
      %3927 = vmatprep.subr.mxu0 0.0
      %3928 = vmatpush1.msra.mxu0 0.0
      %3929 = vmatprep.subr.mxu0 0.0
      %3930 = vmatpush1.msra.mxu0 0.0
      %3931 = vmatprep.subr.mxu0 0.0
      %3932 = vmatpush1.msra.mxu0 0.0
      %3933 = vmatprep.subr.mxu0 0.0
      %3934 = vmatpush1.msra.mxu0 0.0
      %3935 = vmatprep.subr.mxu0 0.0
      %3936 = vmatpush1.msra.mxu0 0.0
      %3937 = vmatprep.subr.mxu0 0.0
      %3938 = vmatpush1.msra.mxu0 0.0
      %3939 = vmatprep.subr.mxu0 0.0
      %3940 = vmatpush1.msra.mxu0 %v3408
      %3941 = vmatprep.subr.mxu0 0.0
      %3942 = vmatpush1.msra.mxu0 %v3407
      %3943 = vmatprep.subr.mxu0 0.0
      %3944 = vmatpush1.msra.mxu0 %v3406
      %3945 = vmatprep.subr.mxu0 0.0
      %3946 = vmatpush1.msra.mxu0 %v3405
      %3947 = vmatprep.subr.mxu0 0.0
      %3948 = vmatpush2.msra.mxu0 0.0
      %3949 = vmatprep.subr.mxu0 0.0
      %3950 = vmatpush2.msra.mxu0 0.0
      %3951 = vmatprep.subr.mxu0 0.0
      %3952 = vmatpush2.msra.mxu0 0.0
      %3953 = vmatprep.subr.mxu0 0.0
      %3954 = vmatpush2.msra.mxu0 0.0
      %3955 = vmatprep.subr.mxu0 0.0
      %3956 = vmatpush2.msra.mxu0 0.0
      %3957 = vmatprep.subr.mxu0 0.0
      %3958 = vmatpush2.msra.mxu0 0.0
      %3959 = vmatprep.subr.mxu0 0.0
      %3960 = vmatpush2.msra.mxu0 0.0
      %3961 = vmatprep.subr.mxu0 0.0
      %3962 = vmatpush2.msra.mxu0 0.0
      %3963 = vmatprep.subr.mxu0 0.0
      %3964 = vmatpush2.msra.mxu0 0.0
      %3965 = vmatprep.subr.mxu0 0.0
      %3966 = vmatpush2.msra.mxu0 0.0
      %3967 = vmatprep.subr.mxu0 0.0
      %3968 = vmatpush2.msra.mxu0 0.0
      %3969 = vmatprep.subr.mxu0 0.0
      %3970 = vmatpush2.msra.mxu0 0.0
      %3971 = vmatprep.subr.mxu0 0.0
      %3972 = vmatpush2.msra.mxu0 0.0
      %3973 = vmatprep.subr.mxu0 0.0
      %3974 = vmatpush2.msra.mxu0 0.0
      %3975 = vmatprep.subr.mxu0 0.0
      %3976 = vmatpush2.msra.mxu0 0.0
      %3977 = vmatprep.subr.mxu0 0.0
      %3978 = vmatpush2.msra.mxu0 0.0
      %3979 = vmatprep.mubr.f32.mxu0 0.0
      %3980 = vmatmul.mubr.f32.gmra.mxu0 %v3868
      %v3981 = vpop.f32.mrf.mxu0
      %v3982 = vadd.f32 0.0, %v3981
      %v3983 = vpop.f32.mrf.mxu0
      %3984 = vmatprep.mubr.f32.mxu0 0.0
      %3985 = vmatmul.mubr.f32.gmra.mxu0 %v3871
      %v3986 = vpop.f32.mrf.mxu0
      %v3987 = vadd.f32 0.0, %v3986
      %v3988 = vpop.f32.mrf.mxu0
      %3989 = vmatprep.mubr.f32.mxu0 0.0
      %3990 = vmatmul.mubr.f32.gmra.mxu0 %v3874
      %v3991 = vpop.f32.mrf.mxu0
      %v3992 = vadd.f32 0.0, %v3991
      %v3993 = vpop.f32.mrf.mxu0
      %3994 = vmatprep.mubr.f32.mxu0 0.0
      %3995 = vmatmul.mubr.f32.gmra.mxu0 %v3877
      %v3996 = vpop.f32.mrf.mxu0
      %v3997 = vadd.f32 0.0, %v3996
      %v3998 = vpop.f32.mrf.mxu0
      %3999 = vmatprep.mubr.f32.mxu0 0.0
      %4000 = vmatmul.mubr.f32.gmra.mxu0 %v3880
      %v4001 = vpop.f32.mrf.mxu0
      %v4002 = vadd.f32 0.0, %v4001
      %v4003 = vpop.f32.mrf.mxu0
      %4004 = vmatprep.mubr.f32.mxu0 0.0
      %4005 = vmatmul.mubr.f32.gmra.mxu0 %v3883
      %v4006 = vpop.f32.mrf.mxu0
      %v4007 = vadd.f32 0.0, %v4006
      %v4008 = vpop.f32.mrf.mxu0
      %4009 = vmatprep.mubr.f32.mxu0 0.0
      %4010 = vmatmul.mubr.f32.gmra.mxu0 %v3886
      %v4011 = vpop.f32.mrf.mxu0
      %v4012 = vadd.f32 0.0, %v4011
      %v4013 = vpop.f32.mrf.mxu0
      %4014 = vmatprep.mubr.f32.mxu0 0.0
      %4015 = vmatmul.mubr.f32.gmra.mxu0 %v3889
      %v4016 = vpop.f32.mrf.mxu0
      %v4017 = vadd.f32 0.0, %v4016
      %v4018 = vpop.f32.mrf.mxu0
      %4019 = vmatprep.mubr.f32.mxu0 0.0
      %4020 = vmatmul.mubr.f32.gmra.mxu0 %v3892
      %v4021 = vpop.f32.mrf.mxu0
      %v4022 = vadd.f32 0.0, %v4021
      %v4023 = vpop.f32.mrf.mxu0
      %4024 = vmatprep.mubr.f32.mxu0 0.0
      %4025 = vmatmul.mubr.f32.gmra.mxu0 %v3895
      %v4026 = vpop.f32.mrf.mxu0
      %v4027 = vadd.f32 0.0, %v4026
      %v4028 = vpop.f32.mrf.mxu0
      %4029 = vmatprep.mubr.f32.mxu0 0.0
      %4030 = vmatmul.mubr.f32.gmra.mxu0 %v3898
      %v4031 = vpop.f32.mrf.mxu0
      %v4032 = vadd.f32 0.0, %v4031
      %v4033 = vpop.f32.mrf.mxu0
      %4034 = vmatprep.mubr.f32.mxu0 0.0
      %4035 = vmatmul.mubr.f32.gmra.mxu0 %v3901
      %v4036 = vpop.f32.mrf.mxu0
      %v4037 = vadd.f32 0.0, %v4036
      %v4038 = vpop.f32.mrf.mxu0
      %4039 = vmatprep.mubr.f32.mxu0 0.0
      %4040 = vmatmul.mubr.f32.gmra.mxu0 %v3904
      %v4041 = vpop.f32.mrf.mxu0
      %v4042 = vadd.f32 0.0, %v4041
      %v4043 = vpop.f32.mrf.mxu0
      %4044 = vmatprep.mubr.f32.mxu0 0.0
      %4045 = vmatmul.mubr.f32.gmra.mxu0 %v3907
      %v4046 = vpop.f32.mrf.mxu0
      %v4047 = vadd.f32 0.0, %v4046
      %v4048 = vpop.f32.mrf.mxu0
      %4049 = vmatprep.mubr.f32.mxu0 0.0
      %4050 = vmatmul.mubr.f32.gmra.mxu0 %v3910
      %v4051 = vpop.f32.mrf.mxu0
      %v4052 = vadd.f32 0.0, %v4051
      %v4053 = vpop.f32.mrf.mxu0
      %4054 = vmatprep.mubr.f32.mxu0 0.0
      %4055 = vmatmul.mubr.f32.gmra.mxu0 %v3913
      %v4056 = vpop.f32.mrf.mxu0
      %v4057 = vadd.f32 0.0, %v4056
      %v4058 = vpop.f32.mrf.mxu0
      %4059 = vdwg.mxu0
      %v4060 = vadd.f32 %v3610, %v3982
      %v4061 = vadd.f32 %v3611, %v3987
      %v4062 = vadd.f32 %v3612, %v3992
      %v4063 = vadd.f32 %v3613, %v3997
      %v4064 = vadd.f32 %v3614, %v4002
      %v4065 = vadd.f32 %v3615, %v4007
      %v4066 = vadd.f32 %v3616, %v4012
      %v4067 = vadd.f32 %v3617, %v4017
      %v4068 = vadd.f32 %v3618, %v4022
      %v4069 = vadd.f32 %v3619, %v4027
      %v4070 = vadd.f32 %v3620, %v4032
      %v4071 = vadd.f32 %v3621, %v4037
      %v4072 = vadd.f32 %v3622, %v4042
      %v4073 = vadd.f32 %v3623, %v4047
      %v4074 = vadd.f32 %v3624, %v4052
      %v4075 = vadd.f32 %v3625, %v4057
      %v4076 = vtanh.pop %v4060
      %v4077 = vtanh.pop %v4061
      %v4078 = vtanh.pop %v4062
      %v4079 = vtanh.pop %v4063
      %v4080 = vtanh.pop %v4064
      %v4081 = vtanh.pop %v4065
      %v4082 = vtanh.pop %v4066
      %v4083 = vtanh.pop %v4067
      %v4084 = vtanh.pop %v4068
      %v4085 = vtanh.pop %v4069
      %v4086 = vtanh.pop %v4070
      %v4087 = vtanh.pop %v4071
      %v4088 = vtanh.pop %v4072
      %v4089 = vtanh.pop %v4073
      %v4090 = vtanh.pop %v4074
      %v4091 = vtanh.pop %v4075
      %v4093 = vsel %vm533, %v4076, 0
      %v4096 = vsel %vm533, %v4077, 0
      %v4099 = vsel %vm533, %v4078, 0
      %v4102 = vsel %vm533, %v4079, 0
      %v4105 = vsel %vm533, %v4080, 0
      %v4108 = vsel %vm533, %v4081, 0
      %v4111 = vsel %vm533, %v4082, 0
      %v4114 = vsel %vm533, %v4083, 0
      %v4117 = vsel %vm533, %v4084, 0
      %v4120 = vsel %vm533, %v4085, 0
      %v4123 = vsel %vm533, %v4086, 0
      %v4126 = vsel %vm533, %v4087, 0
      %v4129 = vsel %vm533, %v4088, 0
      %v4132 = vsel %vm533, %v4089, 0
      %v4135 = vsel %vm533, %v4090, 0
      %v4138 = vsel %vm533, %v4091, 0
      %4140 = vmatprep.subr.mxu0 0.0
      %4141 = vmatpush1.msra.mxu0 0.0
      %4142 = vmatprep.subr.mxu0 0.0
      %4143 = vmatpush1.msra.mxu0 0.0
      %4144 = vmatprep.subr.mxu0 0.0
      %4145 = vmatpush1.msra.mxu0 0.0
      %4146 = vmatprep.subr.mxu0 0.0
      %4147 = vmatpush1.msra.mxu0 0.0
      %4148 = vmatprep.subr.mxu0 0.0
      %4149 = vmatpush1.msra.mxu0 0.0
      %4150 = vmatprep.subr.mxu0 0.0
      %4151 = vmatpush1.msra.mxu0 0.0
      %4152 = vmatprep.subr.mxu0 0.0
      %4153 = vmatpush1.msra.mxu0 0.0
      %4154 = vmatprep.subr.mxu0 0.0
      %4155 = vmatpush1.msra.mxu0 0.0
      %4156 = vmatprep.subr.mxu0 0.0
      %4157 = vmatpush1.msra.mxu0 0.0
      %4158 = vmatprep.subr.mxu0 0.0
      %4159 = vmatpush1.msra.mxu0 0.0
      %4160 = vmatprep.subr.mxu0 0.0
      %4161 = vmatpush1.msra.mxu0 0.0
      %4162 = vmatprep.subr.mxu0 0.0
      %4163 = vmatpush1.msra.mxu0 0.0
      %4164 = vmatprep.subr.mxu0 0.0
      %4165 = vmatpush1.msra.mxu0 %v3408
      %4166 = vmatprep.subr.mxu0 0.0
      %4167 = vmatpush1.msra.mxu0 %v3407
      %4168 = vmatprep.subr.mxu0 0.0
      %4169 = vmatpush1.msra.mxu0 %v3406
      %4170 = vmatprep.subr.mxu0 0.0
      %4171 = vmatpush1.msra.mxu0 %v3405
      %4172 = vmatprep.subr.mxu0 0.0
      %4173 = vmatpush2.msra.mxu0 0.0
      %4174 = vmatprep.subr.mxu0 0.0
      %4175 = vmatpush2.msra.mxu0 0.0
      %4176 = vmatprep.subr.mxu0 0.0
      %4177 = vmatpush2.msra.mxu0 0.0
      %4178 = vmatprep.subr.mxu0 0.0
      %4179 = vmatpush2.msra.mxu0 0.0
      %4180 = vmatprep.subr.mxu0 0.0
      %4181 = vmatpush2.msra.mxu0 0.0
      %4182 = vmatprep.subr.mxu0 0.0
      %4183 = vmatpush2.msra.mxu0 0.0
      %4184 = vmatprep.subr.mxu0 0.0
      %4185 = vmatpush2.msra.mxu0 0.0
      %4186 = vmatprep.subr.mxu0 0.0
      %4187 = vmatpush2.msra.mxu0 0.0
      %4188 = vmatprep.subr.mxu0 0.0
      %4189 = vmatpush2.msra.mxu0 0.0
      %4190 = vmatprep.subr.mxu0 0.0
      %4191 = vmatpush2.msra.mxu0 0.0
      %4192 = vmatprep.subr.mxu0 0.0
      %4193 = vmatpush2.msra.mxu0 0.0
      %4194 = vmatprep.subr.mxu0 0.0
      %4195 = vmatpush2.msra.mxu0 0.0
      %4196 = vmatprep.subr.mxu0 0.0
      %4197 = vmatpush2.msra.mxu0 0.0
      %4198 = vmatprep.subr.mxu0 0.0
      %4199 = vmatpush2.msra.mxu0 0.0
      %4200 = vmatprep.subr.mxu0 0.0
      %4201 = vmatpush2.msra.mxu0 0.0
      %4202 = vmatprep.subr.mxu0 0.0
      %4203 = vmatpush2.msra.mxu0 0.0
      %4204 = vmatprep.mubr.f32.mxu0 0.0
      %4205 = vmatmul.mubr.f32.gmra.mxu0 %v4093
      %v4206 = vpop.f32.mrf.mxu0
      %v4207 = vadd.f32 0.0, %v4206
      %v4208 = vpop.f32.mrf.mxu0
      %4209 = vmatprep.mubr.f32.mxu0 0.0
      %4210 = vmatmul.mubr.f32.gmra.mxu0 %v4096
      %v4211 = vpop.f32.mrf.mxu0
      %v4212 = vadd.f32 0.0, %v4211
      %v4213 = vpop.f32.mrf.mxu0
      %4214 = vmatprep.mubr.f32.mxu0 0.0
      %4215 = vmatmul.mubr.f32.gmra.mxu0 %v4099
      %v4216 = vpop.f32.mrf.mxu0
      %v4217 = vadd.f32 0.0, %v4216
      %v4218 = vpop.f32.mrf.mxu0
      %4219 = vmatprep.mubr.f32.mxu0 0.0
      %4220 = vmatmul.mubr.f32.gmra.mxu0 %v4102
      %v4221 = vpop.f32.mrf.mxu0
      %v4222 = vadd.f32 0.0, %v4221
      %v4223 = vpop.f32.mrf.mxu0
      %4224 = vmatprep.mubr.f32.mxu0 0.0
      %4225 = vmatmul.mubr.f32.gmra.mxu0 %v4105
      %v4226 = vpop.f32.mrf.mxu0
      %v4227 = vadd.f32 0.0, %v4226
      %v4228 = vpop.f32.mrf.mxu0
      %4229 = vmatprep.mubr.f32.mxu0 0.0
      %4230 = vmatmul.mubr.f32.gmra.mxu0 %v4108
      %v4231 = vpop.f32.mrf.mxu0
      %v4232 = vadd.f32 0.0, %v4231
      %v4233 = vpop.f32.mrf.mxu0
      %4234 = vmatprep.mubr.f32.mxu0 0.0
      %4235 = vmatmul.mubr.f32.gmra.mxu0 %v4111
      %v4236 = vpop.f32.mrf.mxu0
      %v4237 = vadd.f32 0.0, %v4236
      %v4238 = vpop.f32.mrf.mxu0
      %4239 = vmatprep.mubr.f32.mxu0 0.0
      %4240 = vmatmul.mubr.f32.gmra.mxu0 %v4114
      %v4241 = vpop.f32.mrf.mxu0
      %v4242 = vadd.f32 0.0, %v4241
      %v4243 = vpop.f32.mrf.mxu0
      %4244 = vmatprep.mubr.f32.mxu0 0.0
      %4245 = vmatmul.mubr.f32.gmra.mxu0 %v4117
      %v4246 = vpop.f32.mrf.mxu0
      %v4247 = vadd.f32 0.0, %v4246
      %v4248 = vpop.f32.mrf.mxu0
      %4249 = vmatprep.mubr.f32.mxu0 0.0
      %4250 = vmatmul.mubr.f32.gmra.mxu0 %v4120
      %v4251 = vpop.f32.mrf.mxu0
      %v4252 = vadd.f32 0.0, %v4251
      %v4253 = vpop.f32.mrf.mxu0
      %4254 = vmatprep.mubr.f32.mxu0 0.0
      %4255 = vmatmul.mubr.f32.gmra.mxu0 %v4123
      %v4256 = vpop.f32.mrf.mxu0
      %v4257 = vadd.f32 0.0, %v4256
      %v4258 = vpop.f32.mrf.mxu0
      %4259 = vmatprep.mubr.f32.mxu0 0.0
      %4260 = vmatmul.mubr.f32.gmra.mxu0 %v4126
      %v4261 = vpop.f32.mrf.mxu0
      %v4262 = vadd.f32 0.0, %v4261
      %v4263 = vpop.f32.mrf.mxu0
      %4264 = vmatprep.mubr.f32.mxu0 0.0
      %4265 = vmatmul.mubr.f32.gmra.mxu0 %v4129
      %v4266 = vpop.f32.mrf.mxu0
      %v4267 = vadd.f32 0.0, %v4266
      %v4268 = vpop.f32.mrf.mxu0
      %4269 = vmatprep.mubr.f32.mxu0 0.0
      %4270 = vmatmul.mubr.f32.gmra.mxu0 %v4132
      %v4271 = vpop.f32.mrf.mxu0
      %v4272 = vadd.f32 0.0, %v4271
      %v4273 = vpop.f32.mrf.mxu0
      %4274 = vmatprep.mubr.f32.mxu0 0.0
      %4275 = vmatmul.mubr.f32.gmra.mxu0 %v4135
      %v4276 = vpop.f32.mrf.mxu0
      %v4277 = vadd.f32 0.0, %v4276
      %v4278 = vpop.f32.mrf.mxu0
      %4279 = vmatprep.mubr.f32.mxu0 0.0
      %4280 = vmatmul.mubr.f32.gmra.mxu0 %v4138
      %v4281 = vpop.f32.mrf.mxu0
      %v4282 = vadd.f32 0.0, %v4281
      %v4283 = vpop.f32.mrf.mxu0
      %4284 = vdwg.mxu0
      %v4285 = vadd.f32 %v3610, %v4207
      %v4286 = vadd.f32 %v3611, %v4212
      %v4287 = vadd.f32 %v3612, %v4217
      %v4288 = vadd.f32 %v3613, %v4222
      %v4289 = vadd.f32 %v3614, %v4227
      %v4290 = vadd.f32 %v3615, %v4232
      %v4291 = vadd.f32 %v3616, %v4237
      %v4292 = vadd.f32 %v3617, %v4242
      %v4293 = vadd.f32 %v3618, %v4247
      %v4294 = vadd.f32 %v3619, %v4252
      %v4295 = vadd.f32 %v3620, %v4257
      %v4296 = vadd.f32 %v3621, %v4262
      %v4297 = vadd.f32 %v3622, %v4267
      %v4298 = vadd.f32 %v3623, %v4272
      %v4299 = vadd.f32 %v3624, %v4277
      %v4300 = vadd.f32 %v3625, %v4282
      %v4301 = vtanh.pop %v4285
      %v4302 = vtanh.pop %v4286
      %v4303 = vtanh.pop %v4287
      %v4304 = vtanh.pop %v4288
      %v4305 = vtanh.pop %v4289
      %v4306 = vtanh.pop %v4290
      %v4307 = vtanh.pop %v4291
      %v4308 = vtanh.pop %v4292
      %v4309 = vtanh.pop %v4293
      %v4310 = vtanh.pop %v4294
      %v4311 = vtanh.pop %v4295
      %v4312 = vtanh.pop %v4296
      %v4313 = vtanh.pop %v4297
      %v4314 = vtanh.pop %v4298
      %v4315 = vtanh.pop %v4299
      %v4316 = vtanh.pop %v4300
      %v4317 = vsub.f32 1.0, %v3851
      %v4318 = vsub.f32 1.0, %v3852
      %v4319 = vsub.f32 1.0, %v3853
      %v4320 = vsub.f32 1.0, %v3854
      %v4321 = vsub.f32 1.0, %v3855
      %v4322 = vsub.f32 1.0, %v3856
      %v4323 = vsub.f32 1.0, %v3857
      %v4324 = vsub.f32 1.0, %v3858
      %v4325 = vsub.f32 1.0, %v3859
      %v4326 = vsub.f32 1.0, %v3860
      %v4327 = vsub.f32 1.0, %v3861
      %v4328 = vsub.f32 1.0, %v3862
      %v4329 = vsub.f32 1.0, %v3863
      %v4330 = vsub.f32 1.0, %v3864
      %v4331 = vsub.f32 1.0, %v3865
      %v4332 = vsub.f32 1.0, %v3866
      %v4333 = vmul.f32 %v4317, %v4301
      %v4334 = vmul.f32 %v4318, %v4302
      %v4335 = vmul.f32 %v4319, %v4303
      %v4336 = vmul.f32 %v4320, %v4304
      %v4337 = vmul.f32 %v4321, %v4305
      %v4338 = vmul.f32 %v4322, %v4306
      %v4339 = vmul.f32 %v4323, %v4307
      %v4340 = vmul.f32 %v4324, %v4308
      %v4341 = vmul.f32 %v4325, %v4309
      %v4342 = vmul.f32 %v4326, %v4310
      %v4343 = vmul.f32 %v4327, %v4311
      %v4344 = vmul.f32 %v4328, %v4312
      %v4345 = vmul.f32 %v4329, %v4313
      %v4346 = vmul.f32 %v4330, %v4314
      %v4347 = vmul.f32 %v4331, %v4315
      %v4348 = vmul.f32 %v4332, %v4316
      %v4349 = vadd.f32 %v4333, %v3626
      %v4350 = vadd.f32 %v4334, %v3627
      %v4351 = vadd.f32 %v4335, %v3628
      %v4352 = vadd.f32 %v4336, %v3629
      %v4353 = vadd.f32 %v4337, %v3630
      %v4354 = vadd.f32 %v4338, %v3631
      %v4355 = vadd.f32 %v4339, %v3632
      %v4356 = vadd.f32 %v4340, %v3633
      %v4357 = vadd.f32 %v4341, %v3634
      %v4358 = vadd.f32 %v4342, %v3635
      %v4359 = vadd.f32 %v4343, %v3636
      %v4360 = vadd.f32 %v4344, %v3637
      %v4361 = vadd.f32 %v4345, %v3638
      %v4362 = vadd.f32 %v4346, %v3639
      %v4363 = vadd.f32 %v4347, %v3640
      %v4364 = vadd.f32 %v4348, %v3641
      %v4365 = vld [vmem:[%s5] sm:$0xff]
      %v4366 = vld [vmem:[%s5 + $0x8] sm:$0xff]
      %v4367 = vld [vmem:[%s5 + $0x10] sm:$0xff]
      %v4368 = vld [vmem:[%s5 + $0x18] sm:$0xff]
      %v4369 = vld [vmem:[#allocation2] sm:$0x1]
      %v4371 = vlaneseq
      %v4372 = vshrl.u32 %v4371, 7
      %v4373 = vsub.s32 0, %v4372
      %v4374 = vrot.slane %v4369, %v4373
      %v4377 = vsel %vm533, %v4349, 0
      %v4380 = vsel %vm533, %v4350, 0
      %v4383 = vsel %vm533, %v4351, 0
      %v4386 = vsel %vm533, %v4352, 0
      %v4389 = vsel %vm533, %v4353, 0
      %v4392 = vsel %vm533, %v4354, 0
      %v4395 = vsel %vm533, %v4355, 0
      %v4398 = vsel %vm533, %v4356, 0
      %v4401 = vsel %vm533, %v4357, 0
      %v4404 = vsel %vm533, %v4358, 0
      %v4407 = vsel %vm533, %v4359, 0
      %v4410 = vsel %vm533, %v4360, 0
      %v4413 = vsel %vm533, %v4361, 0
      %v4416 = vsel %vm533, %v4362, 0
      %v4419 = vsel %vm533, %v4363, 0
      %v4422 = vsel %vm533, %v4364, 0
      %4424 = vmatprep.subr.mxu0 0.0
      %4425 = vmatpush1.msra.mxu0 0.0
      %4426 = vmatprep.subr.mxu0 0.0
      %4427 = vmatpush1.msra.mxu0 0.0
      %4428 = vmatprep.subr.mxu0 0.0
      %4429 = vmatpush1.msra.mxu0 0.0
      %4430 = vmatprep.subr.mxu0 0.0
      %4431 = vmatpush1.msra.mxu0 0.0
      %4432 = vmatprep.subr.mxu0 0.0
      %4433 = vmatpush1.msra.mxu0 0.0
      %4434 = vmatprep.subr.mxu0 0.0
      %4435 = vmatpush1.msra.mxu0 0.0
      %4436 = vmatprep.subr.mxu0 0.0
      %4437 = vmatpush1.msra.mxu0 0.0
      %4438 = vmatprep.subr.mxu0 0.0
      %4439 = vmatpush1.msra.mxu0 0.0
      %4440 = vmatprep.subr.mxu0 0.0
      %4441 = vmatpush1.msra.mxu0 0.0
      %4442 = vmatprep.subr.mxu0 0.0
      %4443 = vmatpush1.msra.mxu0 0.0
      %4444 = vmatprep.subr.mxu0 0.0
      %4445 = vmatpush1.msra.mxu0 0.0
      %4446 = vmatprep.subr.mxu0 0.0
      %4447 = vmatpush1.msra.mxu0 0.0
      %4448 = vmatprep.subr.mxu0 0.0
      %4449 = vmatpush1.msra.mxu0 %v4368
      %4450 = vmatprep.subr.mxu0 0.0
      %4451 = vmatpush1.msra.mxu0 %v4367
      %4452 = vmatprep.subr.mxu0 0.0
      %4453 = vmatpush1.msra.mxu0 %v4366
      %4454 = vmatprep.subr.mxu0 0.0
      %4455 = vmatpush1.msra.mxu0 %v4365
      %4456 = vmatprep.subr.mxu0 0.0
      %4457 = vmatpush2.msra.mxu0 0.0
      %4458 = vmatprep.subr.mxu0 0.0
      %4459 = vmatpush2.msra.mxu0 0.0
      %4460 = vmatprep.subr.mxu0 0.0
      %4461 = vmatpush2.msra.mxu0 0.0
      %4462 = vmatprep.subr.mxu0 0.0
      %4463 = vmatpush2.msra.mxu0 0.0
      %4464 = vmatprep.subr.mxu0 0.0
      %4465 = vmatpush2.msra.mxu0 0.0
      %4466 = vmatprep.subr.mxu0 0.0
      %4467 = vmatpush2.msra.mxu0 0.0
      %4468 = vmatprep.subr.mxu0 0.0
      %4469 = vmatpush2.msra.mxu0 0.0
      %4470 = vmatprep.subr.mxu0 0.0
      %4471 = vmatpush2.msra.mxu0 0.0
      %4472 = vmatprep.subr.mxu0 0.0
      %4473 = vmatpush2.msra.mxu0 0.0
      %4474 = vmatprep.subr.mxu0 0.0
      %4475 = vmatpush2.msra.mxu0 0.0
      %4476 = vmatprep.subr.mxu0 0.0
      %4477 = vmatpush2.msra.mxu0 0.0
      %4478 = vmatprep.subr.mxu0 0.0
      %4479 = vmatpush2.msra.mxu0 0.0
      %4480 = vmatprep.subr.mxu0 0.0
      %4481 = vmatpush2.msra.mxu0 0.0
      %4482 = vmatprep.subr.mxu0 0.0
      %4483 = vmatpush2.msra.mxu0 0.0
      %4484 = vmatprep.subr.mxu0 0.0
      %4485 = vmatpush2.msra.mxu0 0.0
      %4486 = vmatprep.subr.mxu0 0.0
      %4487 = vmatpush2.msra.mxu0 0.0
      %4488 = vmatprep.mubr.f32.mxu0 0.0
      %4489 = vmatmul.mubr.f32.gmra.mxu0 %v4377
      %v4490 = vpop.f32.mrf.mxu0
      %v4491 = vadd.f32 %v4374, %v4490
      %v4492 = vpop.f32.mrf.mxu0
      %4493 = vmatprep.mubr.f32.mxu0 0.0
      %4494 = vmatmul.mubr.f32.gmra.mxu0 %v4380
      %v4495 = vpop.f32.mrf.mxu0
      %v4496 = vadd.f32 %v4374, %v4495
      %v4497 = vpop.f32.mrf.mxu0
      %4498 = vmatprep.mubr.f32.mxu0 0.0
      %4499 = vmatmul.mubr.f32.gmra.mxu0 %v4383
      %v4500 = vpop.f32.mrf.mxu0
      %v4501 = vadd.f32 %v4374, %v4500
      %v4502 = vpop.f32.mrf.mxu0
      %4503 = vmatprep.mubr.f32.mxu0 0.0
      %4504 = vmatmul.mubr.f32.gmra.mxu0 %v4386
      %v4505 = vpop.f32.mrf.mxu0
      %v4506 = vadd.f32 %v4374, %v4505
      %v4507 = vpop.f32.mrf.mxu0
      %4508 = vmatprep.mubr.f32.mxu0 0.0
      %4509 = vmatmul.mubr.f32.gmra.mxu0 %v4389
      %v4510 = vpop.f32.mrf.mxu0
      %v4511 = vadd.f32 %v4374, %v4510
      %v4512 = vpop.f32.mrf.mxu0
      %4513 = vmatprep.mubr.f32.mxu0 0.0
      %4514 = vmatmul.mubr.f32.gmra.mxu0 %v4392
      %v4515 = vpop.f32.mrf.mxu0
      %v4516 = vadd.f32 %v4374, %v4515
      %v4517 = vpop.f32.mrf.mxu0
      %4518 = vmatprep.mubr.f32.mxu0 0.0
      %4519 = vmatmul.mubr.f32.gmra.mxu0 %v4395
      %v4520 = vpop.f32.mrf.mxu0
      %v4521 = vadd.f32 %v4374, %v4520
      %v4522 = vpop.f32.mrf.mxu0
      %4523 = vmatprep.mubr.f32.mxu0 0.0
      %4524 = vmatmul.mubr.f32.gmra.mxu0 %v4398
      %v4525 = vpop.f32.mrf.mxu0
      %v4526 = vadd.f32 %v4374, %v4525
      %v4527 = vpop.f32.mrf.mxu0
      %4528 = vmatprep.mubr.f32.mxu0 0.0
      %4529 = vmatmul.mubr.f32.gmra.mxu0 %v4401
      %v4530 = vpop.f32.mrf.mxu0
      %v4531 = vadd.f32 %v4374, %v4530
      %v4532 = vpop.f32.mrf.mxu0
      %4533 = vmatprep.mubr.f32.mxu0 0.0
      %4534 = vmatmul.mubr.f32.gmra.mxu0 %v4404
      %v4535 = vpop.f32.mrf.mxu0
      %v4536 = vadd.f32 %v4374, %v4535
      %v4537 = vpop.f32.mrf.mxu0
      %4538 = vmatprep.mubr.f32.mxu0 0.0
      %4539 = vmatmul.mubr.f32.gmra.mxu0 %v4407
      %v4540 = vpop.f32.mrf.mxu0
      %v4541 = vadd.f32 %v4374, %v4540
      %v4542 = vpop.f32.mrf.mxu0
      %4543 = vmatprep.mubr.f32.mxu0 0.0
      %4544 = vmatmul.mubr.f32.gmra.mxu0 %v4410
      %v4545 = vpop.f32.mrf.mxu0
      %v4546 = vadd.f32 %v4374, %v4545
      %v4547 = vpop.f32.mrf.mxu0
      %4548 = vmatprep.mubr.f32.mxu0 0.0
      %4549 = vmatmul.mubr.f32.gmra.mxu0 %v4413
      %v4550 = vpop.f32.mrf.mxu0
      %v4551 = vadd.f32 %v4374, %v4550
      %v4552 = vpop.f32.mrf.mxu0
      %4553 = vmatprep.mubr.f32.mxu0 0.0
      %4554 = vmatmul.mubr.f32.gmra.mxu0 %v4416
      %v4555 = vpop.f32.mrf.mxu0
      %v4556 = vadd.f32 %v4374, %v4555
      %v4557 = vpop.f32.mrf.mxu0
      %4558 = vmatprep.mubr.f32.mxu0 0.0
      %4559 = vmatmul.mubr.f32.gmra.mxu0 %v4419
      %v4560 = vpop.f32.mrf.mxu0
      %v4561 = vadd.f32 %v4374, %v4560
      %v4562 = vpop.f32.mrf.mxu0
      %4563 = vmatprep.mubr.f32.mxu0 0.0
      %4564 = vmatmul.mubr.f32.gmra.mxu0 %v4422
      %v4565 = vpop.f32.mrf.mxu0
      %v4566 = vadd.f32 %v4374, %v4565
      %v4567 = vpop.f32.mrf.mxu0
      %4568 = vdwg.mxu0
      %vm4569 = vcmask 7168
      %4570 = vst.msk [vmem:[%s282] sm:$0xff] %vm4569, %v4491
      %4571 = vst.msk [vmem:[%s282 + $0x8] sm:$0xff] %vm4569, %v4496
      %4572 = vst.msk [vmem:[%s282 + $0x10] sm:$0xff] %vm4569, %v4501
      %4573 = vst.msk [vmem:[%s282 + $0x18] sm:$0xff] %vm4569, %v4506
      %4574 = vst.msk [vmem:[%s282 + $0x20] sm:$0xff] %vm4569, %v4511
      %4575 = vst.msk [vmem:[%s282 + $0x28] sm:$0xff] %vm4569, %v4516
      %4576 = vst.msk [vmem:[%s282 + $0x30] sm:$0xff] %vm4569, %v4521
      %4577 = vst.msk [vmem:[%s282 + $0x38] sm:$0xff] %vm4569, %v4526
      %4578 = vst.msk [vmem:[%s282 + $0x40] sm:$0xff] %vm4569, %v4531
      %4579 = vst.msk [vmem:[%s282 + $0x48] sm:$0xff] %vm4569, %v4536
      %4580 = vst.msk [vmem:[%s282 + $0x50] sm:$0xff] %vm4569, %v4541
      %4581 = vst.msk [vmem:[%s282 + $0x58] sm:$0xff] %vm4569, %v4546
      %4582 = vst.msk [vmem:[%s282 + $0x60] sm:$0xff] %vm4569, %v4551
      %4583 = vst.msk [vmem:[%s282 + $0x68] sm:$0xff] %vm4569, %v4556
      %4584 = vst.msk [vmem:[%s282 + $0x70] sm:$0xff] %vm4569, %v4561
      %4585 = vst.msk [vmem:[%s282 + $0x78] sm:$0xff] %vm4569, %v4566
      %s4586 = smul.u32 16, %s20
      %p4587 = scmp.lt.s32.totalorder %s4586, 31
      %s4588 = scalar_select %p4587, %s4586, 31
      %s4589 = smul.addr %s4588, 8
      %s4590 = scalar_lea.vmem %s7, %s4589
      // Predicated region
      $region49: #{tpu_custom_call.1} parent=47 // pred_check
        %p4591 = pneg %p190
      $region50: #{tpu_custom_call.1} parent=47 // pred_check_branch
        %4593 = sbr.rel (%p4591) target = $region52
      $region51: #{tpu_custom_call.1} parent=47 // pred_region
        %s4594 = smul.u32 16, %s20
      $region52: #{tpu_custom_call.1} parent=47 // pred_fallthru
        _
    $region48: #{tpu_custom_call.1} parent=5 // pred_fallthru
      _
    %p4595 = scmp.le.s32.totalorder 2, %s15
    // Predicated region
    $region53: #{tpu_custom_call.1} parent=5 // pred_check
      %p4596 = pneg %p4595
    $region54: #{tpu_custom_call.1} parent=5 // pred_check_branch
      %4598 = sbr.rel (%p4596) target = $region56
    $region55: #{tpu_custom_call.1} parent=5 // pred_region
      %s4599 = ssub.s32 %s15, 2
      // Predicated region
      $region57: #{tpu_custom_call.1} parent=55 // pred_check
        %p4600 = pneg %p196
      $region58: #{tpu_custom_call.1} parent=55 // pred_check_branch
        %4602 = sbr.rel (%p4600) target = $region60
      $region59: #{tpu_custom_call.1} parent=55 // pred_region
        %s4603 = smul.u32 16, %s21
        %p4604 = scmp.lt.s32.totalorder %s4603, 31
        %s4605 = scalar_select %p4604, %s4603, 31
        %s4606 = smul.addr %s4605, 8
        %s4607 = scalar_lea.vmem %s7, %s4606
      $region60: #{tpu_custom_call.1} parent=55 // pred_fallthru
        _
    $region56: #{tpu_custom_call.1} parent=5 // pred_fallthru
      _
  $region6: #{tpu_custom_call.1} parent=0 // loop_footer
    %s19 = sadd.s32 1, %s15
  $region7: #{tpu_custom_call.1} parent=0 // loop_footer_branch
    %14 = sbr.rel target = $region3
  $region8: #{tpu_custom_call.1} parent=0 // loop_exit
    _

</llo_original>
